<compile_context>
chip_gen: v7x
topology: tpu7x:2x2x1
jax: 0.10.0
libtpu: 0.0.40
codegen_flags: <defaults>
</compile_context>

<pallas_src>
import functools

import jax
import jax.numpy as jnp
from jax.experimental import pallas as pl
from jax.experimental.pallas import tpu as pltpu

MXU_DTYPE = jnp.bfloat16  # MXU operand dtype; accumulate + epilogues in f32.


# ----------------------------------------------------------------------------
# Kernel 1: Conv2d(1->8,k=3) + bias + MaxPool2d(2) + BatchNorm2d(8) (training)
# ----------------------------------------------------------------------------

def _conv1_pool_bn_kernel(a_ref, w_ref, p_ref, o_ref, *, eps):
    """a: (M,36) bf16 im2col patches, column = pool_pos*9 + (di*3+dj), M=N*169
    w: (36,32) bf16 block-diagonal conv1 weight (4 pool positions, one pass)
    p: (3,8)  f32 packed per-channel params [conv1_bias; bn_gamma; bn_beta]
    o: (M,8)  bf16 normalized pooled feature map."""
    y = jnp.dot(a_ref[...], w_ref[...], preferred_element_type=jnp.float32)
    # 2x2 max pool == elementwise max over the 4 output-channel groups.
    pooled = jnp.maximum(jnp.maximum(y[:, 0:8], y[:, 8:16]),
                         jnp.maximum(y[:, 16:24], y[:, 24:32]))        # (M, 8)
    pooled = pooled + p_ref[0:1, :]                                    # bias
    # BatchNorm2d (training mode): one-pass batch stats, biased variance, f32.
    inv_m = 1.0 / pooled.shape[0]
    mean = jnp.sum(pooled, axis=0, keepdims=True) * inv_m
    ex2 = jnp.sum(pooled * pooled, axis=0, keepdims=True) * inv_m
    var = jnp.maximum(ex2 - mean * mean, 0.0)
    inv = jax.lax.rsqrt(var + eps)
    o_ref[...] = ((pooled - mean) * (inv * p_ref[1:2, :])
                  + p_ref[2:3, :]).astype(o_ref.dtype)


def conv1_pool_bn(a1, w1_blk, packed, eps=1e-5):
    M = a1.shape[0]
    return pl.pallas_call(
        functools.partial(_conv1_pool_bn_kernel, eps=eps),
        out_shape=jax.ShapeDtypeStruct((M, 8), MXU_DTYPE),
        in_specs=[pl.BlockSpec(memory_space=pltpu.MemorySpace.VMEM)] * 3,
        out_specs=pl.BlockSpec(memory_space=pltpu.MemorySpace.VMEM),
    )(a1, w1_blk, packed)


# ----------------------------------------------------------------------------
# Kernel 2: [conv2 + Flatten + fc1 folded] + ReLU + fc2 + ReLU
# ----------------------------------------------------------------------------

def _head_kernel(x_ref, wc_ref, bc_ref, w2_ref, b2_ref, o_ref, *, out_class):
    """x: (N,1352) bf16 BN features; wc: (1352,320) bf16 folded conv2*fc1;
    bc: (1,320) f32; w2: (320,128) bf16 zero-padded fc2; b2: (1,128) f32;
    o: (N,out_class) f32."""
    h = jnp.dot(x_ref[...], wc_ref[...],
                preferred_element_type=jnp.float32) + bc_ref[...]
    h = jnp.maximum(h, 0.0)                                    # ReLU (f32)
    o = jnp.dot(h.astype(MXU_DTYPE), w2_ref[...],
                preferred_element_type=jnp.float32) + b2_ref[...]
    o = jnp.maximum(o, 0.0)                                    # ReLU (f32)
    o_ref[...] = o[:, :out_class]                              # slice in-kernel


def head(x, wc, bc, fc2_w, fc2_b, out_class):
    N = x.shape[0]
    return pl.pallas_call(
        functools.partial(_head_kernel, out_class=out_class),
        out_shape=jax.ShapeDtypeStruct((N, out_class), jnp.float32),
        in_specs=[pl.BlockSpec(memory_space=pltpu.MemorySpace.VMEM)] * 5,
        out_specs=pl.BlockSpec(memory_space=pltpu.MemorySpace.VMEM),
    )(x, wc, bc, fc2_w, fc2_b)


# ----------------------------------------------------------------------------
# JAX glue (layout plumbing only: static strided slices + stack + reshapes)
# ----------------------------------------------------------------------------

def conv1_pool_patches(x_nchw):
    """(N,1,28,28) -> (N*13*13, 36) patches grouped by 2x2 pooling position.

    Column ordering p*9 + (di*3+dj); pool position p=(a,b) with a=p//2, b=p%2;
    pooled pixel (i,j) reads input pixel (2i+a+di, 2j+b+dj).
    Row ordering n*169 + (y*13 + x)."""
    N = x_nchw.shape[0]
    xs = x_nchw[:, 0]                                       # (N, 28, 28)
    cols = []
    for p in range(4):
        a, b = p // 2, p % 2
        for di in range(3):
            for dj in range(3):
                cols.append(xs[:, a + di:a + di + 26:2, b + dj:b + dj + 26:2])
    return jnp.stack(cols, axis=-1).reshape(N * 13 * 13, 36)


def sample_net_b_forward(x_nchw, kp, *, output_class):
    N = x_nchw.shape[0]
    a1 = conv1_pool_patches(x_nchw.astype(MXU_DTYPE))       # (N*169, 36) bf16
    bn = conv1_pool_bn(a1, kp["w1_blk"], kp["bn_pack"])     # (N*169, 8)  bf16
    # Per-example feature rows; lane order (y*13+x)*8 + c matches the folded
    # weight's row order. Tiny (~5 KB) XLA relayout between the two kernels.
    bnf = bn.reshape(N, 13 * 13 * 8)                        # (N, 1352)
    return head(bnf, kp["wc"], kp["bc"], kp["fc2_w"], kp["fc2_b"], output_class)


# ----------------------------------------------------------------------------
# Parameters: PyTorch-shaped init + one-time kernel-layout preparation
# ----------------------------------------------------------------------------

def init_params(key, output_class):
    ks = jax.random.split(key, 8)
    scale = 0.05
    return {
        "conv1_w": scale * jax.random.normal(ks[0], (8, 1, 3, 3), jnp.float32),
        "conv1_b": scale * jax.random.normal(ks[1], (8,), jnp.float32),
        "bn_gamma": jnp.ones((8,), jnp.float32),
        "bn_beta": jnp.zeros((8,), jnp.float32),
        "conv2_w": scale * jax.random.normal(ks[2], (32, 8, 4, 4), jnp.float32),
        "conv2_b": scale * jax.random.normal(ks[3], (32,), jnp.float32),
        "fc1_w": scale * jax.random.normal(ks[4], (320, 3200), jnp.float32),
        "fc1_b": scale * jax.random.normal(ks[5], (320,), jnp.float32),
        "fc2_w": scale * jax.random.normal(ks[6], (output_class, 320), jnp.float32),
        "fc2_b": scale * jax.random.normal(ks[7], (output_class,), jnp.float32),
    }


def fold_conv2_flatten_fc1(conv2_w, conv2_b, fc1_w, fc1_b):
    """conv2(8->32,k=4) -> Flatten(NCHW) -> Linear(3200,320) are consecutive
    affine maps: fold them (init-time, f32 HIGHEST precision) into one
    (1352,320) matrix + (320,) bias acting on the BN map flattened as
    (N, 13*13*8) with index (y*13+x)*8 + c."""
    hp = jax.lax.Precision.HIGHEST
    fc1_w4 = fc1_w.reshape(320, 32, 10, 10)                    # (h, o, py, px)
    wc_full = jnp.zeros((320, 8, 13, 13), jnp.float32)         # (h, c, y, x)
    for di in range(4):
        for dj in range(4):
            contrib = jnp.einsum("hopq,oc->hcpq", fc1_w4,
                                 conv2_w[:, :, di, dj], precision=hp)
            wc_full = wc_full.at[:, :, di:di + 10, dj:dj + 10].add(contrib)
    wc = jnp.transpose(wc_full, (2, 3, 1, 0)).reshape(13 * 13 * 8, 320)
    bc = fc1_b + jnp.einsum("hopq,o->h", fc1_w4, conv2_b, precision=hp)
    return wc, bc


def prepare_params(p, output_class):
    """One-time repacking so nothing is reshaped/transposed/cast at run time."""
    # conv1 (8,1,3,3) -> (9,8) im2col matrix -> block-diagonal (36,32): one MXU
    # pass computes all 4 pooling-window positions (output cols p*8..p*8+7).
    w1m = jnp.transpose(p["conv1_w"].reshape(8, 9))            # (9, 8)
    w1_blk = jnp.kron(jnp.eye(4, dtype=w1m.dtype), w1m)        # (36, 32)
    # Packed per-channel epilogue params: [conv1 bias; gamma; beta] -> one DMA.
    bn_pack = jnp.stack([p["conv1_b"], p["bn_gamma"], p["bn_beta"]], axis=0)
    wc, bc = fold_conv2_flatten_fc1(p["conv2_w"], p["conv2_b"],
                                    p["fc1_w"], p["fc1_b"])
    # fc2 zero-padded to 128 lanes so the second matmul output is a full lane
    # tile; the slice back to output_class stays inside the kernel.
    fc2_w = jnp.zeros((320, 128), jnp.float32).at[:, :output_class].set(
        jnp.transpose(p["fc2_w"]))
    fc2_b = jnp.zeros((1, 128), jnp.float32).at[0, :output_class].set(p["fc2_b"])
    return {
        "w1_blk": w1_blk.astype(MXU_DTYPE),                    # (36, 32)
        "bn_pack": bn_pack.astype(jnp.float32),                # (3, 8)
        "wc": wc.astype(MXU_DTYPE),                            # (1352, 320)
        "bc": bc.reshape(1, 320).astype(jnp.float32),
        "fc2_w": fc2_w.astype(MXU_DTYPE),                      # (320, 128)
        "fc2_b": fc2_b,                                        # (1, 128) f32
    }


if __name__ == "__main__":
    output_class = 10
    key = jax.random.PRNGKey(0)
    k_x, k_p = jax.random.split(key)

    # Flatten gives 3200 = 32*10*10 => 28x28 single-channel input. batch = 2.
    x = jax.random.normal(k_x, (2, 1, 28, 28), jnp.float32)
    params = init_params(k_p, output_class)
    kparams = jax.tree_util.tree_map(jax.block_until_ready,
                                     prepare_params(params, output_class))

    fwd = jax.jit(functools.partial(sample_net_b_forward,
                                    output_class=output_class))
    y = fwd(x, kparams)
    jax.block_until_ready(y)
    assert y.shape == (2, output_class) and y.dtype == jnp.float32
    assert bool(jnp.all(jnp.isfinite(y))) and bool(jnp.all(y >= 0.0))
    print("KERNEL_OK")
</pallas_src>

<mosaic_0001>
module attributes {stable_mosaic.version = 11 : i64} {
  func.func @_conv1_pool_bn_kernel(%arg0: memref<338x36xbf16, #tpu.memory_space<vmem>>, %arg1: memref<36x32xbf16, #tpu.memory_space<vmem>>, %arg2: memref<3x8xf32, #tpu.memory_space<vmem>>, %arg3: memref<338x8xbf16, #tpu.memory_space<vmem>>) attributes {dimension_semantics = [], scalar_prefetch = 0 : i64, scratch_operands = 0 : i64, tpu.core_type = #tpu.core_type<tc>} {
    %c0 = arith.constant 0 : index
    %c0_0 = arith.constant 0 : index
    %0 = vector.load %arg0[%c0, %c0_0] : memref<338x36xbf16, #tpu.memory_space<vmem>>, vector<338x36xbf16>
    %c0_1 = arith.constant 0 : index
    %c0_2 = arith.constant 0 : index
    %1 = vector.load %arg1[%c0_1, %c0_2] : memref<36x32xbf16, #tpu.memory_space<vmem>>, vector<36x32xbf16>
    %cst = arith.constant dense<0.000000e+00> : vector<338x32xf32>
    %2 = tpu.matmul %0, %1, %cst {dimension_numbers = #tpu.dot_dimension_numbers<[1], [0], [0], [1], [0, 0, 1, 1], [], []>} : vector<338x36xbf16>, vector<36x32xbf16>, vector<338x32xf32> -> vector<338x32xf32>
    %3 = vector.extract_strided_slice %2 {offsets = [0, 0], sizes = [338, 8], strides = [1, 1]} : vector<338x32xf32> to vector<338x8xf32>
    %4 = vector.extract_strided_slice %2 {offsets = [0, 8], sizes = [338, 8], strides = [1, 1]} : vector<338x32xf32> to vector<338x8xf32>
    %5 = arith.maximumf %3, %4 : vector<338x8xf32>
    %6 = vector.extract_strided_slice %2 {offsets = [0, 16], sizes = [338, 8], strides = [1, 1]} : vector<338x32xf32> to vector<338x8xf32>
    %7 = vector.extract_strided_slice %2 {offsets = [0, 24], sizes = [338, 8], strides = [1, 1]} : vector<338x32xf32> to vector<338x8xf32>
    %8 = arith.maximumf %6, %7 : vector<338x8xf32>
    %9 = arith.maximumf %5, %8 : vector<338x8xf32>
    %c0_3 = arith.constant 0 : index
    %c0_4 = arith.constant 0 : index
    %10 = vector.load %arg2[%c0_3, %c0_4] : memref<3x8xf32, #tpu.memory_space<vmem>>, vector<1x8xf32>
    %11 = vector.broadcast %10 : vector<1x8xf32> to vector<338x8xf32>
    %12 = arith.addf %9, %11 : vector<338x8xf32>
    %cst_5 = arith.constant dense<0.000000e+00> : vector<8xf32>
    %13 = vector.multi_reduction <add>, %12, %cst_5 [0] : vector<338x8xf32> to vector<8xf32>
    %14 = vector.shape_cast %13 : vector<8xf32> to vector<1x8xf32>
    %cst_6 = arith.constant 2.958580e-03 : f32
    %15 = vector.broadcast %cst_6 : f32 to vector<1x8xf32>
    %16 = arith.mulf %14, %15 : vector<1x8xf32>
    %17 = arith.mulf %12, %12 : vector<338x8xf32>
    %cst_7 = arith.constant dense<0.000000e+00> : vector<8xf32>
    %18 = vector.multi_reduction <add>, %17, %cst_7 [0] : vector<338x8xf32> to vector<8xf32>
    %19 = vector.shape_cast %18 : vector<8xf32> to vector<1x8xf32>
    %cst_8 = arith.constant 2.958580e-03 : f32
    %20 = vector.broadcast %cst_8 : f32 to vector<1x8xf32>
    %21 = arith.mulf %19, %20 : vector<1x8xf32>
    %22 = arith.mulf %16, %16 : vector<1x8xf32>
    %23 = arith.subf %21, %22 : vector<1x8xf32>
    %cst_9 = arith.constant 0.000000e+00 : f32
    %24 = vector.broadcast %cst_9 : f32 to vector<1x8xf32>
    %25 = arith.maximumf %23, %24 : vector<1x8xf32>
    %cst_10 = arith.constant 9.99999974E-6 : f32
    %26 = vector.broadcast %cst_10 : f32 to vector<1x8xf32>
    %27 = arith.addf %25, %26 : vector<1x8xf32>
    %28 = math.rsqrt %27 : vector<1x8xf32>
    %29 = vector.broadcast %16 : vector<1x8xf32> to vector<338x8xf32>
    %30 = arith.subf %12, %29 : vector<338x8xf32>
    %c1 = arith.constant 1 : index
    %c0_11 = arith.constant 0 : index
    %31 = vector.load %arg2[%c1, %c0_11] : memref<3x8xf32, #tpu.memory_space<vmem>>, vector<1x8xf32>
    %32 = arith.mulf %28, %31 : vector<1x8xf32>
    %33 = vector.broadcast %32 : vector<1x8xf32> to vector<338x8xf32>
    %34 = arith.mulf %30, %33 : vector<338x8xf32>
    %c2 = arith.constant 2 : index
    %c0_12 = arith.constant 0 : index
    %35 = vector.load %arg2[%c2, %c0_12] : memref<3x8xf32, #tpu.memory_space<vmem>>, vector<1x8xf32>
    %36 = vector.broadcast %35 : vector<1x8xf32> to vector<338x8xf32>
    %37 = arith.addf %34, %36 : vector<338x8xf32>
    %38 = arith.truncf %37 : vector<338x8xf32> to vector<338x8xbf16>
    %c0_13 = arith.constant 0 : index
    %c0_14 = arith.constant 0 : index
    %39 = vector.load %arg3[%c0_13, %c0_14] : memref<338x8xbf16, #tpu.memory_space<vmem>>, vector<338x8xbf16>
    tpu.vector_store %arg3[%c0_13, %c0_14], %38 {strides = array<i32>} : memref<338x8xbf16, #tpu.memory_space<vmem>>, vector<338x8xbf16>,
    return
  }
}

module attributes {stable_mosaic.version = 11 : i64} {
  func.func @_head_kernel(%arg0: memref<2x1352xbf16, #tpu.memory_space<vmem>>, %arg1: memref<1352x320xbf16, #tpu.memory_space<vmem>>, %arg2: memref<1x320xf32, #tpu.memory_space<vmem>>, %arg3: memref<320x128xbf16, #tpu.memory_space<vmem>>, %arg4: memref<1x128xf32, #tpu.memory_space<vmem>>, %arg5: memref<2x10xf32, #tpu.memory_space<vmem>>) attributes {dimension_semantics = [], scalar_prefetch = 0 : i64, scratch_operands = 0 : i64, tpu.core_type = #tpu.core_type<tc>} {
    %c0 = arith.constant 0 : index
    %c0_0 = arith.constant 0 : index
    %0 = vector.load %arg0[%c0, %c0_0] : memref<2x1352xbf16, #tpu.memory_space<vmem>>, vector<2x1352xbf16>
    %c0_1 = arith.constant 0 : index
    %c0_2 = arith.constant 0 : index
    %1 = vector.load %arg1[%c0_1, %c0_2] : memref<1352x320xbf16, #tpu.memory_space<vmem>>, vector<1352x320xbf16>
    %cst = arith.constant dense<0.000000e+00> : vector<2x320xf32>
    %2 = tpu.matmul %0, %1, %cst {dimension_numbers = #tpu.dot_dimension_numbers<[1], [0], [0], [1], [0, 0, 1, 1], [], []>} : vector<2x1352xbf16>, vector<1352x320xbf16>, vector<2x320xf32> -> vector<2x320xf32>
    %c0_3 = arith.constant 0 : index
    %c0_4 = arith.constant 0 : index
    %3 = vector.load %arg2[%c0_3, %c0_4] : memref<1x320xf32, #tpu.memory_space<vmem>>, vector<1x320xf32>
    %4 = vector.broadcast %3 : vector<1x320xf32> to vector<2x320xf32>
    %5 = arith.addf %2, %4 : vector<2x320xf32>
    %cst_5 = arith.constant 0.000000e+00 : f32
    %6 = vector.broadcast %cst_5 : f32 to vector<2x320xf32>
    %7 = arith.maximumf %5, %6 : vector<2x320xf32>
    %8 = arith.truncf %7 : vector<2x320xf32> to vector<2x320xbf16>
    %c0_6 = arith.constant 0 : index
    %c0_7 = arith.constant 0 : index
    %9 = vector.load %arg3[%c0_6, %c0_7] : memref<320x128xbf16, #tpu.memory_space<vmem>>, vector<320x128xbf16>
    %cst_8 = arith.constant dense<0.000000e+00> : vector<2x128xf32>
    %10 = tpu.matmul %8, %9, %cst_8 {dimension_numbers = #tpu.dot_dimension_numbers<[1], [0], [0], [1], [0, 0, 1, 1], [], []>} : vector<2x320xbf16>, vector<320x128xbf16>, vector<2x128xf32> -> vector<2x128xf32>
    %c0_9 = arith.constant 0 : index
    %c0_10 = arith.constant 0 : index
    %11 = vector.load %arg4[%c0_9, %c0_10] : memref<1x128xf32, #tpu.memory_space<vmem>>, vector<1x128xf32>
    %12 = vector.broadcast %11 : vector<1x128xf32> to vector<2x128xf32>
    %13 = arith.addf %10, %12 : vector<2x128xf32>
    %cst_11 = arith.constant 0.000000e+00 : f32
    %14 = vector.broadcast %cst_11 : f32 to vector<2x128xf32>
    %15 = arith.maximumf %13, %14 : vector<2x128xf32>
    %16 = vector.extract_strided_slice %15 {offsets = [0, 0], sizes = [2, 10], strides = [1, 1]} : vector<2x128xf32> to vector<2x10xf32>
    %c0_12 = arith.constant 0 : index
    %c0_13 = arith.constant 0 : index
    %17 = vector.load %arg5[%c0_12, %c0_13] : memref<2x10xf32, #tpu.memory_space<vmem>>, vector<2x10xf32>
    tpu.vector_store %arg5[%c0_12, %c0_13], %16 {strides = array<i32>} : memref<2x10xf32, #tpu.memory_space<vmem>>, vector<2x10xf32>,
    return
  }
}

</mosaic_0001>

<llo_original>
// kernel: sample_net_b_forward.2
$region0: #{sample_net_b_forward.2}
  #allocation0 [shape = 'u32[]', space=smem, size = 0x4, offset = 0x4, fixed_abs, tag = 'smem constant byte address 0x4 - core index']
  #allocation1 [shape = 'u32[144,128]{1,0:T(1,128)}', space=vmem, size = 0x12000, scoped, tag = 'internal scratch']
  %s0 = inlined_call_operand.vmem [shape: bf16[338,36], index: 0, kind: input, shape index: {}]
  %s1 = inlined_call_operand.vmem [shape: bf16[36,32], index: 1, kind: input, shape index: {}]
  %s2 = inlined_call_operand.vmem [shape: f32[3,8], index: 2, kind: input, shape index: {}]
  %s3 = inlined_call_operand.vmem [shape: bf16[338,8], index: 3, kind: output, shape index: {}]
  %s4 = sld [smem:[#allocation0]]
  $region22: #{sample_net_b_forward.2} parent=0
    _
  %s6 = ssub.s32 1, %s4
  %s7 = scalar_select 0, %s6, %s4
  // Predicated region
  $region2: #{sample_net_b_forward.2} parent=0 // pred_check
    _
  $region3: #{sample_net_b_forward.2} parent=0 // pred_check_branch
    %9 = sbr.rel (0) target = $region5
  $region4: #{sample_net_b_forward.2} parent=0 // pred_region
    _
  $region5: #{sample_net_b_forward.2} parent=0 // pred_fallthru
    _
  // Predicated region
  $region6: #{sample_net_b_forward.2} parent=0 // pred_check
    _
  $region7: #{sample_net_b_forward.2} parent=0 // pred_check_branch
    %11 = sbr.rel (0) target = $region9
  $region8: #{sample_net_b_forward.2} parent=0 // pred_region
    _
  $region9: #{sample_net_b_forward.2} parent=0 // pred_fallthru
    _
  // Predicated region
  $region10: #{sample_net_b_forward.2} parent=0 // pred_check
    _
  $region11: #{sample_net_b_forward.2} parent=0 // pred_check_branch
    %13 = sbr.rel (0) target = $region13
  $region12: #{sample_net_b_forward.2} parent=0 // pred_region
    _
  $region13: #{sample_net_b_forward.2} parent=0 // pred_fallthru
    _
  %v15 = vld [vmem:[%s0] sm:$0xf]
  %v16 = vld [vmem:[%s0 + $0x4] sm:$0xf]
  %v17 = vld [vmem:[%s0 + $0x8] sm:$0xf]
  %v18 = vld [vmem:[%s0 + $0xc] sm:$0xf]
  %v19 = vld [vmem:[%s0 + $0x10] sm:$0xf]
  %v20 = vld [vmem:[%s0 + $0x14] sm:$0xf]
  %v21 = vld [vmem:[%s0 + $0x18] sm:$0xf]
  %v22 = vld [vmem:[%s0 + $0x1c] sm:$0xf]
  %v23 = vld [vmem:[%s0 + $0x20] sm:$0xf]
  %v24 = vld [vmem:[%s0 + $0x24] sm:$0xf]
  %v25 = vld [vmem:[%s0 + $0x28] sm:$0xf]
  %v26 = vld [vmem:[%s0 + $0x2c] sm:$0xf]
  %v27 = vld [vmem:[%s0 + $0x30] sm:$0xf]
  %v28 = vld [vmem:[%s0 + $0x34] sm:$0xf]
  %v29 = vld [vmem:[%s0 + $0x38] sm:$0xf]
  %v30 = vld [vmem:[%s0 + $0x3c] sm:$0xf]
  %v31 = vld [vmem:[%s0 + $0x40] sm:$0xf]
  %v32 = vld [vmem:[%s0 + $0x44] sm:$0xf]
  %v33 = vld [vmem:[%s0 + $0x48] sm:$0xf]
  %v34 = vld [vmem:[%s0 + $0x4c] sm:$0xf]
  %v35 = vld [vmem:[%s0 + $0x50] sm:$0xf]
  %v36 = vld [vmem:[%s0 + $0x54] sm:$0xf]
  %v37 = vld [vmem:[%s0 + $0x58] sm:$0xf]
  %v38 = vld [vmem:[%s0 + $0x5c] sm:$0xf]
  %v39 = vld [vmem:[%s0 + $0x60] sm:$0xf]
  %v40 = vld [vmem:[%s0 + $0x64] sm:$0xf]
  %v41 = vld [vmem:[%s0 + $0x68] sm:$0xf]
  %v42 = vld [vmem:[%s0 + $0x6c] sm:$0xf]
  %v43 = vld [vmem:[%s0 + $0x70] sm:$0xf]
  %v44 = vld [vmem:[%s0 + $0x74] sm:$0xf]
  %v45 = vld [vmem:[%s0 + $0x78] sm:$0xf]
  %v46 = vld [vmem:[%s0 + $0x7c] sm:$0xf]
  %v47 = vld [vmem:[%s0 + $0x80] sm:$0xf]
  %v48 = vld [vmem:[%s0 + $0x84] sm:$0xf]
  %v49 = vld [vmem:[%s0 + $0x88] sm:$0xf]
  %v50 = vld [vmem:[%s0 + $0x8c] sm:$0xf]
  %v51 = vld [vmem:[%s0 + $0x90] sm:$0xf]
  %v52 = vld [vmem:[%s0 + $0x94] sm:$0xf]
  %v53 = vld [vmem:[%s0 + $0x98] sm:$0xf]
  %v54 = vld [vmem:[%s0 + $0x9c] sm:$0xf]
  %v55 = vld [vmem:[%s0 + $0xa0] sm:$0xf]
  %v56 = vld [vmem:[%s0 + $0xa4] sm:$0xf]
  %v57 = vld [vmem:[%s0 + $0xa8] sm:$0x1]
  %v58 = vld [vmem:[%s1] sm:$0xf]
  %v59 = vld [vmem:[%s1 + $0x4] sm:$0xf]
  %v60 = vld [vmem:[%s1 + $0x8] sm:$0xf]
  %v61 = vld [vmem:[%s1 + $0xc] sm:$0xf]
  %v62 = vld [vmem:[%s1 + $0x10] sm:$0x3]
  %v106 = vunpack.c.l.b16 %v15
  %v107 = vunpack.c.l.b16 %v16
  %v108 = vunpack.c.l.b16 %v17
  %v109 = vunpack.c.l.b16 %v18
  %v110 = vunpack.c.l.b16 %v19
  %v111 = vunpack.c.l.b16 %v20
  %v112 = vunpack.c.l.b16 %v21
  %v113 = vunpack.c.l.b16 %v22
  %v114 = vunpack.c.l.b16 %v23
  %v115 = vunpack.c.l.b16 %v24
  %v116 = vunpack.c.l.b16 %v25
  %v117 = vunpack.c.l.b16 %v26
  %v118 = vunpack.c.l.b16 %v27
  %v119 = vunpack.c.l.b16 %v28
  %v120 = vunpack.c.l.b16 %v29
  %v121 = vunpack.c.l.b16 %v30
  %v122 = vunpack.c.l.b16 %v31
  %v123 = vunpack.c.l.b16 %v32
  %v124 = vunpack.c.l.b16 %v33
  %v125 = vunpack.c.l.b16 %v34
  %v126 = vunpack.c.l.b16 %v35
  %v127 = vunpack.c.l.b16 %v36
  %v128 = vunpack.c.l.b16 %v37
  %v129 = vunpack.c.l.b16 %v38
  %v130 = vunpack.c.l.b16 %v39
  %v131 = vunpack.c.l.b16 %v40
  %v132 = vunpack.c.l.b16 %v41
  %v133 = vunpack.c.l.b16 %v42
  %v134 = vunpack.c.l.b16 %v43
  %v135 = vunpack.c.l.b16 %v44
  %v136 = vunpack.c.l.b16 %v45
  %v137 = vunpack.c.l.b16 %v46
  %v138 = vunpack.c.l.b16 %v47
  %v139 = vunpack.c.l.b16 %v48
  %v140 = vunpack.c.l.b16 %v49
  %v141 = vunpack.c.l.b16 %v50
  %v142 = vunpack.c.l.b16 %v51
  %v143 = vunpack.c.l.b16 %v52
  %v144 = vunpack.c.l.b16 %v53
  %v145 = vunpack.c.l.b16 %v54
  %v146 = vunpack.c.l.b16 %v55
  %v147 = vunpack.c.l.b16 %v56
  %v148 = vunpack.c.l.b16 %v57
  %v149 = vpack.c.b16 %v107, %v106
  %v150 = vpack.c.b16 %v109, %v108
  %v151 = vpack.c.b16 %v111, %v110
  %v152 = vpack.c.b16 %v113, %v112
  %v153 = vpack.c.b16 %v115, %v114
  %v154 = vpack.c.b16 %v117, %v116
  %v155 = vpack.c.b16 %v119, %v118
  %v156 = vpack.c.b16 %v121, %v120
  %v157 = vpack.c.b16 %v123, %v122
  %v158 = vpack.c.b16 %v125, %v124
  %v159 = vpack.c.b16 %v127, %v126
  %v160 = vpack.c.b16 %v129, %v128
  %v161 = vpack.c.b16 %v131, %v130
  %v162 = vpack.c.b16 %v133, %v132
  %v163 = vpack.c.b16 %v135, %v134
  %v164 = vpack.c.b16 %v137, %v136
  %v165 = vpack.c.b16 %v139, %v138
  %v166 = vpack.c.b16 %v141, %v140
  %v167 = vpack.c.b16 %v143, %v142
  %v168 = vpack.c.b16 %v145, %v144
  %v169 = vpack.c.b16 %v147, %v146
  %v170 = vpack.c.b16 %v148, %v148
  %v176 = vunpack.c.l.b16 %v58
  %v177 = vunpack.c.l.b16 %v59
  %v178 = vunpack.c.l.b16 %v60
  %v179 = vunpack.c.l.b16 %v61
  %v180 = vunpack.c.l.b16 %v62
  %v181 = vpack.c.b16 %v177, %v176
  %v182 = vpack.c.b16 %v179, %v178
  %v183 = vpack.c.b16 %v180, %v180
  %vm186 = vcmask 293888
  %v188 = vsel %vm186, %v149, 0
  %v191 = vsel %vm186, %v150, 0
  %v194 = vsel %vm186, %v151, 0
  %v197 = vsel %vm186, %v152, 0
  %v200 = vsel %vm186, %v153, 0
  %v203 = vsel %vm186, %v154, 0
  %v206 = vsel %vm186, %v155, 0
  %v209 = vsel %vm186, %v156, 0
  %v212 = vsel %vm186, %v157, 0
  %v215 = vsel %vm186, %v158, 0
  %v218 = vsel %vm186, %v159, 0
  %v221 = vsel %vm186, %v160, 0
  %v224 = vsel %vm186, %v161, 0
  %v227 = vsel %vm186, %v162, 0
  %v230 = vsel %vm186, %v163, 0
  %v233 = vsel %vm186, %v164, 0
  %v236 = vsel %vm186, %v165, 0
  %v239 = vsel %vm186, %v166, 0
  %v242 = vsel %vm186, %v167, 0
  %v245 = vsel %vm186, %v168, 0
  %v248 = vsel %vm186, %v169, 0
  %v251 = vsel %vm186, %v170, 0
  %vm253 = vcmask 1041408
  %v255 = vsel %vm253, %v183, 0
  %257 = vmatprep.subr.bf16.mxu0 0
  %258 = vmatpush1.bf16.msra.mxu0 %v181
  %259 = vmatprep.subr.bf16.mxu0 0
  %260 = vmatpush1.bf16.msra.mxu0 %v182
  %261 = vmatprep.subr.bf16.mxu0 0
  %262 = vmatpush1.bf16.msra.mxu0 %v255
  %263 = vmatprep.subr.bf16.mxu0 0
  %264 = vmatpush1.bf16.msra.mxu0 0
  %265 = vmatprep.subr.bf16.mxu0 0
  %266 = vmatpush1.bf16.msra.mxu0 0
  %267 = vmatprep.subr.bf16.mxu0 0
  %268 = vmatpush1.bf16.msra.mxu0 0
  %269 = vmatprep.subr.bf16.mxu0 0
  %270 = vmatpush1.bf16.msra.mxu0 0
  %271 = vmatprep.subr.bf16.mxu0 0
  %272 = vmatpush1.bf16.msra.mxu0 0
  %273 = vmatprep.subr.bf16.mxu0 0
  %274 = vmatpush1.bf16.msra.mxu0 0
  %275 = vmatprep.subr.bf16.mxu0 0
  %276 = vmatpush1.bf16.msra.mxu0 0
  %277 = vmatprep.subr.bf16.mxu0 0
  %278 = vmatpush1.bf16.msra.mxu0 0
  %279 = vmatprep.subr.bf16.mxu0 0
  %280 = vmatpush1.bf16.msra.mxu0 0
  %281 = vmatprep.subr.bf16.mxu0 0
  %282 = vmatpush1.bf16.msra.mxu0 0
  %283 = vmatprep.subr.bf16.mxu0 0
  %284 = vmatpush1.bf16.msra.mxu0 0
  %285 = vmatprep.subr.bf16.mxu0 0
  %286 = vmatpush1.bf16.msra.mxu0 0
  %287 = vmatprep.subr.bf16.mxu0 0
  %288 = vmatpush1.bf16.msra.mxu0 0
  %289 = vmatprep.mubr.bf16.mxu0 0
  %290 = vmatmul.mubr.bf16.gmra.mrb[0].mxu0 %v188
  %v291 = vpop.f32.mrb[0].mxu0
  %v292 = vadd.f32 0.0, %v291
  %v293 = vpop.f32.mrb[0].mxu0
  %v294 = vpop.f32.mrb[0].mxu0
  %v295 = vadd.f32 0.0, %v294
  %v296 = vpop.f32.mrb[0].mxu0
  %297 = vmatprep.mubr.bf16.mxu0 0
  %298 = vmatmul.mubr.bf16.gmra.mrb[0].mxu0 %v191
  %v299 = vpop.f32.mrb[0].mxu0
  %v300 = vadd.f32 0.0, %v299
  %v301 = vpop.f32.mrb[0].mxu0
  %v302 = vpop.f32.mrb[0].mxu0
  %v303 = vadd.f32 0.0, %v302
  %v304 = vpop.f32.mrb[0].mxu0
  %305 = vmatprep.mubr.bf16.mxu0 0
  %306 = vmatmul.mubr.bf16.gmra.mrb[0].mxu0 %v194
  %v307 = vpop.f32.mrb[0].mxu0
  %v308 = vadd.f32 0.0, %v307
  %v309 = vpop.f32.mrb[0].mxu0
  %v310 = vpop.f32.mrb[0].mxu0
  %v311 = vadd.f32 0.0, %v310
  %v312 = vpop.f32.mrb[0].mxu0
  %313 = vmatprep.mubr.bf16.mxu0 0
  %314 = vmatmul.mubr.bf16.gmra.mrb[0].mxu0 %v197
  %v315 = vpop.f32.mrb[0].mxu0
  %v316 = vadd.f32 0.0, %v315
  %v317 = vpop.f32.mrb[0].mxu0
  %v318 = vpop.f32.mrb[0].mxu0
  %v319 = vadd.f32 0.0, %v318
  %v320 = vpop.f32.mrb[0].mxu0
  %321 = vmatprep.mubr.bf16.mxu0 0
  %322 = vmatmul.mubr.bf16.gmra.mrb[0].mxu0 %v200
  %v323 = vpop.f32.mrb[0].mxu0
  %v324 = vadd.f32 0.0, %v323
  %v325 = vpop.f32.mrb[0].mxu0
  %v326 = vpop.f32.mrb[0].mxu0
  %v327 = vadd.f32 0.0, %v326
  %v328 = vpop.f32.mrb[0].mxu0
  %329 = vmatprep.mubr.bf16.mxu0 0
  %330 = vmatmul.mubr.bf16.gmra.mrb[0].mxu0 %v203
  %v331 = vpop.f32.mrb[0].mxu0
  %v332 = vadd.f32 0.0, %v331
  %v333 = vpop.f32.mrb[0].mxu0
  %v334 = vpop.f32.mrb[0].mxu0
  %v335 = vadd.f32 0.0, %v334
  %v336 = vpop.f32.mrb[0].mxu0
  %337 = vmatprep.mubr.bf16.mxu0 0
  %338 = vmatmul.mubr.bf16.gmra.mrb[0].mxu0 %v206
  %v339 = vpop.f32.mrb[0].mxu0
  %v340 = vadd.f32 0.0, %v339
  %v341 = vpop.f32.mrb[0].mxu0
  %v342 = vpop.f32.mrb[0].mxu0
  %v343 = vadd.f32 0.0, %v342
  %v344 = vpop.f32.mrb[0].mxu0
  %345 = vmatprep.mubr.bf16.mxu0 0
  %346 = vmatmul.mubr.bf16.gmra.mrb[0].mxu0 %v209
  %v347 = vpop.f32.mrb[0].mxu0
  %v348 = vadd.f32 0.0, %v347
  %v349 = vpop.f32.mrb[0].mxu0
  %v350 = vpop.f32.mrb[0].mxu0
  %v351 = vadd.f32 0.0, %v350
  %v352 = vpop.f32.mrb[0].mxu0
  %353 = vmatprep.mubr.bf16.mxu0 0
  %354 = vmatmul.mubr.bf16.gmra.mrb[0].mxu0 %v212
  %v355 = vpop.f32.mrb[0].mxu0
  %v356 = vadd.f32 0.0, %v355
  %v357 = vpop.f32.mrb[0].mxu0
  %v358 = vpop.f32.mrb[0].mxu0
  %v359 = vadd.f32 0.0, %v358
  %v360 = vpop.f32.mrb[0].mxu0
  %361 = vmatprep.mubr.bf16.mxu0 0
  %362 = vmatmul.mubr.bf16.gmra.mrb[0].mxu0 %v215
  %v363 = vpop.f32.mrb[0].mxu0
  %v364 = vadd.f32 0.0, %v363
  %v365 = vpop.f32.mrb[0].mxu0
  %v366 = vpop.f32.mrb[0].mxu0
  %v367 = vadd.f32 0.0, %v366
  %v368 = vpop.f32.mrb[0].mxu0
  %369 = vmatprep.mubr.bf16.mxu0 0
  %370 = vmatmul.mubr.bf16.gmra.mrb[0].mxu0 %v218
  %v371 = vpop.f32.mrb[0].mxu0
  %v372 = vadd.f32 0.0, %v371
  %v373 = vpop.f32.mrb[0].mxu0
  %v374 = vpop.f32.mrb[0].mxu0
  %v375 = vadd.f32 0.0, %v374
  %v376 = vpop.f32.mrb[0].mxu0
  %377 = vmatprep.mubr.bf16.mxu0 0
  %378 = vmatmul.mubr.bf16.gmra.mrb[0].mxu0 %v221
  %v379 = vpop.f32.mrb[0].mxu0
  %v380 = vadd.f32 0.0, %v379
  %v381 = vpop.f32.mrb[0].mxu0
  %v382 = vpop.f32.mrb[0].mxu0
  %v383 = vadd.f32 0.0, %v382
  %v384 = vpop.f32.mrb[0].mxu0
  %385 = vmatprep.mubr.bf16.mxu0 0
  %386 = vmatmul.mubr.bf16.gmra.mrb[0].mxu0 %v224
  %v387 = vpop.f32.mrb[0].mxu0
  %v388 = vadd.f32 0.0, %v387
  %v389 = vpop.f32.mrb[0].mxu0
  %v390 = vpop.f32.mrb[0].mxu0
  %v391 = vadd.f32 0.0, %v390
  %v392 = vpop.f32.mrb[0].mxu0
  %393 = vmatprep.mubr.bf16.mxu0 0
  %394 = vmatmul.mubr.bf16.gmra.mrb[0].mxu0 %v227
  %v395 = vpop.f32.mrb[0].mxu0
  %v396 = vadd.f32 0.0, %v395
  %v397 = vpop.f32.mrb[0].mxu0
  %v398 = vpop.f32.mrb[0].mxu0
  %v399 = vadd.f32 0.0, %v398
  %v400 = vpop.f32.mrb[0].mxu0
  %401 = vmatprep.mubr.bf16.mxu0 0
  %402 = vmatmul.mubr.bf16.gmra.mrb[0].mxu0 %v230
  %v403 = vpop.f32.mrb[0].mxu0
  %v404 = vadd.f32 0.0, %v403
  %v405 = vpop.f32.mrb[0].mxu0
  %v406 = vpop.f32.mrb[0].mxu0
  %v407 = vadd.f32 0.0, %v406
  %v408 = vpop.f32.mrb[0].mxu0
  %409 = vmatprep.mubr.bf16.mxu0 0
  %410 = vmatmul.mubr.bf16.gmra.mrb[0].mxu0 %v233
  %v411 = vpop.f32.mrb[0].mxu0
  %v412 = vadd.f32 0.0, %v411
  %v413 = vpop.f32.mrb[0].mxu0
  %v414 = vpop.f32.mrb[0].mxu0
  %v415 = vadd.f32 0.0, %v414
  %v416 = vpop.f32.mrb[0].mxu0
  %417 = vmatprep.mubr.bf16.mxu0 0
  %418 = vmatmul.mubr.bf16.gmra.mrb[0].mxu0 %v236
  %v419 = vpop.f32.mrb[0].mxu0
  %v420 = vadd.f32 0.0, %v419
  %v421 = vpop.f32.mrb[0].mxu0
  %v422 = vpop.f32.mrb[0].mxu0
  %v423 = vadd.f32 0.0, %v422
  %v424 = vpop.f32.mrb[0].mxu0
  %425 = vmatprep.mubr.bf16.mxu0 0
  %426 = vmatmul.mubr.bf16.gmra.mrb[0].mxu0 %v239
  %v427 = vpop.f32.mrb[0].mxu0
  %v428 = vadd.f32 0.0, %v427
  %v429 = vpop.f32.mrb[0].mxu0
  %v430 = vpop.f32.mrb[0].mxu0
  %v431 = vadd.f32 0.0, %v430
  %v432 = vpop.f32.mrb[0].mxu0
  %433 = vmatprep.mubr.bf16.mxu0 0
  %434 = vmatmul.mubr.bf16.gmra.mrb[0].mxu0 %v242
  %v435 = vpop.f32.mrb[0].mxu0
  %v436 = vadd.f32 0.0, %v435
  %v437 = vpop.f32.mrb[0].mxu0
  %v438 = vpop.f32.mrb[0].mxu0
  %v439 = vadd.f32 0.0, %v438
  %v440 = vpop.f32.mrb[0].mxu0
  %441 = vmatprep.mubr.bf16.mxu0 0
  %442 = vmatmul.mubr.bf16.gmra.mrb[0].mxu0 %v245
  %v443 = vpop.f32.mrb[0].mxu0
  %v444 = vadd.f32 0.0, %v443
  %v445 = vpop.f32.mrb[0].mxu0
  %v446 = vpop.f32.mrb[0].mxu0
  %v447 = vadd.f32 0.0, %v446
  %v448 = vpop.f32.mrb[0].mxu0
  %449 = vmatprep.mubr.bf16.mxu0 0
  %450 = vmatmul.mubr.bf16.gmra.mrb[0].mxu0 %v248
  %v451 = vpop.f32.mrb[0].mxu0
  %v452 = vadd.f32 0.0, %v451
  %v453 = vpop.f32.mrb[0].mxu0
  %v454 = vpop.f32.mrb[0].mxu0
  %v455 = vadd.f32 0.0, %v454
  %v456 = vpop.f32.mrb[0].mxu0
  %457 = vmatprep.mubr.bf16.mxu0 0
  %458 = vmatmul.mubr.bf16.gmra.mrb[0].mxu0 %v251
  %v459 = vpop.f32.mrb[0].mxu0
  %v460 = vadd.f32 0.0, %v459
  %v461 = vpop.f32.mrb[0].mxu0
  %v462 = vpop.f32.mrb[0].mxu0
  %v463 = vpop.f32.mrb[0].mxu0
  %464 = vdwg.mxu0
  %508 = vrot.lane.b32.xlu0 %v292, 120
  %v509 = vpop.permute.xlu0 %508
  %510 = vrot.lane.b32.xlu0 %v295, 120
  %v511 = vpop.permute.xlu0 %510
  %512 = vrot.lane.b32.xlu0 %v300, 120
  %v513 = vpop.permute.xlu0 %512
  %514 = vrot.lane.b32.xlu0 %v303, 120
  %v515 = vpop.permute.xlu0 %514
  %516 = vrot.lane.b32.xlu0 %v308, 120
  %v517 = vpop.permute.xlu0 %516
  %518 = vrot.lane.b32.xlu0 %v311, 120
  %v519 = vpop.permute.xlu0 %518
  %520 = vrot.lane.b32.xlu0 %v316, 120
  %v521 = vpop.permute.xlu0 %520
  %522 = vrot.lane.b32.xlu0 %v319, 120
  %v523 = vpop.permute.xlu0 %522
  %524 = vrot.lane.b32.xlu0 %v324, 120
  %v525 = vpop.permute.xlu0 %524
  %526 = vrot.lane.b32.xlu0 %v327, 120
  %v527 = vpop.permute.xlu0 %526
  %528 = vrot.lane.b32.xlu0 %v332, 120
  %v529 = vpop.permute.xlu0 %528
  %530 = vrot.lane.b32.xlu0 %v335, 120
  %v531 = vpop.permute.xlu0 %530
  %532 = vrot.lane.b32.xlu0 %v340, 120
  %v533 = vpop.permute.xlu0 %532
  %534 = vrot.lane.b32.xlu0 %v343, 120
  %v535 = vpop.permute.xlu0 %534
  %536 = vrot.lane.b32.xlu0 %v348, 120
  %v537 = vpop.permute.xlu0 %536
  %538 = vrot.lane.b32.xlu0 %v351, 120
  %v539 = vpop.permute.xlu0 %538
  %540 = vrot.lane.b32.xlu0 %v356, 120
  %v541 = vpop.permute.xlu0 %540
  %542 = vrot.lane.b32.xlu0 %v359, 120
  %v543 = vpop.permute.xlu0 %542
  %544 = vrot.lane.b32.xlu0 %v364, 120
  %v545 = vpop.permute.xlu0 %544
  %546 = vrot.lane.b32.xlu0 %v367, 120
  %v547 = vpop.permute.xlu0 %546
  %548 = vrot.lane.b32.xlu0 %v372, 120
  %v549 = vpop.permute.xlu0 %548
  %550 = vrot.lane.b32.xlu0 %v375, 120
  %v551 = vpop.permute.xlu0 %550
  %552 = vrot.lane.b32.xlu0 %v380, 120
  %v553 = vpop.permute.xlu0 %552
  %554 = vrot.lane.b32.xlu0 %v383, 120
  %v555 = vpop.permute.xlu0 %554
  %556 = vrot.lane.b32.xlu0 %v388, 120
  %v557 = vpop.permute.xlu0 %556
  %558 = vrot.lane.b32.xlu0 %v391, 120
  %v559 = vpop.permute.xlu0 %558
  %560 = vrot.lane.b32.xlu0 %v396, 120
  %v561 = vpop.permute.xlu0 %560
  %562 = vrot.lane.b32.xlu0 %v399, 120
  %v563 = vpop.permute.xlu0 %562
  %564 = vrot.lane.b32.xlu0 %v404, 120
  %v565 = vpop.permute.xlu0 %564
  %566 = vrot.lane.b32.xlu0 %v407, 120
  %v567 = vpop.permute.xlu0 %566
  %568 = vrot.lane.b32.xlu0 %v412, 120
  %v569 = vpop.permute.xlu0 %568
  %570 = vrot.lane.b32.xlu0 %v415, 120
  %v571 = vpop.permute.xlu0 %570
  %572 = vrot.lane.b32.xlu0 %v420, 120
  %v573 = vpop.permute.xlu0 %572
  %574 = vrot.lane.b32.xlu0 %v423, 120
  %v575 = vpop.permute.xlu0 %574
  %576 = vrot.lane.b32.xlu0 %v428, 120
  %v577 = vpop.permute.xlu0 %576
  %578 = vrot.lane.b32.xlu0 %v431, 120
  %v579 = vpop.permute.xlu0 %578
  %580 = vrot.lane.b32.xlu0 %v436, 120
  %v581 = vpop.permute.xlu0 %580
  %582 = vrot.lane.b32.xlu0 %v439, 120
  %v583 = vpop.permute.xlu0 %582
  %584 = vrot.lane.b32.xlu0 %v444, 120
  %v585 = vpop.permute.xlu0 %584
  %586 = vrot.lane.b32.xlu0 %v447, 120
  %v587 = vpop.permute.xlu0 %586
  %588 = vrot.lane.b32.xlu0 %v452, 120
  %v589 = vpop.permute.xlu0 %588
  %590 = vrot.lane.b32.xlu0 %v455, 120
  %v591 = vpop.permute.xlu0 %590
  %592 = vrot.lane.b32.xlu0 %v460, 120
  %v593 = vpop.permute.xlu0 %592
  %v637 = vmax.f32 %v292, %v509
  %v638 = vmax.f32 %v295, %v511
  %v639 = vmax.f32 %v300, %v513
  %v640 = vmax.f32 %v303, %v515
  %v641 = vmax.f32 %v308, %v517
  %v642 = vmax.f32 %v311, %v519
  %v643 = vmax.f32 %v316, %v521
  %v644 = vmax.f32 %v319, %v523
  %v645 = vmax.f32 %v324, %v525
  %v646 = vmax.f32 %v327, %v527
  %v647 = vmax.f32 %v332, %v529
  %v648 = vmax.f32 %v335, %v531
  %v649 = vmax.f32 %v340, %v533
  %v650 = vmax.f32 %v343, %v535
  %v651 = vmax.f32 %v348, %v537
  %v652 = vmax.f32 %v351, %v539
  %v653 = vmax.f32 %v356, %v541
  %v654 = vmax.f32 %v359, %v543
  %v655 = vmax.f32 %v364, %v545
  %v656 = vmax.f32 %v367, %v547
  %v657 = vmax.f32 %v372, %v549
  %v658 = vmax.f32 %v375, %v551
  %v659 = vmax.f32 %v380, %v553
  %v660 = vmax.f32 %v383, %v555
  %v661 = vmax.f32 %v388, %v557
  %v662 = vmax.f32 %v391, %v559
  %v663 = vmax.f32 %v396, %v561
  %v664 = vmax.f32 %v399, %v563
  %v665 = vmax.f32 %v404, %v565
  %v666 = vmax.f32 %v407, %v567
  %v667 = vmax.f32 %v412, %v569
  %v668 = vmax.f32 %v415, %v571
  %v669 = vmax.f32 %v420, %v573
  %v670 = vmax.f32 %v423, %v575
  %v671 = vmax.f32 %v428, %v577
  %v672 = vmax.f32 %v431, %v579
  %v673 = vmax.f32 %v436, %v581
  %v674 = vmax.f32 %v439, %v583
  %v675 = vmax.f32 %v444, %v585
  %v676 = vmax.f32 %v447, %v587
  %v677 = vmax.f32 %v452, %v589
  %v678 = vmax.f32 %v455, %v591
  %v679 = vmax.f32 %v460, %v593
  %723 = vrot.lane.b32.xlu0 %v637, 112
  %v724 = vpop.permute.xlu0 %723
  %725 = vrot.lane.b32.xlu0 %v638, 112
  %v726 = vpop.permute.xlu0 %725
  %727 = vrot.lane.b32.xlu0 %v639, 112
  %v728 = vpop.permute.xlu0 %727
  %729 = vrot.lane.b32.xlu0 %v640, 112
  %v730 = vpop.permute.xlu0 %729
  %731 = vrot.lane.b32.xlu0 %v641, 112
  %v732 = vpop.permute.xlu0 %731
  %733 = vrot.lane.b32.xlu0 %v642, 112
  %v734 = vpop.permute.xlu0 %733
  %735 = vrot.lane.b32.xlu0 %v643, 112
  %v736 = vpop.permute.xlu0 %735
  %737 = vrot.lane.b32.xlu0 %v644, 112
  %v738 = vpop.permute.xlu0 %737
  %739 = vrot.lane.b32.xlu0 %v645, 112
  %v740 = vpop.permute.xlu0 %739
  %741 = vrot.lane.b32.xlu0 %v646, 112
  %v742 = vpop.permute.xlu0 %741
  %743 = vrot.lane.b32.xlu0 %v647, 112
  %v744 = vpop.permute.xlu0 %743
  %745 = vrot.lane.b32.xlu0 %v648, 112
  %v746 = vpop.permute.xlu0 %745
  %747 = vrot.lane.b32.xlu0 %v649, 112
  %v748 = vpop.permute.xlu0 %747
  %749 = vrot.lane.b32.xlu0 %v650, 112
  %v750 = vpop.permute.xlu0 %749
  %751 = vrot.lane.b32.xlu0 %v651, 112
  %v752 = vpop.permute.xlu0 %751
  %753 = vrot.lane.b32.xlu0 %v652, 112
  %v754 = vpop.permute.xlu0 %753
  %755 = vrot.lane.b32.xlu0 %v653, 112
  %v756 = vpop.permute.xlu0 %755
  %757 = vrot.lane.b32.xlu0 %v654, 112
  %v758 = vpop.permute.xlu0 %757
  %759 = vrot.lane.b32.xlu0 %v655, 112
  %v760 = vpop.permute.xlu0 %759
  %761 = vrot.lane.b32.xlu0 %v656, 112
  %v762 = vpop.permute.xlu0 %761
  %763 = vrot.lane.b32.xlu0 %v657, 112
  %v764 = vpop.permute.xlu0 %763
  %765 = vrot.lane.b32.xlu0 %v658, 112
  %v766 = vpop.permute.xlu0 %765
  %767 = vrot.lane.b32.xlu0 %v659, 112
  %v768 = vpop.permute.xlu0 %767
  %769 = vrot.lane.b32.xlu0 %v660, 112
  %v770 = vpop.permute.xlu0 %769
  %771 = vrot.lane.b32.xlu0 %v661, 112
  %v772 = vpop.permute.xlu0 %771
  %773 = vrot.lane.b32.xlu0 %v662, 112
  %v774 = vpop.permute.xlu0 %773
  %775 = vrot.lane.b32.xlu0 %v663, 112
  %v776 = vpop.permute.xlu0 %775
  %777 = vrot.lane.b32.xlu0 %v664, 112
  %v778 = vpop.permute.xlu0 %777
  %779 = vrot.lane.b32.xlu0 %v665, 112
  %v780 = vpop.permute.xlu0 %779
  %781 = vrot.lane.b32.xlu0 %v666, 112
  %v782 = vpop.permute.xlu0 %781
  %783 = vrot.lane.b32.xlu0 %v667, 112
  %v784 = vpop.permute.xlu0 %783
  %785 = vrot.lane.b32.xlu0 %v668, 112
  %v786 = vpop.permute.xlu0 %785
  %787 = vrot.lane.b32.xlu0 %v669, 112
  %v788 = vpop.permute.xlu0 %787
  %789 = vrot.lane.b32.xlu0 %v670, 112
  %v790 = vpop.permute.xlu0 %789
  %791 = vrot.lane.b32.xlu0 %v671, 112
  %v792 = vpop.permute.xlu0 %791
  %793 = vrot.lane.b32.xlu0 %v672, 112
  %v794 = vpop.permute.xlu0 %793
  %795 = vrot.lane.b32.xlu0 %v673, 112
  %v796 = vpop.permute.xlu0 %795
  %797 = vrot.lane.b32.xlu0 %v674, 112
  %v798 = vpop.permute.xlu0 %797
  %799 = vrot.lane.b32.xlu0 %v675, 112
  %v800 = vpop.permute.xlu0 %799
  %801 = vrot.lane.b32.xlu0 %v676, 112
  %v802 = vpop.permute.xlu0 %801
  %803 = vrot.lane.b32.xlu0 %v677, 112
  %v804 = vpop.permute.xlu0 %803
  %805 = vrot.lane.b32.xlu0 %v678, 112
  %v806 = vpop.permute.xlu0 %805
  %807 = vrot.lane.b32.xlu0 %v679, 112
  %v808 = vpop.permute.xlu0 %807
  %v852 = vmax.f32 %v637, %v724
  %v853 = vmax.f32 %v638, %v726
  %v854 = vmax.f32 %v639, %v728
  %v855 = vmax.f32 %v640, %v730
  %v856 = vmax.f32 %v641, %v732
  %v857 = vmax.f32 %v642, %v734
  %v858 = vmax.f32 %v643, %v736
  %v859 = vmax.f32 %v644, %v738
  %v860 = vmax.f32 %v645, %v740
  %v861 = vmax.f32 %v646, %v742
  %v862 = vmax.f32 %v647, %v744
  %v863 = vmax.f32 %v648, %v746
  %v864 = vmax.f32 %v649, %v748
  %v865 = vmax.f32 %v650, %v750
  %v866 = vmax.f32 %v651, %v752
  %v867 = vmax.f32 %v652, %v754
  %v868 = vmax.f32 %v653, %v756
  %v869 = vmax.f32 %v654, %v758
  %v870 = vmax.f32 %v655, %v760
  %v871 = vmax.f32 %v656, %v762
  %v872 = vmax.f32 %v657, %v764
  %v873 = vmax.f32 %v658, %v766
  %v874 = vmax.f32 %v659, %v768
  %v875 = vmax.f32 %v660, %v770
  %v876 = vmax.f32 %v661, %v772
  %v877 = vmax.f32 %v662, %v774
  %v878 = vmax.f32 %v663, %v776
  %v879 = vmax.f32 %v664, %v778
  %v880 = vmax.f32 %v665, %v780
  %v881 = vmax.f32 %v666, %v782
  %v882 = vmax.f32 %v667, %v784
  %v883 = vmax.f32 %v668, %v786
  %v884 = vmax.f32 %v669, %v788
  %v885 = vmax.f32 %v670, %v790
  %v886 = vmax.f32 %v671, %v792
  %v887 = vmax.f32 %v672, %v794
  %v888 = vmax.f32 %v673, %v796
  %v889 = vmax.f32 %v674, %v798
  %v890 = vmax.f32 %v675, %v800
  %v891 = vmax.f32 %v676, %v802
  %v892 = vmax.f32 %v677, %v804
  %v893 = vmax.f32 %v678, %v806
  %v894 = vmax.f32 %v679, %v808
  %v895 = vld [vmem:[%s2] sm:$0x1]
  %v896 = vlaneseq
  %v897 = vshrl.u32 %v896, 7
  %v898 = vsub.s32 0, %v897
  %v899 = vrot.slane %v895, %v898
  %v900 = vadd.f32 %v852, %v899
  %v901 = vadd.f32 %v853, %v899
  %v902 = vadd.f32 %v854, %v899
  %v903 = vadd.f32 %v855, %v899
  %v904 = vadd.f32 %v856, %v899
  %v905 = vadd.f32 %v857, %v899
  %v906 = vadd.f32 %v858, %v899
  %v907 = vadd.f32 %v859, %v899
  %v908 = vadd.f32 %v860, %v899
  %v909 = vadd.f32 %v861, %v899
  %v910 = vadd.f32 %v862, %v899
  %v911 = vadd.f32 %v863, %v899
  %v912 = vadd.f32 %v864, %v899
  %v913 = vadd.f32 %v865, %v899
  %v914 = vadd.f32 %v866, %v899
  %v915 = vadd.f32 %v867, %v899
  %v916 = vadd.f32 %v868, %v899
  %v917 = vadd.f32 %v869, %v899
  %v918 = vadd.f32 %v870, %v899
  %v919 = vadd.f32 %v871, %v899
  %v920 = vadd.f32 %v872, %v899
  %v921 = vadd.f32 %v873, %v899
  %v922 = vadd.f32 %v874, %v899
  %v923 = vadd.f32 %v875, %v899
  %v924 = vadd.f32 %v876, %v899
  %v925 = vadd.f32 %v877, %v899
  %v926 = vadd.f32 %v878, %v899
  %v927 = vadd.f32 %v879, %v899
  %v928 = vadd.f32 %v880, %v899
  %v929 = vadd.f32 %v881, %v899
  %v930 = vadd.f32 %v882, %v899
  %v931 = vadd.f32 %v883, %v899
  %v932 = vadd.f32 %v884, %v899
  %v933 = vadd.f32 %v885, %v899
  %v934 = vadd.f32 %v886, %v899
  %v935 = vadd.f32 %v887, %v899
  %v936 = vadd.f32 %v888, %v899
  %v937 = vadd.f32 %v889, %v899
  %v938 = vadd.f32 %v890, %v899
  %v939 = vadd.f32 %v891, %v899
  %v940 = vadd.f32 %v892, %v899
  %v941 = vadd.f32 %v893, %v899
  %v942 = vadd.f32 %v894, %v899
  %vm943 = vcmask 64512
  %v944 = vsel %vm943, %v900, 0.0
  %v945 = vsel %vm943, %v901, 0.0
  %v946 = vadd.f32 %v944, %v945
  %v947 = vsel %vm943, %v902, 0.0
  %v948 = vadd.f32 %v946, %v947
  %v949 = vsel %vm943, %v903, 0.0
  %v950 = vadd.f32 %v948, %v949
  %v951 = vsel %vm943, %v904, 0.0
  %v952 = vadd.f32 %v950, %v951
  %v953 = vsel %vm943, %v905, 0.0
  %v954 = vadd.f32 %v952, %v953
  %v955 = vsel %vm943, %v906, 0.0
  %v956 = vadd.f32 %v954, %v955
  %v957 = vsel %vm943, %v907, 0.0
  %v958 = vadd.f32 %v956, %v957
  %v959 = vsel %vm943, %v908, 0.0
  %v960 = vadd.f32 %v958, %v959
  %v961 = vsel %vm943, %v909, 0.0
  %v962 = vadd.f32 %v960, %v961
  %v963 = vsel %vm943, %v910, 0.0
  %v964 = vadd.f32 %v962, %v963
  %v965 = vsel %vm943, %v911, 0.0
  %v966 = vadd.f32 %v964, %v965
  %v967 = vsel %vm943, %v912, 0.0
  %v968 = vadd.f32 %v966, %v967
  %v969 = vsel %vm943, %v913, 0.0
  %v970 = vadd.f32 %v968, %v969
  %v971 = vsel %vm943, %v914, 0.0
  %v972 = vadd.f32 %v970, %v971
  %v973 = vsel %vm943, %v915, 0.0
  %v974 = vadd.f32 %v972, %v973
  %v975 = vsel %vm943, %v916, 0.0
  %v976 = vadd.f32 %v974, %v975
  %v977 = vsel %vm943, %v917, 0.0
  %v978 = vadd.f32 %v976, %v977
  %v979 = vsel %vm943, %v918, 0.0
  %v980 = vadd.f32 %v978, %v979
  %v981 = vsel %vm943, %v919, 0.0
  %v982 = vadd.f32 %v980, %v981
  %v983 = vsel %vm943, %v920, 0.0
  %v984 = vadd.f32 %v982, %v983
  %v985 = vsel %vm943, %v921, 0.0
  %v986 = vadd.f32 %v984, %v985
  %v987 = vsel %vm943, %v922, 0.0
  %v988 = vadd.f32 %v986, %v987
  %v989 = vsel %vm943, %v923, 0.0
  %v990 = vadd.f32 %v988, %v989
  %v991 = vsel %vm943, %v924, 0.0
  %v992 = vadd.f32 %v990, %v991
  %v993 = vsel %vm943, %v925, 0.0
  %v994 = vadd.f32 %v992, %v993
  %v995 = vsel %vm943, %v926, 0.0
  %v996 = vadd.f32 %v994, %v995
  %v997 = vsel %vm943, %v927, 0.0
  %v998 = vadd.f32 %v996, %v997
  %v999 = vsel %vm943, %v928, 0.0
  %v1000 = vadd.f32 %v998, %v999
  %v1001 = vsel %vm943, %v929, 0.0
  %v1002 = vadd.f32 %v1000, %v1001
  %v1003 = vsel %vm943, %v930, 0.0
  %v1004 = vadd.f32 %v1002, %v1003
  %v1005 = vsel %vm943, %v931, 0.0
  %v1006 = vadd.f32 %v1004, %v1005
  %v1007 = vsel %vm943, %v932, 0.0
  %v1008 = vadd.f32 %v1006, %v1007
  %v1009 = vsel %vm943, %v933, 0.0
  %v1010 = vadd.f32 %v1008, %v1009
  %v1011 = vsel %vm943, %v934, 0.0
  %v1012 = vadd.f32 %v1010, %v1011
  %v1013 = vsel %vm943, %v935, 0.0
  %v1014 = vadd.f32 %v1012, %v1013
  %v1015 = vsel %vm943, %v936, 0.0
  %v1016 = vadd.f32 %v1014, %v1015
  %v1017 = vsel %vm943, %v937, 0.0
  %v1018 = vadd.f32 %v1016, %v1017
  %v1019 = vsel %vm943, %v938, 0.0
  %v1020 = vadd.f32 %v1018, %v1019
  %v1021 = vsel %vm943, %v939, 0.0
  %v1022 = vadd.f32 %v1020, %v1021
  %v1023 = vsel %vm943, %v940, 0.0
  %v1024 = vadd.f32 %v1022, %v1023
  %v1025 = vsel %vm943, %v941, 0.0
  %v1026 = vadd.f32 %v1024, %v1025
  %vm1027 = vcmask 58368
  %v1028 = vsel %vm1027, %v942, 0.0
  %v1029 = vadd.f32 %v1026, %v1028
  %v1030 = vrot.slane %v1029, 4
  %v1031 = vadd.f32 %v1029, %v1030
  %v1032 = vrot.slane %v1031, 2
  %v1033 = vadd.f32 %v1031, %v1032
  %v1034 = vrot.slane %v1033, 1
  %v1035 = vadd.f32 %v1033, %v1034
  %v1036 = vmul.f32 %v1035, 0.00295858
  %v1037 = vmul.f32 %v900, %v900
  %v1038 = vmul.f32 %v901, %v901
  %v1039 = vmul.f32 %v902, %v902
  %v1040 = vmul.f32 %v903, %v903
  %v1041 = vmul.f32 %v904, %v904
  %v1042 = vmul.f32 %v905, %v905
  %v1043 = vmul.f32 %v906, %v906
  %v1044 = vmul.f32 %v907, %v907
  %v1045 = vmul.f32 %v908, %v908
  %v1046 = vmul.f32 %v909, %v909
  %v1047 = vmul.f32 %v910, %v910
  %v1048 = vmul.f32 %v911, %v911
  %v1049 = vmul.f32 %v912, %v912
  %v1050 = vmul.f32 %v913, %v913
  %v1051 = vmul.f32 %v914, %v914
  %v1052 = vmul.f32 %v915, %v915
  %v1053 = vmul.f32 %v916, %v916
  %v1054 = vmul.f32 %v917, %v917
  %v1055 = vmul.f32 %v918, %v918
  %v1056 = vmul.f32 %v919, %v919
  %v1057 = vmul.f32 %v920, %v920
  %v1058 = vmul.f32 %v921, %v921
  %v1059 = vmul.f32 %v922, %v922
  %v1060 = vmul.f32 %v923, %v923
  %v1061 = vmul.f32 %v924, %v924
  %v1062 = vmul.f32 %v925, %v925
  %v1063 = vmul.f32 %v926, %v926
  %v1064 = vmul.f32 %v927, %v927
  %v1065 = vmul.f32 %v928, %v928
  %v1066 = vmul.f32 %v929, %v929
  %v1067 = vmul.f32 %v930, %v930
  %v1068 = vmul.f32 %v931, %v931
  %v1069 = vmul.f32 %v932, %v932
  %v1070 = vmul.f32 %v933, %v933
  %v1071 = vmul.f32 %v934, %v934
  %v1072 = vmul.f32 %v935, %v935
  %v1073 = vmul.f32 %v936, %v936
  %v1074 = vmul.f32 %v937, %v937
  %v1075 = vmul.f32 %v938, %v938
  %v1076 = vmul.f32 %v939, %v939
  %v1077 = vmul.f32 %v940, %v940
  %v1078 = vmul.f32 %v941, %v941
  %v1079 = vmul.f32 %v942, %v942
  %v1080 = vsel %vm943, %v1037, 0.0
  %v1081 = vsel %vm943, %v1038, 0.0
  %v1082 = vadd.f32 %v1080, %v1081
  %v1083 = vsel %vm943, %v1039, 0.0
  %v1084 = vadd.f32 %v1082, %v1083
  %v1085 = vsel %vm943, %v1040, 0.0
  %v1086 = vadd.f32 %v1084, %v1085
  %v1087 = vsel %vm943, %v1041, 0.0
  %v1088 = vadd.f32 %v1086, %v1087
  %v1089 = vsel %vm943, %v1042, 0.0
  %v1090 = vadd.f32 %v1088, %v1089
  %v1091 = vsel %vm943, %v1043, 0.0
  %v1092 = vadd.f32 %v1090, %v1091
  %v1093 = vsel %vm943, %v1044, 0.0
  %v1094 = vadd.f32 %v1092, %v1093
  %v1095 = vsel %vm943, %v1045, 0.0
  %v1096 = vadd.f32 %v1094, %v1095
  %v1097 = vsel %vm943, %v1046, 0.0
  %v1098 = vadd.f32 %v1096, %v1097
  %v1099 = vsel %vm943, %v1047, 0.0
  %v1100 = vadd.f32 %v1098, %v1099
  %v1101 = vsel %vm943, %v1048, 0.0
  %v1102 = vadd.f32 %v1100, %v1101
  %v1103 = vsel %vm943, %v1049, 0.0
  %v1104 = vadd.f32 %v1102, %v1103
  %v1105 = vsel %vm943, %v1050, 0.0
  %v1106 = vadd.f32 %v1104, %v1105
  %v1107 = vsel %vm943, %v1051, 0.0
  %v1108 = vadd.f32 %v1106, %v1107
  %v1109 = vsel %vm943, %v1052, 0.0
  %v1110 = vadd.f32 %v1108, %v1109
  %v1111 = vsel %vm943, %v1053, 0.0
  %v1112 = vadd.f32 %v1110, %v1111
  %v1113 = vsel %vm943, %v1054, 0.0
  %v1114 = vadd.f32 %v1112, %v1113
  %v1115 = vsel %vm943, %v1055, 0.0
  %v1116 = vadd.f32 %v1114, %v1115
  %v1117 = vsel %vm943, %v1056, 0.0
  %v1118 = vadd.f32 %v1116, %v1117
  %v1119 = vsel %vm943, %v1057, 0.0
  %v1120 = vadd.f32 %v1118, %v1119
  %v1121 = vsel %vm943, %v1058, 0.0
  %v1122 = vadd.f32 %v1120, %v1121
  %v1123 = vsel %vm943, %v1059, 0.0
  %v1124 = vadd.f32 %v1122, %v1123
  %v1125 = vsel %vm943, %v1060, 0.0
  %v1126 = vadd.f32 %v1124, %v1125
  %v1127 = vsel %vm943, %v1061, 0.0
  %v1128 = vadd.f32 %v1126, %v1127
  %v1129 = vsel %vm943, %v1062, 0.0
  %v1130 = vadd.f32 %v1128, %v1129
  %v1131 = vsel %vm943, %v1063, 0.0
  %v1132 = vadd.f32 %v1130, %v1131
  %v1133 = vsel %vm943, %v1064, 0.0
  %v1134 = vadd.f32 %v1132, %v1133
  %v1135 = vsel %vm943, %v1065, 0.0
  %v1136 = vadd.f32 %v1134, %v1135
  %v1137 = vsel %vm943, %v1066, 0.0
  %v1138 = vadd.f32 %v1136, %v1137
  %v1139 = vsel %vm943, %v1067, 0.0
  %v1140 = vadd.f32 %v1138, %v1139
  %v1141 = vsel %vm943, %v1068, 0.0
  %v1142 = vadd.f32 %v1140, %v1141
  %v1143 = vsel %vm943, %v1069, 0.0
  %v1144 = vadd.f32 %v1142, %v1143
  %v1145 = vsel %vm943, %v1070, 0.0
  %v1146 = vadd.f32 %v1144, %v1145
  %v1147 = vsel %vm943, %v1071, 0.0
  %v1148 = vadd.f32 %v1146, %v1147
  %v1149 = vsel %vm943, %v1072, 0.0
  %v1150 = vadd.f32 %v1148, %v1149
  %v1151 = vsel %vm943, %v1073, 0.0
  %v1152 = vadd.f32 %v1150, %v1151
  %v1153 = vsel %vm943, %v1074, 0.0
  %v1154 = vadd.f32 %v1152, %v1153
  %v1155 = vsel %vm943, %v1075, 0.0
  %v1156 = vadd.f32 %v1154, %v1155
  %v1157 = vsel %vm943, %v1076, 0.0
  %v1158 = vadd.f32 %v1156, %v1157
  %v1159 = vsel %vm943, %v1077, 0.0
  %v1160 = vadd.f32 %v1158, %v1159
  %v1161 = vsel %vm943, %v1078, 0.0
  %v1162 = vadd.f32 %v1160, %v1161
  %v1163 = vsel %vm1027, %v1079, 0.0
  %v1164 = vadd.f32 %v1162, %v1163
  %v1165 = vrot.slane %v1164, 4
  %v1166 = vadd.f32 %v1164, %v1165
  %v1167 = vrot.slane %v1166, 2
  %v1168 = vadd.f32 %v1166, %v1167
  %v1169 = vrot.slane %v1168, 1
  %v1170 = vadd.f32 %v1168, %v1169
  %v1171 = vmul.f32 %v1170, 0.00295858
  %v1172 = vmul.f32 %v1036, %v1036
  %v1173 = vsub.f32 %v1171, %v1172
  %v1174 = vmax.f32 %v1173, 0.0
  %v1175 = vadd.f32 %v1174, 1e-05
  %v1176 = vrsqrt.pop %v1175
  %v1177 = vsub.f32 %v900, %v1036
  %v1178 = vsub.f32 %v901, %v1036
  %v1179 = vsub.f32 %v902, %v1036
  %v1180 = vsub.f32 %v903, %v1036
  %v1181 = vsub.f32 %v904, %v1036
  %v1182 = vsub.f32 %v905, %v1036
  %v1183 = vsub.f32 %v906, %v1036
  %v1184 = vsub.f32 %v907, %v1036
  %v1185 = vsub.f32 %v908, %v1036
  %v1186 = vsub.f32 %v909, %v1036
  %v1187 = vsub.f32 %v910, %v1036
  %v1188 = vsub.f32 %v911, %v1036
  %v1189 = vsub.f32 %v912, %v1036
  %v1190 = vsub.f32 %v913, %v1036
  %v1191 = vsub.f32 %v914, %v1036
  %v1192 = vsub.f32 %v915, %v1036
  %v1193 = vsub.f32 %v916, %v1036
  %v1194 = vsub.f32 %v917, %v1036
  %v1195 = vsub.f32 %v918, %v1036
  %v1196 = vsub.f32 %v919, %v1036
  %v1197 = vsub.f32 %v920, %v1036
  %v1198 = vsub.f32 %v921, %v1036
  %v1199 = vsub.f32 %v922, %v1036
  %v1200 = vsub.f32 %v923, %v1036
  %v1201 = vsub.f32 %v924, %v1036
  %v1202 = vsub.f32 %v925, %v1036
  %v1203 = vsub.f32 %v926, %v1036
  %v1204 = vsub.f32 %v927, %v1036
  %v1205 = vsub.f32 %v928, %v1036
  %v1206 = vsub.f32 %v929, %v1036
  %v1207 = vsub.f32 %v930, %v1036
  %v1208 = vsub.f32 %v931, %v1036
  %v1209 = vsub.f32 %v932, %v1036
  %v1210 = vsub.f32 %v933, %v1036
  %v1211 = vsub.f32 %v934, %v1036
  %v1212 = vsub.f32 %v935, %v1036
  %v1213 = vsub.f32 %v936, %v1036
  %v1214 = vsub.f32 %v937, %v1036
  %v1215 = vsub.f32 %v938, %v1036
  %v1216 = vsub.f32 %v939, %v1036
  %v1217 = vsub.f32 %v940, %v1036
  %v1218 = vsub.f32 %v941, %v1036
  %v1219 = vsub.f32 %v942, %v1036
  %v1220 = vld [vmem:[%s2 + $0x1] sm:$0x1]
  %v1221 = vmul.f32 %v1176, %v1220
  %v1222 = vlaneseq
  %v1223 = vshrl.u32 %v1222, 7
  %v1224 = vsub.s32 0, %v1223
  %v1225 = vrot.slane %v1221, %v1224
  %v1226 = vmul.f32 %v1177, %v1225
  %v1227 = vmul.f32 %v1178, %v1225
  %v1228 = vmul.f32 %v1179, %v1225
  %v1229 = vmul.f32 %v1180, %v1225
  %v1230 = vmul.f32 %v1181, %v1225
  %v1231 = vmul.f32 %v1182, %v1225
  %v1232 = vmul.f32 %v1183, %v1225
  %v1233 = vmul.f32 %v1184, %v1225
  %v1234 = vmul.f32 %v1185, %v1225
  %v1235 = vmul.f32 %v1186, %v1225
  %v1236 = vmul.f32 %v1187, %v1225
  %v1237 = vmul.f32 %v1188, %v1225
  %v1238 = vmul.f32 %v1189, %v1225
  %v1239 = vmul.f32 %v1190, %v1225
  %v1240 = vmul.f32 %v1191, %v1225
  %v1241 = vmul.f32 %v1192, %v1225
  %v1242 = vmul.f32 %v1193, %v1225
  %v1243 = vmul.f32 %v1194, %v1225
  %v1244 = vmul.f32 %v1195, %v1225
  %v1245 = vmul.f32 %v1196, %v1225
  %v1246 = vmul.f32 %v1197, %v1225
  %v1247 = vmul.f32 %v1198, %v1225
  %v1248 = vmul.f32 %v1199, %v1225
  %v1249 = vmul.f32 %v1200, %v1225
  %v1250 = vmul.f32 %v1201, %v1225
  %v1251 = vmul.f32 %v1202, %v1225
  %v1252 = vmul.f32 %v1203, %v1225
  %v1253 = vmul.f32 %v1204, %v1225
  %v1254 = vmul.f32 %v1205, %v1225
  %v1255 = vmul.f32 %v1206, %v1225
  %v1256 = vmul.f32 %v1207, %v1225
  %v1257 = vmul.f32 %v1208, %v1225
  %v1258 = vmul.f32 %v1209, %v1225
  %v1259 = vmul.f32 %v1210, %v1225
  %v1260 = vmul.f32 %v1211, %v1225
  %v1261 = vmul.f32 %v1212, %v1225
  %v1262 = vmul.f32 %v1213, %v1225
  %v1263 = vmul.f32 %v1214, %v1225
  %v1264 = vmul.f32 %v1215, %v1225
  %v1265 = vmul.f32 %v1216, %v1225
  %v1266 = vmul.f32 %v1217, %v1225
  %v1267 = vmul.f32 %v1218, %v1225
  %v1268 = vmul.f32 %v1219, %v1225
  %v1269 = vld [vmem:[%s2 + $0x2] sm:$0x1]
  %v1270 = vlaneseq
  %v1271 = vshrl.u32 %v1270, 7
  %v1272 = vsub.s32 0, %v1271
  %v1273 = vrot.slane %v1269, %v1272
  %v1274 = vadd.f32 %v1226, %v1273
  %v1275 = vadd.f32 %v1227, %v1273
  %v1276 = vadd.f32 %v1228, %v1273
  %v1277 = vadd.f32 %v1229, %v1273
  %v1278 = vadd.f32 %v1230, %v1273
  %v1279 = vadd.f32 %v1231, %v1273
  %v1280 = vadd.f32 %v1232, %v1273
  %v1281 = vadd.f32 %v1233, %v1273
  %v1282 = vadd.f32 %v1234, %v1273
  %v1283 = vadd.f32 %v1235, %v1273
  %v1284 = vadd.f32 %v1236, %v1273
  %v1285 = vadd.f32 %v1237, %v1273
  %v1286 = vadd.f32 %v1238, %v1273
  %v1287 = vadd.f32 %v1239, %v1273
  %v1288 = vadd.f32 %v1240, %v1273
  %v1289 = vadd.f32 %v1241, %v1273
  %v1290 = vadd.f32 %v1242, %v1273
  %v1291 = vadd.f32 %v1243, %v1273
  %v1292 = vadd.f32 %v1244, %v1273
  %v1293 = vadd.f32 %v1245, %v1273
  %v1294 = vadd.f32 %v1246, %v1273
  %v1295 = vadd.f32 %v1247, %v1273
  %v1296 = vadd.f32 %v1248, %v1273
  %v1297 = vadd.f32 %v1249, %v1273
  %v1298 = vadd.f32 %v1250, %v1273
  %v1299 = vadd.f32 %v1251, %v1273
  %v1300 = vadd.f32 %v1252, %v1273
  %v1301 = vadd.f32 %v1253, %v1273
  %v1302 = vadd.f32 %v1254, %v1273
  %v1303 = vadd.f32 %v1255, %v1273
  %v1304 = vadd.f32 %v1256, %v1273
  %v1305 = vadd.f32 %v1257, %v1273
  %v1306 = vadd.f32 %v1258, %v1273
  %v1307 = vadd.f32 %v1259, %v1273
  %v1308 = vadd.f32 %v1260, %v1273
  %v1309 = vadd.f32 %v1261, %v1273
  %v1310 = vadd.f32 %v1262, %v1273
  %v1311 = vadd.f32 %v1263, %v1273
  %v1312 = vadd.f32 %v1264, %v1273
  %v1313 = vadd.f32 %v1265, %v1273
  %v1314 = vadd.f32 %v1266, %v1273
  %v1315 = vadd.f32 %v1267, %v1273
  %v1316 = vadd.f32 %v1268, %v1273
  %v1317 = vpack.c.bf16 %v1275, %v1274
  %v1318 = vpack.c.bf16 %v1277, %v1276
  %v1319 = vpack.c.bf16 %v1279, %v1278
  %v1320 = vpack.c.bf16 %v1281, %v1280
  %v1321 = vpack.c.bf16 %v1283, %v1282
  %v1322 = vpack.c.bf16 %v1285, %v1284
  %v1323 = vpack.c.bf16 %v1287, %v1286
  %v1324 = vpack.c.bf16 %v1289, %v1288
  %v1325 = vpack.c.bf16 %v1291, %v1290
  %v1326 = vpack.c.bf16 %v1293, %v1292
  %v1327 = vpack.c.bf16 %v1295, %v1294
  %v1328 = vpack.c.bf16 %v1297, %v1296
  %v1329 = vpack.c.bf16 %v1299, %v1298
  %v1330 = vpack.c.bf16 %v1301, %v1300
  %v1331 = vpack.c.bf16 %v1303, %v1302
  %v1332 = vpack.c.bf16 %v1305, %v1304
  %v1333 = vpack.c.bf16 %v1307, %v1306
  %v1334 = vpack.c.bf16 %v1309, %v1308
  %v1335 = vpack.c.bf16 %v1311, %v1310
  %v1336 = vpack.c.bf16 %v1313, %v1312
  %v1337 = vpack.c.bf16 %v1315, %v1314
  %v1338 = vpack.c.bf16 %v1316, %v1316
  %v1361 = vunpack.c.l.b16 %v1317
  %v1362 = vunpack.c.h.b16 %v1317
  %v1363 = vunpack.c.l.b16 %v1318
  %v1364 = vunpack.c.h.b16 %v1318
  %v1365 = vunpack.c.l.b16 %v1319
  %v1366 = vunpack.c.h.b16 %v1319
  %v1367 = vunpack.c.l.b16 %v1320
  %v1368 = vunpack.c.h.b16 %v1320
  %v1369 = vunpack.c.l.b16 %v1321
  %v1370 = vunpack.c.h.b16 %v1321
  %v1371 = vunpack.c.l.b16 %v1322
  %v1372 = vunpack.c.h.b16 %v1322
  %v1373 = vunpack.c.l.b16 %v1323
  %v1374 = vunpack.c.h.b16 %v1323
  %v1375 = vunpack.c.l.b16 %v1324
  %v1376 = vunpack.c.h.b16 %v1324
  %v1377 = vunpack.c.l.b16 %v1325
  %v1378 = vunpack.c.h.b16 %v1325
  %v1379 = vunpack.c.l.b16 %v1326
  %v1380 = vunpack.c.h.b16 %v1326
  %v1381 = vunpack.c.l.b16 %v1327
  %v1382 = vunpack.c.h.b16 %v1327
  %v1383 = vunpack.c.l.b16 %v1328
  %v1384 = vunpack.c.h.b16 %v1328
  %v1385 = vunpack.c.l.b16 %v1329
  %v1386 = vunpack.c.h.b16 %v1329
  %v1387 = vunpack.c.l.b16 %v1330
  %v1388 = vunpack.c.h.b16 %v1330
  %v1389 = vunpack.c.l.b16 %v1331
  %v1390 = vunpack.c.h.b16 %v1331
  %v1391 = vunpack.c.l.b16 %v1332
  %v1392 = vunpack.c.h.b16 %v1332
  %v1393 = vunpack.c.l.b16 %v1333
  %v1394 = vunpack.c.h.b16 %v1333
  %v1395 = vunpack.c.l.b16 %v1334
  %v1396 = vunpack.c.h.b16 %v1334
  %v1397 = vunpack.c.l.b16 %v1335
  %v1398 = vunpack.c.h.b16 %v1335
  %v1399 = vunpack.c.l.b16 %v1336
  %v1400 = vunpack.c.h.b16 %v1336
  %v1401 = vunpack.c.l.b16 %v1337
  %v1402 = vunpack.c.h.b16 %v1337
  %v1403 = vunpack.c.l.b16 %v1338
  %v1404 = vpack.c.b16 %v1361, %v1361
  %v1405 = vpack.c.b16 %v1362, %v1362
  %v1406 = vpack.c.b16 %v1363, %v1363
  %v1407 = vpack.c.b16 %v1364, %v1364
  %v1408 = vpack.c.b16 %v1365, %v1365
  %v1409 = vpack.c.b16 %v1366, %v1366
  %v1410 = vpack.c.b16 %v1367, %v1367
  %v1411 = vpack.c.b16 %v1368, %v1368
  %v1412 = vpack.c.b16 %v1369, %v1369
  %v1413 = vpack.c.b16 %v1370, %v1370
  %v1414 = vpack.c.b16 %v1371, %v1371
  %v1415 = vpack.c.b16 %v1372, %v1372
  %v1416 = vpack.c.b16 %v1373, %v1373
  %v1417 = vpack.c.b16 %v1374, %v1374
  %v1418 = vpack.c.b16 %v1375, %v1375
  %v1419 = vpack.c.b16 %v1376, %v1376
  %v1420 = vpack.c.b16 %v1377, %v1377
  %v1421 = vpack.c.b16 %v1378, %v1378
  %v1422 = vpack.c.b16 %v1379, %v1379
  %v1423 = vpack.c.b16 %v1380, %v1380
  %v1424 = vpack.c.b16 %v1381, %v1381
  %v1425 = vpack.c.b16 %v1382, %v1382
  %v1426 = vpack.c.b16 %v1383, %v1383
  %v1427 = vpack.c.b16 %v1384, %v1384
  %v1428 = vpack.c.b16 %v1385, %v1385
  %v1429 = vpack.c.b16 %v1386, %v1386
  %v1430 = vpack.c.b16 %v1387, %v1387
  %v1431 = vpack.c.b16 %v1388, %v1388
  %v1432 = vpack.c.b16 %v1389, %v1389
  %v1433 = vpack.c.b16 %v1390, %v1390
  %v1434 = vpack.c.b16 %v1391, %v1391
  %v1435 = vpack.c.b16 %v1392, %v1392
  %v1436 = vpack.c.b16 %v1393, %v1393
  %v1437 = vpack.c.b16 %v1394, %v1394
  %v1438 = vpack.c.b16 %v1395, %v1395
  %v1439 = vpack.c.b16 %v1396, %v1396
  %v1440 = vpack.c.b16 %v1397, %v1397
  %v1441 = vpack.c.b16 %v1398, %v1398
  %v1442 = vpack.c.b16 %v1399, %v1399
  %v1443 = vpack.c.b16 %v1400, %v1400
  %v1444 = vpack.c.b16 %v1401, %v1401
  %v1445 = vpack.c.b16 %v1402, %v1402
  %v1446 = vpack.c.b16 %v1403, %v1403
  %vm1490 = vcmask 60416
  %1491 = vst.msk [vmem:[%s3] sm:$0xf] %vm1490, %v1404
  %1492 = vst.msk [vmem:[%s3 + $0x4] sm:$0xf] %vm1490, %v1405
  %1493 = vst.msk [vmem:[%s3 + $0x8] sm:$0xf] %vm1490, %v1406
  %1494 = vst.msk [vmem:[%s3 + $0xc] sm:$0xf] %vm1490, %v1407
  %1495 = vst.msk [vmem:[%s3 + $0x10] sm:$0xf] %vm1490, %v1408
  %1496 = vst.msk [vmem:[%s3 + $0x14] sm:$0xf] %vm1490, %v1409
  %1497 = vst.msk [vmem:[%s3 + $0x18] sm:$0xf] %vm1490, %v1410
  %1498 = vst.msk [vmem:[%s3 + $0x1c] sm:$0xf] %vm1490, %v1411
  %1499 = vst.msk [vmem:[%s3 + $0x20] sm:$0xf] %vm1490, %v1412
  %1500 = vst.msk [vmem:[%s3 + $0x24] sm:$0xf] %vm1490, %v1413
  %1501 = vst.msk [vmem:[%s3 + $0x28] sm:$0xf] %vm1490, %v1414
  %1502 = vst.msk [vmem:[%s3 + $0x2c] sm:$0xf] %vm1490, %v1415
  %1503 = vst.msk [vmem:[%s3 + $0x30] sm:$0xf] %vm1490, %v1416
  %1504 = vst.msk [vmem:[%s3 + $0x34] sm:$0xf] %vm1490, %v1417
  %1505 = vst.msk [vmem:[%s3 + $0x38] sm:$0xf] %vm1490, %v1418
  %1506 = vst.msk [vmem:[%s3 + $0x3c] sm:$0xf] %vm1490, %v1419
  %1507 = vst.msk [vmem:[%s3 + $0x40] sm:$0xf] %vm1490, %v1420
  %1508 = vst.msk [vmem:[%s3 + $0x44] sm:$0xf] %vm1490, %v1421
  %1509 = vst.msk [vmem:[%s3 + $0x48] sm:$0xf] %vm1490, %v1422
  %1510 = vst.msk [vmem:[%s3 + $0x4c] sm:$0xf] %vm1490, %v1423
  %1511 = vst.msk [vmem:[%s3 + $0x50] sm:$0xf] %vm1490, %v1424
  %1512 = vst.msk [vmem:[%s3 + $0x54] sm:$0xf] %vm1490, %v1425
  %1513 = vst.msk [vmem:[%s3 + $0x58] sm:$0xf] %vm1490, %v1426
  %1514 = vst.msk [vmem:[%s3 + $0x5c] sm:$0xf] %vm1490, %v1427
  %1515 = vst.msk [vmem:[%s3 + $0x60] sm:$0xf] %vm1490, %v1428
  %1516 = vst.msk [vmem:[%s3 + $0x64] sm:$0xf] %vm1490, %v1429
  %1517 = vst.msk [vmem:[%s3 + $0x68] sm:$0xf] %vm1490, %v1430
  %1518 = vst.msk [vmem:[%s3 + $0x6c] sm:$0xf] %vm1490, %v1431
  %1519 = vst.msk [vmem:[%s3 + $0x70] sm:$0xf] %vm1490, %v1432
  %1520 = vst.msk [vmem:[%s3 + $0x74] sm:$0xf] %vm1490, %v1433
  %1521 = vst.msk [vmem:[%s3 + $0x78] sm:$0xf] %vm1490, %v1434
  %1522 = vst.msk [vmem:[%s3 + $0x7c] sm:$0xf] %vm1490, %v1435
  %1523 = vst.msk [vmem:[%s3 + $0x80] sm:$0xf] %vm1490, %v1436
  %1524 = vst.msk [vmem:[%s3 + $0x84] sm:$0xf] %vm1490, %v1437
  %1525 = vst.msk [vmem:[%s3 + $0x88] sm:$0xf] %vm1490, %v1438
  %1526 = vst.msk [vmem:[%s3 + $0x8c] sm:$0xf] %vm1490, %v1439
  %1527 = vst.msk [vmem:[%s3 + $0x90] sm:$0xf] %vm1490, %v1440
  %1528 = vst.msk [vmem:[%s3 + $0x94] sm:$0xf] %vm1490, %v1441
  %1529 = vst.msk [vmem:[%s3 + $0x98] sm:$0xf] %vm1490, %v1442
  %1530 = vst.msk [vmem:[%s3 + $0x9c] sm:$0xf] %vm1490, %v1443
  %1531 = vst.msk [vmem:[%s3 + $0xa0] sm:$0xf] %vm1490, %v1444
  %1532 = vst.msk [vmem:[%s3 + $0xa4] sm:$0xf] %vm1490, %v1445
  %vm1533 = vcmask 57344
  %1534 = vst.msk [vmem:[%s3 + $0xa8] sm:$0x1] %vm1533, %v1446
  // Predicated region
  $region14: #{sample_net_b_forward.2} parent=0 // pred_check
    _
  $region15: #{sample_net_b_forward.2} parent=0 // pred_check_branch
    %1536 = sbr.rel (0) target = $region17
  $region16: #{sample_net_b_forward.2} parent=0 // pred_region
    _
  $region17: #{sample_net_b_forward.2} parent=0 // pred_fallthru
    _
  // Predicated region
  $region18: #{sample_net_b_forward.2} parent=0 // pred_check
    _
  $region19: #{sample_net_b_forward.2} parent=0 // pred_check_branch
    %1538 = sbr.rel (0) target = $region21
  $region20: #{sample_net_b_forward.2} parent=0 // pred_region
    _
  $region21: #{sample_net_b_forward.2} parent=0 // pred_fallthru
    _

// kernel: sample_net_b_forward.3
$region0: #{sample_net_b_forward.3}
  #allocation0 [shape = 'u32[]', space=smem, size = 0x4, offset = 0x4, fixed_abs, tag = 'smem constant byte address 0x4 - core index']
  #allocation1 [shape = 'u32[144,128]{1,0:T(1,128)}', space=vmem, size = 0x12000, scoped, tag = 'internal scratch']
  %s0 = inlined_call_operand.vmem [shape: bf16[2,1352], index: 0, kind: input, shape index: {}]
  %s1 = inlined_call_operand.vmem [shape: bf16[1352,320], index: 1, kind: input, shape index: {}]
  %s2 = inlined_call_operand.vmem [shape: f32[1,320], index: 2, kind: input, shape index: {}]
  %s3 = inlined_call_operand.vmem [shape: bf16[320,128], index: 3, kind: input, shape index: {}]
  %s4 = inlined_call_operand.vmem [shape: f32[1,128], index: 4, kind: input, shape index: {}]
  %s5 = inlined_call_operand.hbm [shape: f32[2,10], index: 5, kind: output, shape index: {}]
  %s6 = sld [smem:[#allocation0]]
  $region30: #{sample_net_b_forward.3} parent=0
    _
  %s8 = ssub.s32 1, %s6
  %s9 = scalar_select 0, %s8, %s6
  $region1: #{sample_net_b_forward.3} parent=0
    #allocation2 [shape = 'u8[1024]{0}', space=vmem, size = 0x400, scoped, tag = 'output window, operand 0, single buffered']
    #allocation3 [shape = 's32[1]{0}', space=sflag, size = 0x4, scoped, tag = 'scoped memory for sample_net_b_forward.3']
    %10 = vsyncpa [#allocation3], 0
    // Predicated region
    $region2: #{sample_net_b_forward.3} parent=1 // pred_check
      _
    $region3: #{sample_net_b_forward.3} parent=1 // pred_check_branch
      %12 = sbr.rel (0) target = $region5
    $region4: #{sample_net_b_forward.3} parent=1 // pred_region
      _
    $region5: #{sample_net_b_forward.3} parent=1 // pred_fallthru
      _
    // Predicated region
    $region6: #{sample_net_b_forward.3} parent=1 // pred_check
      _
    $region7: #{sample_net_b_forward.3} parent=1 // pred_check_branch
      %14 = sbr.rel (0) target = $region9
    $region8: #{sample_net_b_forward.3} parent=1 // pred_region
      _
    $region9: #{sample_net_b_forward.3} parent=1 // pred_fallthru
      _
    // Predicated region
    $region10: #{sample_net_b_forward.3} parent=1 // pred_check
      _
    $region11: #{sample_net_b_forward.3} parent=1 // pred_check_branch
      %16 = sbr.rel (0) target = $region13
    $region12: #{sample_net_b_forward.3} parent=1 // pred_region
      _
    $region13: #{sample_net_b_forward.3} parent=1 // pred_fallthru
      _
    // Predicated region
    $region14: #{sample_net_b_forward.3} parent=1 // pred_check
      _
    $region15: #{sample_net_b_forward.3} parent=1 // pred_check_branch
      %18 = sbr.rel (0) target = $region17
    $region16: #{sample_net_b_forward.3} parent=1 // pred_region
      _
    $region17: #{sample_net_b_forward.3} parent=1 // pred_fallthru
      _
    // Predicated region
    $region18: #{sample_net_b_forward.3} parent=1 // pred_check
      _
    $region19: #{sample_net_b_forward.3} parent=1 // pred_check_branch
      %20 = sbr.rel (0) target = $region21
    $region20: #{sample_net_b_forward.3} parent=1 // pred_region
      _
    $region21: #{sample_net_b_forward.3} parent=1 // pred_fallthru
      _
    %v22 = vld [vmem:[%s0] sm:$0xff]
    %v23 = vld [vmem:[%s0 + $0x8] sm:$0x7]
    %v24 = vld [vmem:[%s1] sm:$0xff]
    %v25 = vld [vmem:[%s1 + $0x8] sm:$0xf]
    %v26 = vld [vmem:[%s1 + $0xc] sm:$0xff]
    %v27 = vld [vmem:[%s1 + $0x14] sm:$0xf]
    %v28 = vld [vmem:[%s1 + $0x18] sm:$0xff]
    %v29 = vld [vmem:[%s1 + $0x20] sm:$0xf]
    %v30 = vld [vmem:[%s1 + $0x24] sm:$0xff]
    %v31 = vld [vmem:[%s1 + $0x2c] sm:$0xf]
    %v32 = vld [vmem:[%s1 + $0x30] sm:$0xff]
    %v33 = vld [vmem:[%s1 + $0x38] sm:$0xf]
    %v34 = vld [vmem:[%s1 + $0x3c] sm:$0xff]
    %v35 = vld [vmem:[%s1 + $0x44] sm:$0xf]
    %v36 = vld [vmem:[%s1 + $0x48] sm:$0xff]
    %v37 = vld [vmem:[%s1 + $0x50] sm:$0xf]
    %v38 = vld [vmem:[%s1 + $0x54] sm:$0xff]
    %v39 = vld [vmem:[%s1 + $0x5c] sm:$0xf]
    %v40 = vld [vmem:[%s1 + $0x60] sm:$0xff]
    %v41 = vld [vmem:[%s1 + $0x68] sm:$0xf]
    %v42 = vld [vmem:[%s1 + $0x6c] sm:$0xff]
    %v43 = vld [vmem:[%s1 + $0x74] sm:$0xf]
    %v44 = vld [vmem:[%s1 + $0x78] sm:$0xff]
    %v45 = vld [vmem:[%s1 + $0x80] sm:$0xf]
    %v46 = vld [vmem:[%s1 + $0x84] sm:$0xff]
    %v47 = vld [vmem:[%s1 + $0x8c] sm:$0xf]
    %v48 = vld [vmem:[%s1 + $0x90] sm:$0xff]
    %v49 = vld [vmem:[%s1 + $0x98] sm:$0xf]
    %v50 = vld [vmem:[%s1 + $0x9c] sm:$0xff]
    %v51 = vld [vmem:[%s1 + $0xa4] sm:$0xf]
    %v52 = vld [vmem:[%s1 + $0xa8] sm:$0xff]
    %v53 = vld [vmem:[%s1 + $0xb0] sm:$0xf]
    %v54 = vld [vmem:[%s1 + $0xb4] sm:$0xff]
    %v55 = vld [vmem:[%s1 + $0xbc] sm:$0xf]
    %v56 = vld [vmem:[%s1 + $0xc0] sm:$0xff]
    %v57 = vld [vmem:[%s1 + $0xc8] sm:$0xf]
    %v58 = vld [vmem:[%s1 + $0xcc] sm:$0xff]
    %v59 = vld [vmem:[%s1 + $0xd4] sm:$0xf]
    %v60 = vld [vmem:[%s1 + $0xd8] sm:$0xff]
    %v61 = vld [vmem:[%s1 + $0xe0] sm:$0xf]
    %v62 = vld [vmem:[%s1 + $0xe4] sm:$0xff]
    %v63 = vld [vmem:[%s1 + $0xec] sm:$0xf]
    %v64 = vld [vmem:[%s1 + $0xf0] sm:$0xff]
    %v65 = vld [vmem:[%s1 + $0xf8] sm:$0xf]
    %v66 = vld [vmem:[%s1 + $0xfc] sm:$0xff]
    %v67 = vld [vmem:[%s1 + $0x104] sm:$0xf]
    %v68 = vld [vmem:[%s1 + $0x108] sm:$0xff]
    %v69 = vld [vmem:[%s1 + $0x110] sm:$0xf]
    %v70 = vld [vmem:[%s1 + $0x114] sm:$0xff]
    %v71 = vld [vmem:[%s1 + $0x11c] sm:$0xf]
    %v72 = vld [vmem:[%s1 + $0x120] sm:$0xff]
    %v73 = vld [vmem:[%s1 + $0x128] sm:$0xf]
    %v74 = vld [vmem:[%s1 + $0x12c] sm:$0xff]
    %v75 = vld [vmem:[%s1 + $0x134] sm:$0xf]
    %v76 = vld [vmem:[%s1 + $0x138] sm:$0xff]
    %v77 = vld [vmem:[%s1 + $0x140] sm:$0xf]
    %v78 = vld [vmem:[%s1 + $0x144] sm:$0xff]
    %v79 = vld [vmem:[%s1 + $0x14c] sm:$0xf]
    %v80 = vld [vmem:[%s1 + $0x150] sm:$0xff]
    %v81 = vld [vmem:[%s1 + $0x158] sm:$0xf]
    %v82 = vld [vmem:[%s1 + $0x15c] sm:$0xff]
    %v83 = vld [vmem:[%s1 + $0x164] sm:$0xf]
    %v84 = vld [vmem:[%s1 + $0x168] sm:$0xff]
    %v85 = vld [vmem:[%s1 + $0x170] sm:$0xf]
    %v86 = vld [vmem:[%s1 + $0x174] sm:$0xff]
    %v87 = vld [vmem:[%s1 + $0x17c] sm:$0xf]
    %v88 = vld [vmem:[%s1 + $0x180] sm:$0xff]
    %v89 = vld [vmem:[%s1 + $0x188] sm:$0xf]
    %v90 = vld [vmem:[%s1 + $0x18c] sm:$0xff]
    %v91 = vld [vmem:[%s1 + $0x194] sm:$0xf]
    %v92 = vld [vmem:[%s1 + $0x198] sm:$0xff]
    %v93 = vld [vmem:[%s1 + $0x1a0] sm:$0xf]
    %v94 = vld [vmem:[%s1 + $0x1a4] sm:$0xff]
    %v95 = vld [vmem:[%s1 + $0x1ac] sm:$0xf]
    %v96 = vld [vmem:[%s1 + $0x1b0] sm:$0xff]
    %v97 = vld [vmem:[%s1 + $0x1b8] sm:$0xf]
    %v98 = vld [vmem:[%s1 + $0x1bc] sm:$0xff]
    %v99 = vld [vmem:[%s1 + $0x1c4] sm:$0xf]
    %v100 = vld [vmem:[%s1 + $0x1c8] sm:$0xff]
    %v101 = vld [vmem:[%s1 + $0x1d0] sm:$0xf]
    %v102 = vld [vmem:[%s1 + $0x1d4] sm:$0xff]
    %v103 = vld [vmem:[%s1 + $0x1dc] sm:$0xf]
    %v104 = vld [vmem:[%s1 + $0x1e0] sm:$0xff]
    %v105 = vld [vmem:[%s1 + $0x1e8] sm:$0xf]
    %v106 = vld [vmem:[%s1 + $0x1ec] sm:$0xff]
    %v107 = vld [vmem:[%s1 + $0x1f4] sm:$0xf]
    %v108 = vld [vmem:[%s1 + $0x1f8] sm:$0xff]
    %v109 = vld [vmem:[%s1 + $0x200] sm:$0xf]
    %v110 = vld [vmem:[%s1 + $0x204] sm:$0xff]
    %v111 = vld [vmem:[%s1 + $0x20c] sm:$0xf]
    %v112 = vld [vmem:[%s1 + $0x210] sm:$0xff]
    %v113 = vld [vmem:[%s1 + $0x218] sm:$0xf]
    %v114 = vld [vmem:[%s1 + $0x21c] sm:$0xff]
    %v115 = vld [vmem:[%s1 + $0x224] sm:$0xf]
    %v116 = vld [vmem:[%s1 + $0x228] sm:$0xff]
    %v117 = vld [vmem:[%s1 + $0x230] sm:$0xf]
    %v118 = vld [vmem:[%s1 + $0x234] sm:$0xff]
    %v119 = vld [vmem:[%s1 + $0x23c] sm:$0xf]
    %v120 = vld [vmem:[%s1 + $0x240] sm:$0xff]
    %v121 = vld [vmem:[%s1 + $0x248] sm:$0xf]
    %v122 = vld [vmem:[%s1 + $0x24c] sm:$0xff]
    %v123 = vld [vmem:[%s1 + $0x254] sm:$0xf]
    %v124 = vld [vmem:[%s1 + $0x258] sm:$0xff]
    %v125 = vld [vmem:[%s1 + $0x260] sm:$0xf]
    %v126 = vld [vmem:[%s1 + $0x264] sm:$0xff]
    %v127 = vld [vmem:[%s1 + $0x26c] sm:$0xf]
    %v128 = vld [vmem:[%s1 + $0x270] sm:$0xff]
    %v129 = vld [vmem:[%s1 + $0x278] sm:$0xf]
    %v130 = vld [vmem:[%s1 + $0x27c] sm:$0xff]
    %v131 = vld [vmem:[%s1 + $0x284] sm:$0xf]
    %v132 = vld [vmem:[%s1 + $0x288] sm:$0xff]
    %v133 = vld [vmem:[%s1 + $0x290] sm:$0xf]
    %v134 = vld [vmem:[%s1 + $0x294] sm:$0xff]
    %v135 = vld [vmem:[%s1 + $0x29c] sm:$0xf]
    %v136 = vld [vmem:[%s1 + $0x2a0] sm:$0xff]
    %v137 = vld [vmem:[%s1 + $0x2a8] sm:$0xf]
    %v138 = vld [vmem:[%s1 + $0x2ac] sm:$0xff]
    %v139 = vld [vmem:[%s1 + $0x2b4] sm:$0xf]
    %v140 = vld [vmem:[%s1 + $0x2b8] sm:$0xff]
    %v141 = vld [vmem:[%s1 + $0x2c0] sm:$0xf]
    %v142 = vld [vmem:[%s1 + $0x2c4] sm:$0xff]
    %v143 = vld [vmem:[%s1 + $0x2cc] sm:$0xf]
    %v144 = vld [vmem:[%s1 + $0x2d0] sm:$0xff]
    %v145 = vld [vmem:[%s1 + $0x2d8] sm:$0xf]
    %v146 = vld [vmem:[%s1 + $0x2dc] sm:$0xff]
    %v147 = vld [vmem:[%s1 + $0x2e4] sm:$0xf]
    %v148 = vld [vmem:[%s1 + $0x2e8] sm:$0xff]
    %v149 = vld [vmem:[%s1 + $0x2f0] sm:$0xf]
    %v150 = vld [vmem:[%s1 + $0x2f4] sm:$0xff]
    %v151 = vld [vmem:[%s1 + $0x2fc] sm:$0xf]
    %v152 = vld [vmem:[%s1 + $0x300] sm:$0xff]
    %v153 = vld [vmem:[%s1 + $0x308] sm:$0xf]
    %v154 = vld [vmem:[%s1 + $0x30c] sm:$0xff]
    %v155 = vld [vmem:[%s1 + $0x314] sm:$0xf]
    %v156 = vld [vmem:[%s1 + $0x318] sm:$0xff]
    %v157 = vld [vmem:[%s1 + $0x320] sm:$0xf]
    %v158 = vld [vmem:[%s1 + $0x324] sm:$0xff]
    %v159 = vld [vmem:[%s1 + $0x32c] sm:$0xf]
    %v160 = vld [vmem:[%s1 + $0x330] sm:$0xff]
    %v161 = vld [vmem:[%s1 + $0x338] sm:$0xf]
    %v162 = vld [vmem:[%s1 + $0x33c] sm:$0xff]
    %v163 = vld [vmem:[%s1 + $0x344] sm:$0xf]
    %v164 = vld [vmem:[%s1 + $0x348] sm:$0xff]
    %v165 = vld [vmem:[%s1 + $0x350] sm:$0xf]
    %v166 = vld [vmem:[%s1 + $0x354] sm:$0xff]
    %v167 = vld [vmem:[%s1 + $0x35c] sm:$0xf]
    %v168 = vld [vmem:[%s1 + $0x360] sm:$0xff]
    %v169 = vld [vmem:[%s1 + $0x368] sm:$0xf]
    %v170 = vld [vmem:[%s1 + $0x36c] sm:$0xff]
    %v171 = vld [vmem:[%s1 + $0x374] sm:$0xf]
    %v172 = vld [vmem:[%s1 + $0x378] sm:$0xff]
    %v173 = vld [vmem:[%s1 + $0x380] sm:$0xf]
    %v174 = vld [vmem:[%s1 + $0x384] sm:$0xff]
    %v175 = vld [vmem:[%s1 + $0x38c] sm:$0xf]
    %v176 = vld [vmem:[%s1 + $0x390] sm:$0xff]
    %v177 = vld [vmem:[%s1 + $0x398] sm:$0xf]
    %v178 = vld [vmem:[%s1 + $0x39c] sm:$0xff]
    %v179 = vld [vmem:[%s1 + $0x3a4] sm:$0xf]
    %v180 = vld [vmem:[%s1 + $0x3a8] sm:$0xff]
    %v181 = vld [vmem:[%s1 + $0x3b0] sm:$0xf]
    %v182 = vld [vmem:[%s1 + $0x3b4] sm:$0xff]
    %v183 = vld [vmem:[%s1 + $0x3bc] sm:$0xf]
    %v184 = vld [vmem:[%s1 + $0x3c0] sm:$0xff]
    %v185 = vld [vmem:[%s1 + $0x3c8] sm:$0xf]
    %v186 = vld [vmem:[%s1 + $0x3cc] sm:$0xff]
    %v187 = vld [vmem:[%s1 + $0x3d4] sm:$0xf]
    %v188 = vld [vmem:[%s1 + $0x3d8] sm:$0xff]
    %v189 = vld [vmem:[%s1 + $0x3e0] sm:$0xf]
    %v190 = vld [vmem:[%s1 + $0x3e4] sm:$0xff]
    %v191 = vld [vmem:[%s1 + $0x3ec] sm:$0xf]
    %v192 = vld [vmem:[%s1 + $0x3f0] sm:$0xff]
    %v193 = vld [vmem:[%s1 + $0x3f8] sm:$0xf]
    %v194 = vld [vmem:[%s1 + $0x3fc] sm:$0xff]
    %v195 = vld [vmem:[%s1 + $0x404] sm:$0xf]
    %v196 = vld [vmem:[%s1 + $0x408] sm:$0xff]
    %v197 = vld [vmem:[%s1 + $0x410] sm:$0xf]
    %v198 = vld [vmem:[%s1 + $0x414] sm:$0xff]
    %v199 = vld [vmem:[%s1 + $0x41c] sm:$0xf]
    %v200 = vld [vmem:[%s1 + $0x420] sm:$0xff]
    %v201 = vld [vmem:[%s1 + $0x428] sm:$0xf]
    %v202 = vld [vmem:[%s1 + $0x42c] sm:$0xff]
    %v203 = vld [vmem:[%s1 + $0x434] sm:$0xf]
    %v204 = vld [vmem:[%s1 + $0x438] sm:$0xff]
    %v205 = vld [vmem:[%s1 + $0x440] sm:$0xf]
    %v206 = vld [vmem:[%s1 + $0x444] sm:$0xff]
    %v207 = vld [vmem:[%s1 + $0x44c] sm:$0xf]
    %v208 = vld [vmem:[%s1 + $0x450] sm:$0xff]
    %v209 = vld [vmem:[%s1 + $0x458] sm:$0xf]
    %v210 = vld [vmem:[%s1 + $0x45c] sm:$0xff]
    %v211 = vld [vmem:[%s1 + $0x464] sm:$0xf]
    %v212 = vld [vmem:[%s1 + $0x468] sm:$0xff]
    %v213 = vld [vmem:[%s1 + $0x470] sm:$0xf]
    %v214 = vld [vmem:[%s1 + $0x474] sm:$0xff]
    %v215 = vld [vmem:[%s1 + $0x47c] sm:$0xf]
    %v216 = vld [vmem:[%s1 + $0x480] sm:$0xff]
    %v217 = vld [vmem:[%s1 + $0x488] sm:$0xf]
    %v218 = vld [vmem:[%s1 + $0x48c] sm:$0xff]
    %v219 = vld [vmem:[%s1 + $0x494] sm:$0xf]
    %v220 = vld [vmem:[%s1 + $0x498] sm:$0xff]
    %v221 = vld [vmem:[%s1 + $0x4a0] sm:$0xf]
    %v222 = vld [vmem:[%s1 + $0x4a4] sm:$0xff]
    %v223 = vld [vmem:[%s1 + $0x4ac] sm:$0xf]
    %v224 = vld [vmem:[%s1 + $0x4b0] sm:$0xff]
    %v225 = vld [vmem:[%s1 + $0x4b8] sm:$0xf]
    %v226 = vld [vmem:[%s1 + $0x4bc] sm:$0xff]
    %v227 = vld [vmem:[%s1 + $0x4c4] sm:$0xf]
    %v228 = vld [vmem:[%s1 + $0x4c8] sm:$0xff]
    %v229 = vld [vmem:[%s1 + $0x4d0] sm:$0xf]
    %v230 = vld [vmem:[%s1 + $0x4d4] sm:$0xff]
    %v231 = vld [vmem:[%s1 + $0x4dc] sm:$0xf]
    %v232 = vld [vmem:[%s1 + $0x4e0] sm:$0xff]
    %v233 = vld [vmem:[%s1 + $0x4e8] sm:$0xf]
    %v234 = vld [vmem:[%s1 + $0x4ec] sm:$0xff]
    %v235 = vld [vmem:[%s1 + $0x4f4] sm:$0xf]
    %v236 = vld [vmem:[%s1 + $0x4f8] sm:$0xff]
    %v237 = vld [vmem:[%s1 + $0x500] sm:$0xf]
    %v238 = vld [vmem:[%s1 + $0x504] sm:$0xff]
    %v239 = vld [vmem:[%s1 + $0x50c] sm:$0xf]
    %v240 = vld [vmem:[%s1 + $0x510] sm:$0xff]
    %v241 = vld [vmem:[%s1 + $0x518] sm:$0xf]
    %v242 = vld [vmem:[%s1 + $0x51c] sm:$0xff]
    %v243 = vld [vmem:[%s1 + $0x524] sm:$0xf]
    %v244 = vld [vmem:[%s1 + $0x528] sm:$0xff]
    %v245 = vld [vmem:[%s1 + $0x530] sm:$0xf]
    %v246 = vld [vmem:[%s1 + $0x534] sm:$0xff]
    %v247 = vld [vmem:[%s1 + $0x53c] sm:$0xf]
    %v248 = vld [vmem:[%s1 + $0x540] sm:$0xff]
    %v249 = vld [vmem:[%s1 + $0x548] sm:$0xf]
    %v250 = vld [vmem:[%s1 + $0x54c] sm:$0xff]
    %v251 = vld [vmem:[%s1 + $0x554] sm:$0xf]
    %v252 = vld [vmem:[%s1 + $0x558] sm:$0xff]
    %v253 = vld [vmem:[%s1 + $0x560] sm:$0xf]
    %v254 = vld [vmem:[%s1 + $0x564] sm:$0xff]
    %v255 = vld [vmem:[%s1 + $0x56c] sm:$0xf]
    %v256 = vld [vmem:[%s1 + $0x570] sm:$0xff]
    %v257 = vld [vmem:[%s1 + $0x578] sm:$0xf]
    %v258 = vld [vmem:[%s1 + $0x57c] sm:$0xff]
    %v259 = vld [vmem:[%s1 + $0x584] sm:$0xf]
    %v260 = vld [vmem:[%s1 + $0x588] sm:$0xff]
    %v261 = vld [vmem:[%s1 + $0x590] sm:$0xf]
    %v262 = vld [vmem:[%s1 + $0x594] sm:$0xff]
    %v263 = vld [vmem:[%s1 + $0x59c] sm:$0xf]
    %v264 = vld [vmem:[%s1 + $0x5a0] sm:$0xff]
    %v265 = vld [vmem:[%s1 + $0x5a8] sm:$0xf]
    %v266 = vld [vmem:[%s1 + $0x5ac] sm:$0xff]
    %v267 = vld [vmem:[%s1 + $0x5b4] sm:$0xf]
    %v268 = vld [vmem:[%s1 + $0x5b8] sm:$0xff]
    %v269 = vld [vmem:[%s1 + $0x5c0] sm:$0xf]
    %v270 = vld [vmem:[%s1 + $0x5c4] sm:$0xff]
    %v271 = vld [vmem:[%s1 + $0x5cc] sm:$0xf]
    %v272 = vld [vmem:[%s1 + $0x5d0] sm:$0xff]
    %v273 = vld [vmem:[%s1 + $0x5d8] sm:$0xf]
    %v274 = vld [vmem:[%s1 + $0x5dc] sm:$0xff]
    %v275 = vld [vmem:[%s1 + $0x5e4] sm:$0xf]
    %v276 = vld [vmem:[%s1 + $0x5e8] sm:$0xff]
    %v277 = vld [vmem:[%s1 + $0x5f0] sm:$0xf]
    %v278 = vld [vmem:[%s1 + $0x5f4] sm:$0xff]
    %v279 = vld [vmem:[%s1 + $0x5fc] sm:$0xf]
    %v280 = vld [vmem:[%s1 + $0x600] sm:$0xff]
    %v281 = vld [vmem:[%s1 + $0x608] sm:$0xf]
    %v282 = vld [vmem:[%s1 + $0x60c] sm:$0xff]
    %v283 = vld [vmem:[%s1 + $0x614] sm:$0xf]
    %v284 = vld [vmem:[%s1 + $0x618] sm:$0xff]
    %v285 = vld [vmem:[%s1 + $0x620] sm:$0xf]
    %v286 = vld [vmem:[%s1 + $0x624] sm:$0xff]
    %v287 = vld [vmem:[%s1 + $0x62c] sm:$0xf]
    %v288 = vld [vmem:[%s1 + $0x630] sm:$0xff]
    %v289 = vld [vmem:[%s1 + $0x638] sm:$0xf]
    %v290 = vld [vmem:[%s1 + $0x63c] sm:$0xff]
    %v291 = vld [vmem:[%s1 + $0x644] sm:$0xf]
    %v292 = vld [vmem:[%s1 + $0x648] sm:$0xff]
    %v293 = vld [vmem:[%s1 + $0x650] sm:$0xf]
    %v294 = vld [vmem:[%s1 + $0x654] sm:$0xff]
    %v295 = vld [vmem:[%s1 + $0x65c] sm:$0xf]
    %v296 = vld [vmem:[%s1 + $0x660] sm:$0xff]
    %v297 = vld [vmem:[%s1 + $0x668] sm:$0xf]
    %v298 = vld [vmem:[%s1 + $0x66c] sm:$0xff]
    %v299 = vld [vmem:[%s1 + $0x674] sm:$0xf]
    %v300 = vld [vmem:[%s1 + $0x678] sm:$0xff]
    %v301 = vld [vmem:[%s1 + $0x680] sm:$0xf]
    %v302 = vld [vmem:[%s1 + $0x684] sm:$0xff]
    %v303 = vld [vmem:[%s1 + $0x68c] sm:$0xf]
    %v304 = vld [vmem:[%s1 + $0x690] sm:$0xff]
    %v305 = vld [vmem:[%s1 + $0x698] sm:$0xf]
    %v306 = vld [vmem:[%s1 + $0x69c] sm:$0xff]
    %v307 = vld [vmem:[%s1 + $0x6a4] sm:$0xf]
    %v308 = vld [vmem:[%s1 + $0x6a8] sm:$0xff]
    %v309 = vld [vmem:[%s1 + $0x6b0] sm:$0xf]
    %v310 = vld [vmem:[%s1 + $0x6b4] sm:$0xff]
    %v311 = vld [vmem:[%s1 + $0x6bc] sm:$0xf]
    %v312 = vld [vmem:[%s1 + $0x6c0] sm:$0xff]
    %v313 = vld [vmem:[%s1 + $0x6c8] sm:$0xf]
    %v314 = vld [vmem:[%s1 + $0x6cc] sm:$0xff]
    %v315 = vld [vmem:[%s1 + $0x6d4] sm:$0xf]
    %v316 = vld [vmem:[%s1 + $0x6d8] sm:$0xff]
    %v317 = vld [vmem:[%s1 + $0x6e0] sm:$0xf]
    %v318 = vld [vmem:[%s1 + $0x6e4] sm:$0xff]
    %v319 = vld [vmem:[%s1 + $0x6ec] sm:$0xf]
    %v320 = vld [vmem:[%s1 + $0x6f0] sm:$0xff]
    %v321 = vld [vmem:[%s1 + $0x6f8] sm:$0xf]
    %v322 = vld [vmem:[%s1 + $0x6fc] sm:$0xff]
    %v323 = vld [vmem:[%s1 + $0x704] sm:$0xf]
    %v324 = vld [vmem:[%s1 + $0x708] sm:$0xff]
    %v325 = vld [vmem:[%s1 + $0x710] sm:$0xf]
    %v326 = vld [vmem:[%s1 + $0x714] sm:$0xff]
    %v327 = vld [vmem:[%s1 + $0x71c] sm:$0xf]
    %v328 = vld [vmem:[%s1 + $0x720] sm:$0xff]
    %v329 = vld [vmem:[%s1 + $0x728] sm:$0xf]
    %v330 = vld [vmem:[%s1 + $0x72c] sm:$0xff]
    %v331 = vld [vmem:[%s1 + $0x734] sm:$0xf]
    %v332 = vld [vmem:[%s1 + $0x738] sm:$0xff]
    %v333 = vld [vmem:[%s1 + $0x740] sm:$0xf]
    %v334 = vld [vmem:[%s1 + $0x744] sm:$0xff]
    %v335 = vld [vmem:[%s1 + $0x74c] sm:$0xf]
    %v336 = vld [vmem:[%s1 + $0x750] sm:$0xff]
    %v337 = vld [vmem:[%s1 + $0x758] sm:$0xf]
    %v338 = vld [vmem:[%s1 + $0x75c] sm:$0xff]
    %v339 = vld [vmem:[%s1 + $0x764] sm:$0xf]
    %v340 = vld [vmem:[%s1 + $0x768] sm:$0xff]
    %v341 = vld [vmem:[%s1 + $0x770] sm:$0xf]
    %v342 = vld [vmem:[%s1 + $0x774] sm:$0xff]
    %v343 = vld [vmem:[%s1 + $0x77c] sm:$0xf]
    %v344 = vld [vmem:[%s1 + $0x780] sm:$0xff]
    %v345 = vld [vmem:[%s1 + $0x788] sm:$0xf]
    %v346 = vld [vmem:[%s1 + $0x78c] sm:$0xff]
    %v347 = vld [vmem:[%s1 + $0x794] sm:$0xf]
    %v348 = vld [vmem:[%s1 + $0x798] sm:$0xff]
    %v349 = vld [vmem:[%s1 + $0x7a0] sm:$0xf]
    %v350 = vld [vmem:[%s1 + $0x7a4] sm:$0xff]
    %v351 = vld [vmem:[%s1 + $0x7ac] sm:$0xf]
    %v352 = vld [vmem:[%s1 + $0x7b0] sm:$0xff]
    %v353 = vld [vmem:[%s1 + $0x7b8] sm:$0xf]
    %v354 = vld [vmem:[%s1 + $0x7bc] sm:$0xff]
    %v355 = vld [vmem:[%s1 + $0x7c4] sm:$0xf]
    %v356 = vld [vmem:[%s1 + $0x7c8] sm:$0xff]
    %v357 = vld [vmem:[%s1 + $0x7d0] sm:$0xf]
    %v358 = vld [vmem:[%s1 + $0x7d4] sm:$0xff]
    %v359 = vld [vmem:[%s1 + $0x7dc] sm:$0xf]
    %v360 = vld [vmem:[%s1 + $0x7e0] sm:$0xff]
    %v361 = vld [vmem:[%s1 + $0x7e8] sm:$0xf]
    %v362 = vld [vmem:[%s2] sm:$0x7]
    %v364 = vlaneseq
    %v365 = vshrl.u32 %v364, 7
    %v366 = vsub.s32 0, %v365
    %v367 = vrot.slane %v362, %v366
    %v368 = vlaneseq
    %v369 = vshrl.u32 %v368, 7
    %v370 = vsub.s32 1, %v369
    %v371 = vrot.slane %v362, %v370
    %v372 = vlaneseq
    %v373 = vshrl.u32 %v372, 7
    %v374 = vsub.s32 2, %v373
    %v375 = vrot.slane %v362, %v374
    %v381 = vcombine.high %v22, %v22
    %v383 = vunpack.c.l.s4 1966171168
    %v384 = vunpack.c.0.s8 %v383
    %v385 = vlaneseq
    %v386 = vshrl.u32 %v385, 7
    %v387 = vsub.s32 %v384, %v386
    %v388 = vrot.slane %v22, %v387
    %v390 = vunpack.c.l.s4 1966171168
    %v391 = vunpack.c.0.s8 %v390
    %v392 = vlaneseq
    %v393 = vshrl.u32 %v392, 7
    %v394 = vsub.s32 %v391, %v393
    %v395 = vrot.slane %v381, %v394
    %v396 = vcombine.high %v388, %v388
    %v397 = vcombine.high %v395, %v395
    %v399 = vunpack.c.l.s4 1966171168
    %v400 = vunpack.c.0.s8 %v399
    %v401 = vlaneseq
    %v402 = vshrl.u32 %v401, 7
    %v403 = vsub.s32 %v400, %v402
    %v404 = vrot.slane %v388, %v403
    %v406 = vunpack.c.l.s4 1966171168
    %v407 = vunpack.c.0.s8 %v406
    %v408 = vlaneseq
    %v409 = vshrl.u32 %v408, 7
    %v410 = vsub.s32 %v407, %v409
    %v411 = vrot.slane %v395, %v410
    %v413 = vunpack.c.l.s4 1966171168
    %v414 = vunpack.c.0.s8 %v413
    %v415 = vlaneseq
    %v416 = vshrl.u32 %v415, 7
    %v417 = vsub.s32 %v414, %v416
    %v418 = vrot.slane %v396, %v417
    %v420 = vunpack.c.l.s4 1966171168
    %v421 = vunpack.c.0.s8 %v420
    %v422 = vlaneseq
    %v423 = vshrl.u32 %v422, 7
    %v424 = vsub.s32 %v421, %v423
    %v425 = vrot.slane %v397, %v424
    %v426 = vcombine.high %v404, %v404
    %v427 = vcombine.high %v411, %v411
    %v428 = vcombine.high %v418, %v418
    %v429 = vcombine.high %v425, %v425
    %v431 = vunpack.c.l.s4 1966171168
    %v432 = vunpack.c.0.s8 %v431
    %v433 = vlaneseq
    %v434 = vshrl.u32 %v433, 7
    %v435 = vsub.s32 %v432, %v434
    %v436 = vrot.slane %v23, %v435
    %v437 = vcombine.high %v436, %v436
    %v439 = vunpack.c.l.s4 1966171168
    %v440 = vunpack.c.0.s8 %v439
    %v441 = vlaneseq
    %v442 = vshrl.u32 %v441, 7
    %v443 = vsub.s32 %v440, %v442
    %v444 = vrot.slane %v436, %v443
    %v446 = vunpack.c.l.s4 1966171168
    %v447 = vunpack.c.0.s8 %v446
    %v448 = vlaneseq
    %v449 = vshrl.u32 %v448, 7
    %v450 = vsub.s32 %v447, %v449
    %v451 = vrot.slane %v437, %v450
    %v452 = vcombine.high %v444, %v444
    %v801 = vunpack.c.l.b16 %v24
    %v802 = vunpack.c.h.b16 %v24
    %v803 = vunpack.c.l.b16 %v25
    %v804 = vunpack.c.l.b16 %v26
    %v805 = vunpack.c.h.b16 %v26
    %v806 = vunpack.c.l.b16 %v27
    %v807 = vunpack.c.l.b16 %v28
    %v808 = vunpack.c.h.b16 %v28
    %v809 = vunpack.c.l.b16 %v29
    %v810 = vunpack.c.l.b16 %v30
    %v811 = vunpack.c.h.b16 %v30
    %v812 = vunpack.c.l.b16 %v31
    %v813 = vunpack.c.l.b16 %v32
    %v814 = vunpack.c.h.b16 %v32
    %v815 = vunpack.c.l.b16 %v33
    %v816 = vunpack.c.l.b16 %v34
    %v817 = vunpack.c.h.b16 %v34
    %v818 = vunpack.c.l.b16 %v35
    %v819 = vunpack.c.l.b16 %v36
    %v820 = vunpack.c.h.b16 %v36
    %v821 = vunpack.c.l.b16 %v37
    %v822 = vunpack.c.l.b16 %v38
    %v823 = vunpack.c.h.b16 %v38
    %v824 = vunpack.c.l.b16 %v39
    %v825 = vunpack.c.l.b16 %v40
    %v826 = vunpack.c.h.b16 %v40
    %v827 = vunpack.c.l.b16 %v41
    %v828 = vunpack.c.l.b16 %v42
    %v829 = vunpack.c.h.b16 %v42
    %v830 = vunpack.c.l.b16 %v43
    %v831 = vunpack.c.l.b16 %v44
    %v832 = vunpack.c.h.b16 %v44
    %v833 = vunpack.c.l.b16 %v45
    %v834 = vunpack.c.l.b16 %v46
    %v835 = vunpack.c.h.b16 %v46
    %v836 = vunpack.c.l.b16 %v47
    %v837 = vunpack.c.l.b16 %v48
    %v838 = vunpack.c.h.b16 %v48
    %v839 = vunpack.c.l.b16 %v49
    %v840 = vunpack.c.l.b16 %v50
    %v841 = vunpack.c.h.b16 %v50
    %v842 = vunpack.c.l.b16 %v51
    %v843 = vunpack.c.l.b16 %v52
    %v844 = vunpack.c.h.b16 %v52
    %v845 = vunpack.c.l.b16 %v53
    %v846 = vunpack.c.l.b16 %v54
    %v847 = vunpack.c.h.b16 %v54
    %v848 = vunpack.c.l.b16 %v55
    %v849 = vunpack.c.l.b16 %v56
    %v850 = vunpack.c.h.b16 %v56
    %v851 = vunpack.c.l.b16 %v57
    %v852 = vunpack.c.l.b16 %v58
    %v853 = vunpack.c.h.b16 %v58
    %v854 = vunpack.c.l.b16 %v59
    %v855 = vunpack.c.l.b16 %v60
    %v856 = vunpack.c.h.b16 %v60
    %v857 = vunpack.c.l.b16 %v61
    %v858 = vunpack.c.l.b16 %v62
    %v859 = vunpack.c.h.b16 %v62
    %v860 = vunpack.c.l.b16 %v63
    %v861 = vunpack.c.l.b16 %v64
    %v862 = vunpack.c.h.b16 %v64
    %v863 = vunpack.c.l.b16 %v65
    %v864 = vunpack.c.l.b16 %v66
    %v865 = vunpack.c.h.b16 %v66
    %v866 = vunpack.c.l.b16 %v67
    %v867 = vunpack.c.l.b16 %v68
    %v868 = vunpack.c.h.b16 %v68
    %v869 = vunpack.c.l.b16 %v69
    %v870 = vunpack.c.l.b16 %v70
    %v871 = vunpack.c.h.b16 %v70
    %v872 = vunpack.c.l.b16 %v71
    %v873 = vunpack.c.l.b16 %v72
    %v874 = vunpack.c.h.b16 %v72
    %v875 = vunpack.c.l.b16 %v73
    %v876 = vunpack.c.l.b16 %v74
    %v877 = vunpack.c.h.b16 %v74
    %v878 = vunpack.c.l.b16 %v75
    %v879 = vunpack.c.l.b16 %v76
    %v880 = vunpack.c.h.b16 %v76
    %v881 = vunpack.c.l.b16 %v77
    %v882 = vunpack.c.l.b16 %v78
    %v883 = vunpack.c.h.b16 %v78
    %v884 = vunpack.c.l.b16 %v79
    %v885 = vunpack.c.l.b16 %v80
    %v886 = vunpack.c.h.b16 %v80
    %v887 = vunpack.c.l.b16 %v81
    %v888 = vunpack.c.l.b16 %v82
    %v889 = vunpack.c.h.b16 %v82
    %v890 = vunpack.c.l.b16 %v83
    %v891 = vunpack.c.l.b16 %v84
    %v892 = vunpack.c.h.b16 %v84
    %v893 = vunpack.c.l.b16 %v85
    %v894 = vunpack.c.l.b16 %v86
    %v895 = vunpack.c.h.b16 %v86
    %v896 = vunpack.c.l.b16 %v87
    %v897 = vunpack.c.l.b16 %v88
    %v898 = vunpack.c.h.b16 %v88
    %v899 = vunpack.c.l.b16 %v89
    %v900 = vunpack.c.l.b16 %v90
    %v901 = vunpack.c.h.b16 %v90
    %v902 = vunpack.c.l.b16 %v91
    %v903 = vunpack.c.l.b16 %v92
    %v904 = vunpack.c.h.b16 %v92
    %v905 = vunpack.c.l.b16 %v93
    %v906 = vunpack.c.l.b16 %v94
    %v907 = vunpack.c.h.b16 %v94
    %v908 = vunpack.c.l.b16 %v95
    %v909 = vunpack.c.l.b16 %v96
    %v910 = vunpack.c.h.b16 %v96
    %v911 = vunpack.c.l.b16 %v97
    %v912 = vunpack.c.l.b16 %v98
    %v913 = vunpack.c.h.b16 %v98
    %v914 = vunpack.c.l.b16 %v99
    %v915 = vunpack.c.l.b16 %v100
    %v916 = vunpack.c.h.b16 %v100
    %v917 = vunpack.c.l.b16 %v101
    %v918 = vunpack.c.l.b16 %v102
    %v919 = vunpack.c.h.b16 %v102
    %v920 = vunpack.c.l.b16 %v103
    %v921 = vunpack.c.l.b16 %v104
    %v922 = vunpack.c.h.b16 %v104
    %v923 = vunpack.c.l.b16 %v105
    %v924 = vunpack.c.l.b16 %v106
    %v925 = vunpack.c.h.b16 %v106
    %v926 = vunpack.c.l.b16 %v107
    %v927 = vunpack.c.l.b16 %v108
    %v928 = vunpack.c.h.b16 %v108
    %v929 = vunpack.c.l.b16 %v109
    %v930 = vunpack.c.l.b16 %v110
    %v931 = vunpack.c.h.b16 %v110
    %v932 = vunpack.c.l.b16 %v111
    %v933 = vunpack.c.l.b16 %v112
    %v934 = vunpack.c.h.b16 %v112
    %v935 = vunpack.c.l.b16 %v113
    %v936 = vunpack.c.l.b16 %v114
    %v937 = vunpack.c.h.b16 %v114
    %v938 = vunpack.c.l.b16 %v115
    %v939 = vunpack.c.l.b16 %v116
    %v940 = vunpack.c.h.b16 %v116
    %v941 = vunpack.c.l.b16 %v117
    %v942 = vunpack.c.l.b16 %v118
    %v943 = vunpack.c.h.b16 %v118
    %v944 = vunpack.c.l.b16 %v119
    %v945 = vunpack.c.l.b16 %v120
    %v946 = vunpack.c.h.b16 %v120
    %v947 = vunpack.c.l.b16 %v121
    %v948 = vunpack.c.l.b16 %v122
    %v949 = vunpack.c.h.b16 %v122
    %v950 = vunpack.c.l.b16 %v123
    %v951 = vunpack.c.l.b16 %v124
    %v952 = vunpack.c.h.b16 %v124
    %v953 = vunpack.c.l.b16 %v125
    %v954 = vunpack.c.l.b16 %v126
    %v955 = vunpack.c.h.b16 %v126
    %v956 = vunpack.c.l.b16 %v127
    %v957 = vunpack.c.l.b16 %v128
    %v958 = vunpack.c.h.b16 %v128
    %v959 = vunpack.c.l.b16 %v129
    %v960 = vunpack.c.l.b16 %v130
    %v961 = vunpack.c.h.b16 %v130
    %v962 = vunpack.c.l.b16 %v131
    %v963 = vunpack.c.l.b16 %v132
    %v964 = vunpack.c.h.b16 %v132
    %v965 = vunpack.c.l.b16 %v133
    %v966 = vunpack.c.l.b16 %v134
    %v967 = vunpack.c.h.b16 %v134
    %v968 = vunpack.c.l.b16 %v135
    %v969 = vunpack.c.l.b16 %v136
    %v970 = vunpack.c.h.b16 %v136
    %v971 = vunpack.c.l.b16 %v137
    %v972 = vunpack.c.l.b16 %v138
    %v973 = vunpack.c.h.b16 %v138
    %v974 = vunpack.c.l.b16 %v139
    %v975 = vunpack.c.l.b16 %v140
    %v976 = vunpack.c.h.b16 %v140
    %v977 = vunpack.c.l.b16 %v141
    %v978 = vunpack.c.l.b16 %v142
    %v979 = vunpack.c.h.b16 %v142
    %v980 = vunpack.c.l.b16 %v143
    %v981 = vunpack.c.l.b16 %v144
    %v982 = vunpack.c.h.b16 %v144
    %v983 = vunpack.c.l.b16 %v145
    %v984 = vunpack.c.l.b16 %v146
    %v985 = vunpack.c.h.b16 %v146
    %v986 = vunpack.c.l.b16 %v147
    %v987 = vunpack.c.l.b16 %v148
    %v988 = vunpack.c.h.b16 %v148
    %v989 = vunpack.c.l.b16 %v149
    %v990 = vunpack.c.l.b16 %v150
    %v991 = vunpack.c.h.b16 %v150
    %v992 = vunpack.c.l.b16 %v151
    %v993 = vunpack.c.l.b16 %v152
    %v994 = vunpack.c.h.b16 %v152
    %v995 = vunpack.c.l.b16 %v153
    %v996 = vunpack.c.l.b16 %v154
    %v997 = vunpack.c.h.b16 %v154
    %v998 = vunpack.c.l.b16 %v155
    %v999 = vunpack.c.l.b16 %v156
    %v1000 = vunpack.c.h.b16 %v156
    %v1001 = vunpack.c.l.b16 %v157
    %v1002 = vunpack.c.l.b16 %v158
    %v1003 = vunpack.c.h.b16 %v158
    %v1004 = vunpack.c.l.b16 %v159
    %v1005 = vunpack.c.l.b16 %v160
    %v1006 = vunpack.c.h.b16 %v160
    %v1007 = vunpack.c.l.b16 %v161
    %v1008 = vunpack.c.l.b16 %v162
    %v1009 = vunpack.c.h.b16 %v162
    %v1010 = vunpack.c.l.b16 %v163
    %v1011 = vunpack.c.l.b16 %v164
    %v1012 = vunpack.c.h.b16 %v164
    %v1013 = vunpack.c.l.b16 %v165
    %v1014 = vunpack.c.l.b16 %v166
    %v1015 = vunpack.c.h.b16 %v166
    %v1016 = vunpack.c.l.b16 %v167
    %v1017 = vunpack.c.l.b16 %v168
    %v1018 = vunpack.c.h.b16 %v168
    %v1019 = vunpack.c.l.b16 %v169
    %v1020 = vunpack.c.l.b16 %v170
    %v1021 = vunpack.c.h.b16 %v170
    %v1022 = vunpack.c.l.b16 %v171
    %v1023 = vunpack.c.l.b16 %v172
    %v1024 = vunpack.c.h.b16 %v172
    %v1025 = vunpack.c.l.b16 %v173
    %v1026 = vunpack.c.l.b16 %v174
    %v1027 = vunpack.c.h.b16 %v174
    %v1028 = vunpack.c.l.b16 %v175
    %v1029 = vunpack.c.l.b16 %v176
    %v1030 = vunpack.c.h.b16 %v176
    %v1031 = vunpack.c.l.b16 %v177
    %v1032 = vunpack.c.l.b16 %v178
    %v1033 = vunpack.c.h.b16 %v178
    %v1034 = vunpack.c.l.b16 %v179
    %v1035 = vunpack.c.l.b16 %v180
    %v1036 = vunpack.c.h.b16 %v180
    %v1037 = vunpack.c.l.b16 %v181
    %v1038 = vunpack.c.l.b16 %v182
    %v1039 = vunpack.c.h.b16 %v182
    %v1040 = vunpack.c.l.b16 %v183
    %v1041 = vunpack.c.l.b16 %v184
    %v1042 = vunpack.c.h.b16 %v184
    %v1043 = vunpack.c.l.b16 %v185
    %v1044 = vunpack.c.l.b16 %v186
    %v1045 = vunpack.c.h.b16 %v186
    %v1046 = vunpack.c.l.b16 %v187
    %v1047 = vunpack.c.l.b16 %v188
    %v1048 = vunpack.c.h.b16 %v188
    %v1049 = vunpack.c.l.b16 %v189
    %v1050 = vunpack.c.l.b16 %v190
    %v1051 = vunpack.c.h.b16 %v190
    %v1052 = vunpack.c.l.b16 %v191
    %v1053 = vunpack.c.l.b16 %v192
    %v1054 = vunpack.c.h.b16 %v192
    %v1055 = vunpack.c.l.b16 %v193
    %v1056 = vunpack.c.l.b16 %v194
    %v1057 = vunpack.c.h.b16 %v194
    %v1058 = vunpack.c.l.b16 %v195
    %v1059 = vunpack.c.l.b16 %v196
    %v1060 = vunpack.c.h.b16 %v196
    %v1061 = vunpack.c.l.b16 %v197
    %v1062 = vunpack.c.l.b16 %v198
    %v1063 = vunpack.c.h.b16 %v198
    %v1064 = vunpack.c.l.b16 %v199
    %v1065 = vunpack.c.l.b16 %v200
    %v1066 = vunpack.c.h.b16 %v200
    %v1067 = vunpack.c.l.b16 %v201
    %v1068 = vunpack.c.l.b16 %v202
    %v1069 = vunpack.c.h.b16 %v202
    %v1070 = vunpack.c.l.b16 %v203
    %v1071 = vunpack.c.l.b16 %v204
    %v1072 = vunpack.c.h.b16 %v204
    %v1073 = vunpack.c.l.b16 %v205
    %v1074 = vunpack.c.l.b16 %v206
    %v1075 = vunpack.c.h.b16 %v206
    %v1076 = vunpack.c.l.b16 %v207
    %v1077 = vunpack.c.l.b16 %v208
    %v1078 = vunpack.c.h.b16 %v208
    %v1079 = vunpack.c.l.b16 %v209
    %v1080 = vunpack.c.l.b16 %v210
    %v1081 = vunpack.c.h.b16 %v210
    %v1082 = vunpack.c.l.b16 %v211
    %v1083 = vunpack.c.l.b16 %v212
    %v1084 = vunpack.c.h.b16 %v212
    %v1085 = vunpack.c.l.b16 %v213
    %v1086 = vunpack.c.l.b16 %v214
    %v1087 = vunpack.c.h.b16 %v214
    %v1088 = vunpack.c.l.b16 %v215
    %v1089 = vunpack.c.l.b16 %v216
    %v1090 = vunpack.c.h.b16 %v216
    %v1091 = vunpack.c.l.b16 %v217
    %v1092 = vunpack.c.l.b16 %v218
    %v1093 = vunpack.c.h.b16 %v218
    %v1094 = vunpack.c.l.b16 %v219
    %v1095 = vunpack.c.l.b16 %v220
    %v1096 = vunpack.c.h.b16 %v220
    %v1097 = vunpack.c.l.b16 %v221
    %v1098 = vunpack.c.l.b16 %v222
    %v1099 = vunpack.c.h.b16 %v222
    %v1100 = vunpack.c.l.b16 %v223
    %v1101 = vunpack.c.l.b16 %v224
    %v1102 = vunpack.c.h.b16 %v224
    %v1103 = vunpack.c.l.b16 %v225
    %v1104 = vunpack.c.l.b16 %v226
    %v1105 = vunpack.c.h.b16 %v226
    %v1106 = vunpack.c.l.b16 %v227
    %v1107 = vunpack.c.l.b16 %v228
    %v1108 = vunpack.c.h.b16 %v228
    %v1109 = vunpack.c.l.b16 %v229
    %v1110 = vunpack.c.l.b16 %v230
    %v1111 = vunpack.c.h.b16 %v230
    %v1112 = vunpack.c.l.b16 %v231
    %v1113 = vunpack.c.l.b16 %v232
    %v1114 = vunpack.c.h.b16 %v232
    %v1115 = vunpack.c.l.b16 %v233
    %v1116 = vunpack.c.l.b16 %v234
    %v1117 = vunpack.c.h.b16 %v234
    %v1118 = vunpack.c.l.b16 %v235
    %v1119 = vunpack.c.l.b16 %v236
    %v1120 = vunpack.c.h.b16 %v236
    %v1121 = vunpack.c.l.b16 %v237
    %v1122 = vunpack.c.l.b16 %v238
    %v1123 = vunpack.c.h.b16 %v238
    %v1124 = vunpack.c.l.b16 %v239
    %v1125 = vunpack.c.l.b16 %v240
    %v1126 = vunpack.c.h.b16 %v240
    %v1127 = vunpack.c.l.b16 %v241
    %v1128 = vunpack.c.l.b16 %v242
    %v1129 = vunpack.c.h.b16 %v242
    %v1130 = vunpack.c.l.b16 %v243
    %v1131 = vunpack.c.l.b16 %v244
    %v1132 = vunpack.c.h.b16 %v244
    %v1133 = vunpack.c.l.b16 %v245
    %v1134 = vunpack.c.l.b16 %v246
    %v1135 = vunpack.c.h.b16 %v246
    %v1136 = vunpack.c.l.b16 %v247
    %v1137 = vunpack.c.l.b16 %v248
    %v1138 = vunpack.c.h.b16 %v248
    %v1139 = vunpack.c.l.b16 %v249
    %v1140 = vunpack.c.l.b16 %v250
    %v1141 = vunpack.c.h.b16 %v250
    %v1142 = vunpack.c.l.b16 %v251
    %v1143 = vunpack.c.l.b16 %v252
    %v1144 = vunpack.c.h.b16 %v252
    %v1145 = vunpack.c.l.b16 %v253
    %v1146 = vunpack.c.l.b16 %v254
    %v1147 = vunpack.c.h.b16 %v254
    %v1148 = vunpack.c.l.b16 %v255
    %v1149 = vunpack.c.l.b16 %v256
    %v1150 = vunpack.c.h.b16 %v256
    %v1151 = vunpack.c.l.b16 %v257
    %v1152 = vunpack.c.l.b16 %v258
    %v1153 = vunpack.c.h.b16 %v258
    %v1154 = vunpack.c.l.b16 %v259
    %v1155 = vunpack.c.l.b16 %v260
    %v1156 = vunpack.c.h.b16 %v260
    %v1157 = vunpack.c.l.b16 %v261
    %v1158 = vunpack.c.l.b16 %v262
    %v1159 = vunpack.c.h.b16 %v262
    %v1160 = vunpack.c.l.b16 %v263
    %v1161 = vunpack.c.l.b16 %v264
    %v1162 = vunpack.c.h.b16 %v264
    %v1163 = vunpack.c.l.b16 %v265
    %v1164 = vunpack.c.l.b16 %v266
    %v1165 = vunpack.c.h.b16 %v266
    %v1166 = vunpack.c.l.b16 %v267
    %v1167 = vunpack.c.l.b16 %v268
    %v1168 = vunpack.c.h.b16 %v268
    %v1169 = vunpack.c.l.b16 %v269
    %v1170 = vunpack.c.l.b16 %v270
    %v1171 = vunpack.c.h.b16 %v270
    %v1172 = vunpack.c.l.b16 %v271
    %v1173 = vunpack.c.l.b16 %v272
    %v1174 = vunpack.c.h.b16 %v272
    %v1175 = vunpack.c.l.b16 %v273
    %v1176 = vunpack.c.l.b16 %v274
    %v1177 = vunpack.c.h.b16 %v274
    %v1178 = vunpack.c.l.b16 %v275
    %v1179 = vunpack.c.l.b16 %v276
    %v1180 = vunpack.c.h.b16 %v276
    %v1181 = vunpack.c.l.b16 %v277
    %v1182 = vunpack.c.l.b16 %v278
    %v1183 = vunpack.c.h.b16 %v278
    %v1184 = vunpack.c.l.b16 %v279
    %v1185 = vunpack.c.l.b16 %v280
    %v1186 = vunpack.c.h.b16 %v280
    %v1187 = vunpack.c.l.b16 %v281
    %v1188 = vunpack.c.l.b16 %v282
    %v1189 = vunpack.c.h.b16 %v282
    %v1190 = vunpack.c.l.b16 %v283
    %v1191 = vunpack.c.l.b16 %v284
    %v1192 = vunpack.c.h.b16 %v284
    %v1193 = vunpack.c.l.b16 %v285
    %v1194 = vunpack.c.l.b16 %v286
    %v1195 = vunpack.c.h.b16 %v286
    %v1196 = vunpack.c.l.b16 %v287
    %v1197 = vunpack.c.l.b16 %v288
    %v1198 = vunpack.c.h.b16 %v288
    %v1199 = vunpack.c.l.b16 %v289
    %v1200 = vunpack.c.l.b16 %v290
    %v1201 = vunpack.c.h.b16 %v290
    %v1202 = vunpack.c.l.b16 %v291
    %v1203 = vunpack.c.l.b16 %v292
    %v1204 = vunpack.c.h.b16 %v292
    %v1205 = vunpack.c.l.b16 %v293
    %v1206 = vunpack.c.l.b16 %v294
    %v1207 = vunpack.c.h.b16 %v294
    %v1208 = vunpack.c.l.b16 %v295
    %v1209 = vunpack.c.l.b16 %v296
    %v1210 = vunpack.c.h.b16 %v296
    %v1211 = vunpack.c.l.b16 %v297
    %v1212 = vunpack.c.l.b16 %v298
    %v1213 = vunpack.c.h.b16 %v298
    %v1214 = vunpack.c.l.b16 %v299
    %v1215 = vunpack.c.l.b16 %v300
    %v1216 = vunpack.c.h.b16 %v300
    %v1217 = vunpack.c.l.b16 %v301
    %v1218 = vunpack.c.l.b16 %v302
    %v1219 = vunpack.c.h.b16 %v302
    %v1220 = vunpack.c.l.b16 %v303
    %v1221 = vunpack.c.l.b16 %v304
    %v1222 = vunpack.c.h.b16 %v304
    %v1223 = vunpack.c.l.b16 %v305
    %v1224 = vunpack.c.l.b16 %v306
    %v1225 = vunpack.c.h.b16 %v306
    %v1226 = vunpack.c.l.b16 %v307
    %v1227 = vunpack.c.l.b16 %v308
    %v1228 = vunpack.c.h.b16 %v308
    %v1229 = vunpack.c.l.b16 %v309
    %v1230 = vunpack.c.l.b16 %v310
    %v1231 = vunpack.c.h.b16 %v310
    %v1232 = vunpack.c.l.b16 %v311
    %v1233 = vunpack.c.l.b16 %v312
    %v1234 = vunpack.c.h.b16 %v312
    %v1235 = vunpack.c.l.b16 %v313
    %v1236 = vunpack.c.l.b16 %v314
    %v1237 = vunpack.c.h.b16 %v314
    %v1238 = vunpack.c.l.b16 %v315
    %v1239 = vunpack.c.l.b16 %v316
    %v1240 = vunpack.c.h.b16 %v316
    %v1241 = vunpack.c.l.b16 %v317
    %v1242 = vunpack.c.l.b16 %v318
    %v1243 = vunpack.c.h.b16 %v318
    %v1244 = vunpack.c.l.b16 %v319
    %v1245 = vunpack.c.l.b16 %v320
    %v1246 = vunpack.c.h.b16 %v320
    %v1247 = vunpack.c.l.b16 %v321
    %v1248 = vunpack.c.l.b16 %v322
    %v1249 = vunpack.c.h.b16 %v322
    %v1250 = vunpack.c.l.b16 %v323
    %v1251 = vunpack.c.l.b16 %v324
    %v1252 = vunpack.c.h.b16 %v324
    %v1253 = vunpack.c.l.b16 %v325
    %v1254 = vunpack.c.l.b16 %v326
    %v1255 = vunpack.c.h.b16 %v326
    %v1256 = vunpack.c.l.b16 %v327
    %v1257 = vunpack.c.l.b16 %v328
    %v1258 = vunpack.c.h.b16 %v328
    %v1259 = vunpack.c.l.b16 %v329
    %v1260 = vunpack.c.l.b16 %v330
    %v1261 = vunpack.c.h.b16 %v330
    %v1262 = vunpack.c.l.b16 %v331
    %v1263 = vunpack.c.l.b16 %v332
    %v1264 = vunpack.c.h.b16 %v332
    %v1265 = vunpack.c.l.b16 %v333
    %v1266 = vunpack.c.l.b16 %v334
    %v1267 = vunpack.c.h.b16 %v334
    %v1268 = vunpack.c.l.b16 %v335
    %v1269 = vunpack.c.l.b16 %v336
    %v1270 = vunpack.c.h.b16 %v336
    %v1271 = vunpack.c.l.b16 %v337
    %v1272 = vunpack.c.l.b16 %v338
    %v1273 = vunpack.c.h.b16 %v338
    %v1274 = vunpack.c.l.b16 %v339
    %v1275 = vunpack.c.l.b16 %v340
    %v1276 = vunpack.c.h.b16 %v340
    %v1277 = vunpack.c.l.b16 %v341
    %v1278 = vunpack.c.l.b16 %v342
    %v1279 = vunpack.c.h.b16 %v342
    %v1280 = vunpack.c.l.b16 %v343
    %v1281 = vunpack.c.l.b16 %v344
    %v1282 = vunpack.c.h.b16 %v344
    %v1283 = vunpack.c.l.b16 %v345
    %v1284 = vunpack.c.l.b16 %v346
    %v1285 = vunpack.c.h.b16 %v346
    %v1286 = vunpack.c.l.b16 %v347
    %v1287 = vunpack.c.l.b16 %v348
    %v1288 = vunpack.c.h.b16 %v348
    %v1289 = vunpack.c.l.b16 %v349
    %v1290 = vunpack.c.l.b16 %v350
    %v1291 = vunpack.c.h.b16 %v350
    %v1292 = vunpack.c.l.b16 %v351
    %v1293 = vunpack.c.l.b16 %v352
    %v1294 = vunpack.c.h.b16 %v352
    %v1295 = vunpack.c.l.b16 %v353
    %v1296 = vunpack.c.l.b16 %v354
    %v1297 = vunpack.c.h.b16 %v354
    %v1298 = vunpack.c.l.b16 %v355
    %v1299 = vunpack.c.l.b16 %v356
    %v1300 = vunpack.c.h.b16 %v356
    %v1301 = vunpack.c.l.b16 %v357
    %v1302 = vunpack.c.l.b16 %v358
    %v1303 = vunpack.c.h.b16 %v358
    %v1304 = vunpack.c.l.b16 %v359
    %v1305 = vunpack.c.l.b16 %v360
    %v1306 = vunpack.c.h.b16 %v360
    %v1307 = vunpack.c.l.b16 %v361
    %v1308 = vpack.c.b16 %v804, %v801
    %v1309 = vpack.c.b16 %v805, %v802
    %v1310 = vpack.c.b16 %v806, %v803
    %v1311 = vpack.c.b16 %v810, %v807
    %v1312 = vpack.c.b16 %v811, %v808
    %v1313 = vpack.c.b16 %v812, %v809
    %v1314 = vpack.c.b16 %v816, %v813
    %v1315 = vpack.c.b16 %v817, %v814
    %v1316 = vpack.c.b16 %v818, %v815
    %v1317 = vpack.c.b16 %v822, %v819
    %v1318 = vpack.c.b16 %v823, %v820
    %v1319 = vpack.c.b16 %v824, %v821
    %v1320 = vpack.c.b16 %v828, %v825
    %v1321 = vpack.c.b16 %v829, %v826
    %v1322 = vpack.c.b16 %v830, %v827
    %v1323 = vpack.c.b16 %v834, %v831
    %v1324 = vpack.c.b16 %v835, %v832
    %v1325 = vpack.c.b16 %v836, %v833
    %v1326 = vpack.c.b16 %v840, %v837
    %v1327 = vpack.c.b16 %v841, %v838
    %v1328 = vpack.c.b16 %v842, %v839
    %v1329 = vpack.c.b16 %v846, %v843
    %v1330 = vpack.c.b16 %v847, %v844
    %v1331 = vpack.c.b16 %v848, %v845
    %v1332 = vpack.c.b16 %v852, %v849
    %v1333 = vpack.c.b16 %v853, %v850
    %v1334 = vpack.c.b16 %v854, %v851
    %v1335 = vpack.c.b16 %v858, %v855
    %v1336 = vpack.c.b16 %v859, %v856
    %v1337 = vpack.c.b16 %v860, %v857
    %v1338 = vpack.c.b16 %v864, %v861
    %v1339 = vpack.c.b16 %v865, %v862
    %v1340 = vpack.c.b16 %v866, %v863
    %v1341 = vpack.c.b16 %v870, %v867
    %v1342 = vpack.c.b16 %v871, %v868
    %v1343 = vpack.c.b16 %v872, %v869
    %v1344 = vpack.c.b16 %v876, %v873
    %v1345 = vpack.c.b16 %v877, %v874
    %v1346 = vpack.c.b16 %v878, %v875
    %v1347 = vpack.c.b16 %v882, %v879
    %v1348 = vpack.c.b16 %v883, %v880
    %v1349 = vpack.c.b16 %v884, %v881
    %v1350 = vpack.c.b16 %v888, %v885
    %v1351 = vpack.c.b16 %v889, %v886
    %v1352 = vpack.c.b16 %v890, %v887
    %v1353 = vpack.c.b16 %v894, %v891
    %v1354 = vpack.c.b16 %v895, %v892
    %v1355 = vpack.c.b16 %v896, %v893
    %v1356 = vpack.c.b16 %v900, %v897
    %v1357 = vpack.c.b16 %v901, %v898
    %v1358 = vpack.c.b16 %v902, %v899
    %v1359 = vpack.c.b16 %v906, %v903
    %v1360 = vpack.c.b16 %v907, %v904
    %v1361 = vpack.c.b16 %v908, %v905
    %v1362 = vpack.c.b16 %v912, %v909
    %v1363 = vpack.c.b16 %v913, %v910
    %v1364 = vpack.c.b16 %v914, %v911
    %v1365 = vpack.c.b16 %v918, %v915
    %v1366 = vpack.c.b16 %v919, %v916
    %v1367 = vpack.c.b16 %v920, %v917
    %v1368 = vpack.c.b16 %v924, %v921
    %v1369 = vpack.c.b16 %v925, %v922
    %v1370 = vpack.c.b16 %v926, %v923
    %v1371 = vpack.c.b16 %v930, %v927
    %v1372 = vpack.c.b16 %v931, %v928
    %v1373 = vpack.c.b16 %v932, %v929
    %v1374 = vpack.c.b16 %v936, %v933
    %v1375 = vpack.c.b16 %v937, %v934
    %v1376 = vpack.c.b16 %v938, %v935
    %v1377 = vpack.c.b16 %v942, %v939
    %v1378 = vpack.c.b16 %v943, %v940
    %v1379 = vpack.c.b16 %v944, %v941
    %v1380 = vpack.c.b16 %v948, %v945
    %v1381 = vpack.c.b16 %v949, %v946
    %v1382 = vpack.c.b16 %v950, %v947
    %v1383 = vpack.c.b16 %v954, %v951
    %v1384 = vpack.c.b16 %v955, %v952
    %v1385 = vpack.c.b16 %v956, %v953
    %v1386 = vpack.c.b16 %v960, %v957
    %v1387 = vpack.c.b16 %v961, %v958
    %v1388 = vpack.c.b16 %v962, %v959
    %v1389 = vpack.c.b16 %v966, %v963
    %v1390 = vpack.c.b16 %v967, %v964
    %v1391 = vpack.c.b16 %v968, %v965
    %v1392 = vpack.c.b16 %v972, %v969
    %v1393 = vpack.c.b16 %v973, %v970
    %v1394 = vpack.c.b16 %v974, %v971
    %v1395 = vpack.c.b16 %v978, %v975
    %v1396 = vpack.c.b16 %v979, %v976
    %v1397 = vpack.c.b16 %v980, %v977
    %v1398 = vpack.c.b16 %v984, %v981
    %v1399 = vpack.c.b16 %v985, %v982
    %v1400 = vpack.c.b16 %v986, %v983
    %v1401 = vpack.c.b16 %v990, %v987
    %v1402 = vpack.c.b16 %v991, %v988
    %v1403 = vpack.c.b16 %v992, %v989
    %v1404 = vpack.c.b16 %v996, %v993
    %v1405 = vpack.c.b16 %v997, %v994
    %v1406 = vpack.c.b16 %v998, %v995
    %v1407 = vpack.c.b16 %v1002, %v999
    %v1408 = vpack.c.b16 %v1003, %v1000
    %v1409 = vpack.c.b16 %v1004, %v1001
    %v1410 = vpack.c.b16 %v1008, %v1005
    %v1411 = vpack.c.b16 %v1009, %v1006
    %v1412 = vpack.c.b16 %v1010, %v1007
    %v1413 = vpack.c.b16 %v1014, %v1011
    %v1414 = vpack.c.b16 %v1015, %v1012
    %v1415 = vpack.c.b16 %v1016, %v1013
    %v1416 = vpack.c.b16 %v1020, %v1017
    %v1417 = vpack.c.b16 %v1021, %v1018
    %v1418 = vpack.c.b16 %v1022, %v1019
    %v1419 = vpack.c.b16 %v1026, %v1023
    %v1420 = vpack.c.b16 %v1027, %v1024
    %v1421 = vpack.c.b16 %v1028, %v1025
    %v1422 = vpack.c.b16 %v1032, %v1029
    %v1423 = vpack.c.b16 %v1033, %v1030
    %v1424 = vpack.c.b16 %v1034, %v1031
    %v1425 = vpack.c.b16 %v1038, %v1035
    %v1426 = vpack.c.b16 %v1039, %v1036
    %v1427 = vpack.c.b16 %v1040, %v1037
    %v1428 = vpack.c.b16 %v1044, %v1041
    %v1429 = vpack.c.b16 %v1045, %v1042
    %v1430 = vpack.c.b16 %v1046, %v1043
    %v1431 = vpack.c.b16 %v1050, %v1047
    %v1432 = vpack.c.b16 %v1051, %v1048
    %v1433 = vpack.c.b16 %v1052, %v1049
    %v1434 = vpack.c.b16 %v1056, %v1053
    %v1435 = vpack.c.b16 %v1057, %v1054
    %v1436 = vpack.c.b16 %v1058, %v1055
    %v1437 = vpack.c.b16 %v1062, %v1059
    %v1438 = vpack.c.b16 %v1063, %v1060
    %v1439 = vpack.c.b16 %v1064, %v1061
    %v1440 = vpack.c.b16 %v1068, %v1065
    %v1441 = vpack.c.b16 %v1069, %v1066
    %v1442 = vpack.c.b16 %v1070, %v1067
    %v1443 = vpack.c.b16 %v1074, %v1071
    %v1444 = vpack.c.b16 %v1075, %v1072
    %v1445 = vpack.c.b16 %v1076, %v1073
    %v1446 = vpack.c.b16 %v1080, %v1077
    %v1447 = vpack.c.b16 %v1081, %v1078
    %v1448 = vpack.c.b16 %v1082, %v1079
    %v1449 = vpack.c.b16 %v1086, %v1083
    %v1450 = vpack.c.b16 %v1087, %v1084
    %v1451 = vpack.c.b16 %v1088, %v1085
    %v1452 = vpack.c.b16 %v1092, %v1089
    %v1453 = vpack.c.b16 %v1093, %v1090
    %v1454 = vpack.c.b16 %v1094, %v1091
    %v1455 = vpack.c.b16 %v1098, %v1095
    %v1456 = vpack.c.b16 %v1099, %v1096
    %v1457 = vpack.c.b16 %v1100, %v1097
    %v1458 = vpack.c.b16 %v1104, %v1101
    %v1459 = vpack.c.b16 %v1105, %v1102
    %v1460 = vpack.c.b16 %v1106, %v1103
    %v1461 = vpack.c.b16 %v1110, %v1107
    %v1462 = vpack.c.b16 %v1111, %v1108
    %v1463 = vpack.c.b16 %v1112, %v1109
    %v1464 = vpack.c.b16 %v1116, %v1113
    %v1465 = vpack.c.b16 %v1117, %v1114
    %v1466 = vpack.c.b16 %v1118, %v1115
    %v1467 = vpack.c.b16 %v1122, %v1119
    %v1468 = vpack.c.b16 %v1123, %v1120
    %v1469 = vpack.c.b16 %v1124, %v1121
    %v1470 = vpack.c.b16 %v1128, %v1125
    %v1471 = vpack.c.b16 %v1129, %v1126
    %v1472 = vpack.c.b16 %v1130, %v1127
    %v1473 = vpack.c.b16 %v1134, %v1131
    %v1474 = vpack.c.b16 %v1135, %v1132
    %v1475 = vpack.c.b16 %v1136, %v1133
    %v1476 = vpack.c.b16 %v1140, %v1137
    %v1477 = vpack.c.b16 %v1141, %v1138
    %v1478 = vpack.c.b16 %v1142, %v1139
    %v1479 = vpack.c.b16 %v1146, %v1143
    %v1480 = vpack.c.b16 %v1147, %v1144
    %v1481 = vpack.c.b16 %v1148, %v1145
    %v1482 = vpack.c.b16 %v1152, %v1149
    %v1483 = vpack.c.b16 %v1153, %v1150
    %v1484 = vpack.c.b16 %v1154, %v1151
    %v1485 = vpack.c.b16 %v1158, %v1155
    %v1486 = vpack.c.b16 %v1159, %v1156
    %v1487 = vpack.c.b16 %v1160, %v1157
    %v1488 = vpack.c.b16 %v1164, %v1161
    %v1489 = vpack.c.b16 %v1165, %v1162
    %v1490 = vpack.c.b16 %v1166, %v1163
    %v1491 = vpack.c.b16 %v1170, %v1167
    %v1492 = vpack.c.b16 %v1171, %v1168
    %v1493 = vpack.c.b16 %v1172, %v1169
    %v1494 = vpack.c.b16 %v1176, %v1173
    %v1495 = vpack.c.b16 %v1177, %v1174
    %v1496 = vpack.c.b16 %v1178, %v1175
    %v1497 = vpack.c.b16 %v1182, %v1179
    %v1498 = vpack.c.b16 %v1183, %v1180
    %v1499 = vpack.c.b16 %v1184, %v1181
    %v1500 = vpack.c.b16 %v1188, %v1185
    %v1501 = vpack.c.b16 %v1189, %v1186
    %v1502 = vpack.c.b16 %v1190, %v1187
    %v1503 = vpack.c.b16 %v1194, %v1191
    %v1504 = vpack.c.b16 %v1195, %v1192
    %v1505 = vpack.c.b16 %v1196, %v1193
    %v1506 = vpack.c.b16 %v1200, %v1197
    %v1507 = vpack.c.b16 %v1201, %v1198
    %v1508 = vpack.c.b16 %v1202, %v1199
    %v1509 = vpack.c.b16 %v1206, %v1203
    %v1510 = vpack.c.b16 %v1207, %v1204
    %v1511 = vpack.c.b16 %v1208, %v1205
    %v1512 = vpack.c.b16 %v1212, %v1209
    %v1513 = vpack.c.b16 %v1213, %v1210
    %v1514 = vpack.c.b16 %v1214, %v1211
    %v1515 = vpack.c.b16 %v1218, %v1215
    %v1516 = vpack.c.b16 %v1219, %v1216
    %v1517 = vpack.c.b16 %v1220, %v1217
    %v1518 = vpack.c.b16 %v1224, %v1221
    %v1519 = vpack.c.b16 %v1225, %v1222
    %v1520 = vpack.c.b16 %v1226, %v1223
    %v1521 = vpack.c.b16 %v1230, %v1227
    %v1522 = vpack.c.b16 %v1231, %v1228
    %v1523 = vpack.c.b16 %v1232, %v1229
    %v1524 = vpack.c.b16 %v1236, %v1233
    %v1525 = vpack.c.b16 %v1237, %v1234
    %v1526 = vpack.c.b16 %v1238, %v1235
    %v1527 = vpack.c.b16 %v1242, %v1239
    %v1528 = vpack.c.b16 %v1243, %v1240
    %v1529 = vpack.c.b16 %v1244, %v1241
    %v1530 = vpack.c.b16 %v1248, %v1245
    %v1531 = vpack.c.b16 %v1249, %v1246
    %v1532 = vpack.c.b16 %v1250, %v1247
    %v1533 = vpack.c.b16 %v1254, %v1251
    %v1534 = vpack.c.b16 %v1255, %v1252
    %v1535 = vpack.c.b16 %v1256, %v1253
    %v1536 = vpack.c.b16 %v1260, %v1257
    %v1537 = vpack.c.b16 %v1261, %v1258
    %v1538 = vpack.c.b16 %v1262, %v1259
    %v1539 = vpack.c.b16 %v1266, %v1263
    %v1540 = vpack.c.b16 %v1267, %v1264
    %v1541 = vpack.c.b16 %v1268, %v1265
    %v1542 = vpack.c.b16 %v1272, %v1269
    %v1543 = vpack.c.b16 %v1273, %v1270
    %v1544 = vpack.c.b16 %v1274, %v1271
    %v1545 = vpack.c.b16 %v1278, %v1275
    %v1546 = vpack.c.b16 %v1279, %v1276
    %v1547 = vpack.c.b16 %v1280, %v1277
    %v1548 = vpack.c.b16 %v1284, %v1281
    %v1549 = vpack.c.b16 %v1285, %v1282
    %v1550 = vpack.c.b16 %v1286, %v1283
    %v1551 = vpack.c.b16 %v1290, %v1287
    %v1552 = vpack.c.b16 %v1291, %v1288
    %v1553 = vpack.c.b16 %v1292, %v1289
    %v1554 = vpack.c.b16 %v1296, %v1293
    %v1555 = vpack.c.b16 %v1297, %v1294
    %v1556 = vpack.c.b16 %v1298, %v1295
    %v1557 = vpack.c.b16 %v1302, %v1299
    %v1558 = vpack.c.b16 %v1303, %v1300
    %v1559 = vpack.c.b16 %v1304, %v1301
    %v1560 = vpack.c.b16 %v1305, %v1305
    %v1561 = vpack.c.b16 %v1306, %v1306
    %v1562 = vpack.c.b16 %v1307, %v1307
    %vm1815 = vcmask 588800
    %v1817 = vsel %vm1815, %v452, 0
    %vm1819 = vcmask 1043456
    %v1821 = vsel %vm1819, %v1560, 0
    %v1824 = vsel %vm1819, %v1561, 0
    %v1827 = vsel %vm1819, %v1562, 0
    %1829 = vmatprep.subr.bf16.mxu0 %v1309
    %1830 = vmatpush1.bf16.msra.mxu0 %v1308
    %1831 = vmatprep.subr.bf16.mxu0 %v1312
    %1832 = vmatpush1.bf16.msra.mxu0 %v1311
    %1833 = vmatprep.subr.bf16.mxu0 %v1315
    %1834 = vmatpush1.bf16.msra.mxu0 %v1314
    %1835 = vmatprep.subr.bf16.mxu0 %v1318
    %1836 = vmatpush1.bf16.msra.mxu0 %v1317
    %1837 = vmatprep.subr.bf16.mxu0 %v1321
    %1838 = vmatpush1.bf16.msra.mxu0 %v1320
    %1839 = vmatprep.subr.bf16.mxu0 %v1324
    %1840 = vmatpush1.bf16.msra.mxu0 %v1323
    %1841 = vmatprep.subr.bf16.mxu0 %v1327
    %1842 = vmatpush1.bf16.msra.mxu0 %v1326
    %1843 = vmatprep.subr.bf16.mxu0 %v1330
    %1844 = vmatpush1.bf16.msra.mxu0 %v1329
    %1845 = vmatprep.subr.bf16.mxu0 %v1333
    %1846 = vmatpush1.bf16.msra.mxu0 %v1332
    %1847 = vmatprep.subr.bf16.mxu0 %v1336
    %1848 = vmatpush1.bf16.msra.mxu0 %v1335
    %1849 = vmatprep.subr.bf16.mxu0 %v1339
    %1850 = vmatpush1.bf16.msra.mxu0 %v1338
    %1851 = vmatprep.subr.bf16.mxu0 %v1342
    %1852 = vmatpush1.bf16.msra.mxu0 %v1341
    %1853 = vmatprep.subr.bf16.mxu0 %v1345
    %1854 = vmatpush1.bf16.msra.mxu0 %v1344
    %1855 = vmatprep.subr.bf16.mxu0 %v1348
    %1856 = vmatpush1.bf16.msra.mxu0 %v1347
    %1857 = vmatprep.subr.bf16.mxu0 %v1351
    %1858 = vmatpush1.bf16.msra.mxu0 %v1350
    %1859 = vmatprep.subr.bf16.mxu0 %v1354
    %1860 = vmatpush1.bf16.msra.mxu0 %v1353
    %1861 = vmatprep.mubr.bf16.mxu0 %v418
    %1862 = vmatmul.mubr.bf16.gmra.mrb[0].mxu0 %v404
    %v1863 = vpop.f32.mrb[0].mxu0
    %v1864 = vadd.f32 %v367, %v1863
    %v1865 = vpop.f32.mrb[0].mxu0
    %v1866 = vadd.f32 %v371, %v1865
    %v1867 = vpop.f32.mrb[0].mxu0
    %v1868 = vpop.f32.mrb[0].mxu0
    %1869 = vdwg.mxu0
    %1870 = vmatprep.subr.bf16.mxu0 %v1357
    %1871 = vmatpush1.bf16.msra.mxu0 %v1356
    %1872 = vmatprep.subr.bf16.mxu0 %v1360
    %1873 = vmatpush1.bf16.msra.mxu0 %v1359
    %1874 = vmatprep.subr.bf16.mxu0 %v1363
    %1875 = vmatpush1.bf16.msra.mxu0 %v1362
    %1876 = vmatprep.subr.bf16.mxu0 %v1366
    %1877 = vmatpush1.bf16.msra.mxu0 %v1365
    %1878 = vmatprep.subr.bf16.mxu0 %v1369
    %1879 = vmatpush1.bf16.msra.mxu0 %v1368
    %1880 = vmatprep.subr.bf16.mxu0 %v1372
    %1881 = vmatpush1.bf16.msra.mxu0 %v1371
    %1882 = vmatprep.subr.bf16.mxu0 %v1375
    %1883 = vmatpush1.bf16.msra.mxu0 %v1374
    %1884 = vmatprep.subr.bf16.mxu0 %v1378
    %1885 = vmatpush1.bf16.msra.mxu0 %v1377
    %1886 = vmatprep.subr.bf16.mxu0 %v1381
    %1887 = vmatpush1.bf16.msra.mxu0 %v1380
    %1888 = vmatprep.subr.bf16.mxu0 %v1384
    %1889 = vmatpush1.bf16.msra.mxu0 %v1383
    %1890 = vmatprep.subr.bf16.mxu0 %v1387
    %1891 = vmatpush1.bf16.msra.mxu0 %v1386
    %1892 = vmatprep.subr.bf16.mxu0 %v1390
    %1893 = vmatpush1.bf16.msra.mxu0 %v1389
    %1894 = vmatprep.subr.bf16.mxu0 %v1393
    %1895 = vmatpush1.bf16.msra.mxu0 %v1392
    %1896 = vmatprep.subr.bf16.mxu0 %v1396
    %1897 = vmatpush1.bf16.msra.mxu0 %v1395
    %1898 = vmatprep.subr.bf16.mxu0 %v1399
    %1899 = vmatpush1.bf16.msra.mxu0 %v1398
    %1900 = vmatprep.subr.bf16.mxu0 %v1402
    %1901 = vmatpush1.bf16.msra.mxu0 %v1401
    %1902 = vmatprep.mubr.bf16.mxu0 %v428
    %1903 = vmatmul.mubr.bf16.gmra.mrb[0].mxu0 %v426
    %v1904 = vpop.f32.mrb[0].mxu0
    %v1905 = vadd.f32 %v1864, %v1904
    %v1906 = vpop.f32.mrb[0].mxu0
    %v1907 = vadd.f32 %v1866, %v1906
    %v1908 = vpop.f32.mrb[0].mxu0
    %v1909 = vpop.f32.mrb[0].mxu0
    %1910 = vdwg.mxu0
    %1911 = vmatprep.subr.bf16.mxu0 %v1405
    %1912 = vmatpush1.bf16.msra.mxu0 %v1404
    %1913 = vmatprep.subr.bf16.mxu0 %v1408
    %1914 = vmatpush1.bf16.msra.mxu0 %v1407
    %1915 = vmatprep.subr.bf16.mxu0 %v1411
    %1916 = vmatpush1.bf16.msra.mxu0 %v1410
    %1917 = vmatprep.subr.bf16.mxu0 %v1414
    %1918 = vmatpush1.bf16.msra.mxu0 %v1413
    %1919 = vmatprep.subr.bf16.mxu0 %v1417
    %1920 = vmatpush1.bf16.msra.mxu0 %v1416
    %1921 = vmatprep.subr.bf16.mxu0 %v1420
    %1922 = vmatpush1.bf16.msra.mxu0 %v1419
    %1923 = vmatprep.subr.bf16.mxu0 %v1423
    %1924 = vmatpush1.bf16.msra.mxu0 %v1422
    %1925 = vmatprep.subr.bf16.mxu0 %v1426
    %1926 = vmatpush1.bf16.msra.mxu0 %v1425
    %1927 = vmatprep.subr.bf16.mxu0 %v1429
    %1928 = vmatpush1.bf16.msra.mxu0 %v1428
    %1929 = vmatprep.subr.bf16.mxu0 %v1432
    %1930 = vmatpush1.bf16.msra.mxu0 %v1431
    %1931 = vmatprep.subr.bf16.mxu0 %v1435
    %1932 = vmatpush1.bf16.msra.mxu0 %v1434
    %1933 = vmatprep.subr.bf16.mxu0 %v1438
    %1934 = vmatpush1.bf16.msra.mxu0 %v1437
    %1935 = vmatprep.subr.bf16.mxu0 %v1441
    %1936 = vmatpush1.bf16.msra.mxu0 %v1440
    %1937 = vmatprep.subr.bf16.mxu0 %v1444
    %1938 = vmatpush1.bf16.msra.mxu0 %v1443
    %1939 = vmatprep.subr.bf16.mxu0 %v1447
    %1940 = vmatpush1.bf16.msra.mxu0 %v1446
    %1941 = vmatprep.subr.bf16.mxu0 %v1450
    %1942 = vmatpush1.bf16.msra.mxu0 %v1449
    %1943 = vmatprep.mubr.bf16.mxu0 %v425
    %1944 = vmatmul.mubr.bf16.gmra.mrb[0].mxu0 %v411
    %v1945 = vpop.f32.mrb[0].mxu0
    %v1946 = vadd.f32 %v1905, %v1945
    %v1947 = vpop.f32.mrb[0].mxu0
    %v1948 = vadd.f32 %v1907, %v1947
    %v1949 = vpop.f32.mrb[0].mxu0
    %v1950 = vpop.f32.mrb[0].mxu0
    %1951 = vdwg.mxu0
    %1952 = vmatprep.subr.bf16.mxu0 %v1453
    %1953 = vmatpush1.bf16.msra.mxu0 %v1452
    %1954 = vmatprep.subr.bf16.mxu0 %v1456
    %1955 = vmatpush1.bf16.msra.mxu0 %v1455
    %1956 = vmatprep.subr.bf16.mxu0 %v1459
    %1957 = vmatpush1.bf16.msra.mxu0 %v1458
    %1958 = vmatprep.subr.bf16.mxu0 %v1462
    %1959 = vmatpush1.bf16.msra.mxu0 %v1461
    %1960 = vmatprep.subr.bf16.mxu0 %v1465
    %1961 = vmatpush1.bf16.msra.mxu0 %v1464
    %1962 = vmatprep.subr.bf16.mxu0 %v1468
    %1963 = vmatpush1.bf16.msra.mxu0 %v1467
    %1964 = vmatprep.subr.bf16.mxu0 %v1471
    %1965 = vmatpush1.bf16.msra.mxu0 %v1470
    %1966 = vmatprep.subr.bf16.mxu0 %v1474
    %1967 = vmatpush1.bf16.msra.mxu0 %v1473
    %1968 = vmatprep.subr.bf16.mxu0 %v1477
    %1969 = vmatpush1.bf16.msra.mxu0 %v1476
    %1970 = vmatprep.subr.bf16.mxu0 %v1480
    %1971 = vmatpush1.bf16.msra.mxu0 %v1479
    %1972 = vmatprep.subr.bf16.mxu0 %v1483
    %1973 = vmatpush1.bf16.msra.mxu0 %v1482
    %1974 = vmatprep.subr.bf16.mxu0 %v1486
    %1975 = vmatpush1.bf16.msra.mxu0 %v1485
    %1976 = vmatprep.subr.bf16.mxu0 %v1489
    %1977 = vmatpush1.bf16.msra.mxu0 %v1488
    %1978 = vmatprep.subr.bf16.mxu0 %v1492
    %1979 = vmatpush1.bf16.msra.mxu0 %v1491
    %1980 = vmatprep.subr.bf16.mxu0 %v1495
    %1981 = vmatpush1.bf16.msra.mxu0 %v1494
    %1982 = vmatprep.subr.bf16.mxu0 %v1498
    %1983 = vmatpush1.bf16.msra.mxu0 %v1497
    %1984 = vmatprep.mubr.bf16.mxu0 %v429
    %1985 = vmatmul.mubr.bf16.gmra.mrb[0].mxu0 %v427
    %v1986 = vpop.f32.mrb[0].mxu0
    %v1987 = vadd.f32 %v1946, %v1986
    %v1988 = vpop.f32.mrb[0].mxu0
    %v1989 = vadd.f32 %v1948, %v1988
    %v1990 = vpop.f32.mrb[0].mxu0
    %v1991 = vpop.f32.mrb[0].mxu0
    %1992 = vdwg.mxu0
    %1993 = vmatprep.subr.bf16.mxu0 %v1501
    %1994 = vmatpush1.bf16.msra.mxu0 %v1500
    %1995 = vmatprep.subr.bf16.mxu0 %v1504
    %1996 = vmatpush1.bf16.msra.mxu0 %v1503
    %1997 = vmatprep.subr.bf16.mxu0 %v1507
    %1998 = vmatpush1.bf16.msra.mxu0 %v1506
    %1999 = vmatprep.subr.bf16.mxu0 %v1510
    %2000 = vmatpush1.bf16.msra.mxu0 %v1509
    %2001 = vmatprep.subr.bf16.mxu0 %v1513
    %2002 = vmatpush1.bf16.msra.mxu0 %v1512
    %2003 = vmatprep.subr.bf16.mxu0 %v1516
    %2004 = vmatpush1.bf16.msra.mxu0 %v1515
    %2005 = vmatprep.subr.bf16.mxu0 %v1519
    %2006 = vmatpush1.bf16.msra.mxu0 %v1518
    %2007 = vmatprep.subr.bf16.mxu0 %v1522
    %2008 = vmatpush1.bf16.msra.mxu0 %v1521
    %2009 = vmatprep.subr.bf16.mxu0 %v1525
    %2010 = vmatpush1.bf16.msra.mxu0 %v1524
    %2011 = vmatprep.subr.bf16.mxu0 %v1528
    %2012 = vmatpush1.bf16.msra.mxu0 %v1527
    %2013 = vmatprep.subr.bf16.mxu0 %v1531
    %2014 = vmatpush1.bf16.msra.mxu0 %v1530
    %2015 = vmatprep.subr.bf16.mxu0 %v1534
    %2016 = vmatpush1.bf16.msra.mxu0 %v1533
    %2017 = vmatprep.subr.bf16.mxu0 %v1537
    %2018 = vmatpush1.bf16.msra.mxu0 %v1536
    %2019 = vmatprep.subr.bf16.mxu0 %v1540
    %2020 = vmatpush1.bf16.msra.mxu0 %v1539
    %2021 = vmatprep.subr.bf16.mxu0 %v1543
    %2022 = vmatpush1.bf16.msra.mxu0 %v1542
    %2023 = vmatprep.subr.bf16.mxu0 %v1546
    %2024 = vmatpush1.bf16.msra.mxu0 %v1545
    %2025 = vmatprep.mubr.bf16.mxu0 %v451
    %2026 = vmatmul.mubr.bf16.gmra.mrb[0].mxu0 %v444
    %v2027 = vpop.f32.mrb[0].mxu0
    %v2028 = vadd.f32 %v1987, %v2027
    %v2029 = vpop.f32.mrb[0].mxu0
    %v2030 = vadd.f32 %v1989, %v2029
    %v2031 = vpop.f32.mrb[0].mxu0
    %v2032 = vpop.f32.mrb[0].mxu0
    %2033 = vdwg.mxu0
    %2034 = vmatprep.subr.bf16.mxu0 %v1549
    %2035 = vmatpush1.bf16.msra.mxu0 %v1548
    %2036 = vmatprep.subr.bf16.mxu0 %v1552
    %2037 = vmatpush1.bf16.msra.mxu0 %v1551
    %2038 = vmatprep.subr.bf16.mxu0 %v1555
    %2039 = vmatpush1.bf16.msra.mxu0 %v1554
    %2040 = vmatprep.subr.bf16.mxu0 %v1558
    %2041 = vmatpush1.bf16.msra.mxu0 %v1557
    %2042 = vmatprep.subr.bf16.mxu0 %v1824
    %2043 = vmatpush1.bf16.msra.mxu0 %v1821
    %2044 = vmatprep.subr.bf16.mxu0 0
    %2045 = vmatpush1.bf16.msra.mxu0 0
    %2046 = vmatprep.subr.bf16.mxu0 0
    %2047 = vmatpush1.bf16.msra.mxu0 0
    %2048 = vmatprep.subr.bf16.mxu0 0
    %2049 = vmatpush1.bf16.msra.mxu0 0
    %2050 = vmatprep.subr.bf16.mxu0 0
    %2051 = vmatpush1.bf16.msra.mxu0 0
    %2052 = vmatprep.subr.bf16.mxu0 0
    %2053 = vmatpush1.bf16.msra.mxu0 0
    %2054 = vmatprep.subr.bf16.mxu0 0
    %2055 = vmatpush1.bf16.msra.mxu0 0
    %2056 = vmatprep.subr.bf16.mxu0 0
    %2057 = vmatpush1.bf16.msra.mxu0 0
    %2058 = vmatprep.subr.bf16.mxu0 0
    %2059 = vmatpush1.bf16.msra.mxu0 0
    %2060 = vmatprep.subr.bf16.mxu0 0
    %2061 = vmatpush1.bf16.msra.mxu0 0
    %2062 = vmatprep.subr.bf16.mxu0 0
    %2063 = vmatpush1.bf16.msra.mxu0 0
    %2064 = vmatprep.subr.bf16.mxu0 0
    %2065 = vmatpush1.bf16.msra.mxu0 0
    %2066 = vmatprep.mubr.bf16.mxu0 0
    %2067 = vmatmul.mubr.bf16.gmra.mrb[0].mxu0 %v1817
    %v2068 = vpop.f32.mrb[0].mxu0
    %v2069 = vadd.f32 %v2028, %v2068
    %v2070 = vpop.f32.mrb[0].mxu0
    %v2071 = vadd.f32 %v2030, %v2070
    %v2072 = vpop.f32.mrb[0].mxu0
    %v2073 = vpop.f32.mrb[0].mxu0
    %2074 = vdwg.mxu0
    %2075 = vmatprep.subr.bf16.mxu0 0
    %2076 = vmatpush1.bf16.msra.mxu0 %v1310
    %2077 = vmatprep.subr.bf16.mxu0 0
    %2078 = vmatpush1.bf16.msra.mxu0 %v1313
    %2079 = vmatprep.subr.bf16.mxu0 0
    %2080 = vmatpush1.bf16.msra.mxu0 %v1316
    %2081 = vmatprep.subr.bf16.mxu0 0
    %2082 = vmatpush1.bf16.msra.mxu0 %v1319
    %2083 = vmatprep.subr.bf16.mxu0 0
    %2084 = vmatpush1.bf16.msra.mxu0 %v1322
    %2085 = vmatprep.subr.bf16.mxu0 0
    %2086 = vmatpush1.bf16.msra.mxu0 %v1325
    %2087 = vmatprep.subr.bf16.mxu0 0
    %2088 = vmatpush1.bf16.msra.mxu0 %v1328
    %2089 = vmatprep.subr.bf16.mxu0 0
    %2090 = vmatpush1.bf16.msra.mxu0 %v1331
    %2091 = vmatprep.subr.bf16.mxu0 0
    %2092 = vmatpush1.bf16.msra.mxu0 %v1334
    %2093 = vmatprep.subr.bf16.mxu0 0
    %2094 = vmatpush1.bf16.msra.mxu0 %v1337
    %2095 = vmatprep.subr.bf16.mxu0 0
    %2096 = vmatpush1.bf16.msra.mxu0 %v1340
    %2097 = vmatprep.subr.bf16.mxu0 0
    %2098 = vmatpush1.bf16.msra.mxu0 %v1343
    %2099 = vmatprep.subr.bf16.mxu0 0
    %2100 = vmatpush1.bf16.msra.mxu0 %v1346
    %2101 = vmatprep.subr.bf16.mxu0 0
    %2102 = vmatpush1.bf16.msra.mxu0 %v1349
    %2103 = vmatprep.subr.bf16.mxu0 0
    %2104 = vmatpush1.bf16.msra.mxu0 %v1352
    %2105 = vmatprep.subr.bf16.mxu0 0
    %2106 = vmatpush1.bf16.msra.mxu0 %v1355
    %2107 = vmatprep.mubr.bf16.mxu0 %v418
    %2108 = vmatmul.mubr.bf16.gmra.mrb[0].mxu0 %v404
    %v2109 = vpop.f32.mrb[0].mxu0
    %v2110 = vadd.f32 %v375, %v2109
    %v2111 = vpop.f32.mrb[0].mxu0
    %v2112 = vpop.f32.mrb[0].mxu0
    %v2113 = vpop.f32.mrb[0].mxu0
    %2114 = vdwg.mxu0
    %2115 = vmatprep.subr.bf16.mxu0 0
    %2116 = vmatpush1.bf16.msra.mxu0 %v1358
    %2117 = vmatprep.subr.bf16.mxu0 0
    %2118 = vmatpush1.bf16.msra.mxu0 %v1361
    %2119 = vmatprep.subr.bf16.mxu0 0
    %2120 = vmatpush1.bf16.msra.mxu0 %v1364
    %2121 = vmatprep.subr.bf16.mxu0 0
    %2122 = vmatpush1.bf16.msra.mxu0 %v1367
    %2123 = vmatprep.subr.bf16.mxu0 0
    %2124 = vmatpush1.bf16.msra.mxu0 %v1370
    %2125 = vmatprep.subr.bf16.mxu0 0
    %2126 = vmatpush1.bf16.msra.mxu0 %v1373
    %2127 = vmatprep.subr.bf16.mxu0 0
    %2128 = vmatpush1.bf16.msra.mxu0 %v1376
    %2129 = vmatprep.subr.bf16.mxu0 0
    %2130 = vmatpush1.bf16.msra.mxu0 %v1379
    %2131 = vmatprep.subr.bf16.mxu0 0
    %2132 = vmatpush1.bf16.msra.mxu0 %v1382
    %2133 = vmatprep.subr.bf16.mxu0 0
    %2134 = vmatpush1.bf16.msra.mxu0 %v1385
    %2135 = vmatprep.subr.bf16.mxu0 0
    %2136 = vmatpush1.bf16.msra.mxu0 %v1388
    %2137 = vmatprep.subr.bf16.mxu0 0
    %2138 = vmatpush1.bf16.msra.mxu0 %v1391
    %2139 = vmatprep.subr.bf16.mxu0 0
    %2140 = vmatpush1.bf16.msra.mxu0 %v1394
    %2141 = vmatprep.subr.bf16.mxu0 0
    %2142 = vmatpush1.bf16.msra.mxu0 %v1397
    %2143 = vmatprep.subr.bf16.mxu0 0
    %2144 = vmatpush1.bf16.msra.mxu0 %v1400
    %2145 = vmatprep.subr.bf16.mxu0 0
    %2146 = vmatpush1.bf16.msra.mxu0 %v1403
    %2147 = vmatprep.mubr.bf16.mxu0 %v428
    %2148 = vmatmul.mubr.bf16.gmra.mrb[0].mxu0 %v426
    %v2149 = vpop.f32.mrb[0].mxu0
    %v2150 = vadd.f32 %v2110, %v2149
    %v2151 = vpop.f32.mrb[0].mxu0
    %v2152 = vpop.f32.mrb[0].mxu0
    %v2153 = vpop.f32.mrb[0].mxu0
    %2154 = vdwg.mxu0
    %2155 = vmatprep.subr.bf16.mxu0 0
    %2156 = vmatpush1.bf16.msra.mxu0 %v1406
    %2157 = vmatprep.subr.bf16.mxu0 0
    %2158 = vmatpush1.bf16.msra.mxu0 %v1409
    %2159 = vmatprep.subr.bf16.mxu0 0
    %2160 = vmatpush1.bf16.msra.mxu0 %v1412
    %2161 = vmatprep.subr.bf16.mxu0 0
    %2162 = vmatpush1.bf16.msra.mxu0 %v1415
    %2163 = vmatprep.subr.bf16.mxu0 0
    %2164 = vmatpush1.bf16.msra.mxu0 %v1418
    %2165 = vmatprep.subr.bf16.mxu0 0
    %2166 = vmatpush1.bf16.msra.mxu0 %v1421
    %2167 = vmatprep.subr.bf16.mxu0 0
    %2168 = vmatpush1.bf16.msra.mxu0 %v1424
    %2169 = vmatprep.subr.bf16.mxu0 0
    %2170 = vmatpush1.bf16.msra.mxu0 %v1427
    %2171 = vmatprep.subr.bf16.mxu0 0
    %2172 = vmatpush1.bf16.msra.mxu0 %v1430
    %2173 = vmatprep.subr.bf16.mxu0 0
    %2174 = vmatpush1.bf16.msra.mxu0 %v1433
    %2175 = vmatprep.subr.bf16.mxu0 0
    %2176 = vmatpush1.bf16.msra.mxu0 %v1436
    %2177 = vmatprep.subr.bf16.mxu0 0
    %2178 = vmatpush1.bf16.msra.mxu0 %v1439
    %2179 = vmatprep.subr.bf16.mxu0 0
    %2180 = vmatpush1.bf16.msra.mxu0 %v1442
    %2181 = vmatprep.subr.bf16.mxu0 0
    %2182 = vmatpush1.bf16.msra.mxu0 %v1445
    %2183 = vmatprep.subr.bf16.mxu0 0
    %2184 = vmatpush1.bf16.msra.mxu0 %v1448
    %2185 = vmatprep.subr.bf16.mxu0 0
    %2186 = vmatpush1.bf16.msra.mxu0 %v1451
    %2187 = vmatprep.mubr.bf16.mxu0 %v425
    %2188 = vmatmul.mubr.bf16.gmra.mrb[0].mxu0 %v411
    %v2189 = vpop.f32.mrb[0].mxu0
    %v2190 = vadd.f32 %v2150, %v2189
    %v2191 = vpop.f32.mrb[0].mxu0
    %v2192 = vpop.f32.mrb[0].mxu0
    %v2193 = vpop.f32.mrb[0].mxu0
    %2194 = vdwg.mxu0
    %2195 = vmatprep.subr.bf16.mxu0 0
    %2196 = vmatpush1.bf16.msra.mxu0 %v1454
    %2197 = vmatprep.subr.bf16.mxu0 0
    %2198 = vmatpush1.bf16.msra.mxu0 %v1457
    %2199 = vmatprep.subr.bf16.mxu0 0
    %2200 = vmatpush1.bf16.msra.mxu0 %v1460
    %2201 = vmatprep.subr.bf16.mxu0 0
    %2202 = vmatpush1.bf16.msra.mxu0 %v1463
    %2203 = vmatprep.subr.bf16.mxu0 0
    %2204 = vmatpush1.bf16.msra.mxu0 %v1466
    %2205 = vmatprep.subr.bf16.mxu0 0
    %2206 = vmatpush1.bf16.msra.mxu0 %v1469
    %2207 = vmatprep.subr.bf16.mxu0 0
    %2208 = vmatpush1.bf16.msra.mxu0 %v1472
    %2209 = vmatprep.subr.bf16.mxu0 0
    %2210 = vmatpush1.bf16.msra.mxu0 %v1475
    %2211 = vmatprep.subr.bf16.mxu0 0
    %2212 = vmatpush1.bf16.msra.mxu0 %v1478
    %2213 = vmatprep.subr.bf16.mxu0 0
    %2214 = vmatpush1.bf16.msra.mxu0 %v1481
    %2215 = vmatprep.subr.bf16.mxu0 0
    %2216 = vmatpush1.bf16.msra.mxu0 %v1484
    %2217 = vmatprep.subr.bf16.mxu0 0
    %2218 = vmatpush1.bf16.msra.mxu0 %v1487
    %2219 = vmatprep.subr.bf16.mxu0 0
    %2220 = vmatpush1.bf16.msra.mxu0 %v1490
    %2221 = vmatprep.subr.bf16.mxu0 0
    %2222 = vmatpush1.bf16.msra.mxu0 %v1493
    %2223 = vmatprep.subr.bf16.mxu0 0
    %2224 = vmatpush1.bf16.msra.mxu0 %v1496
    %2225 = vmatprep.subr.bf16.mxu0 0
    %2226 = vmatpush1.bf16.msra.mxu0 %v1499
    %2227 = vmatprep.mubr.bf16.mxu0 %v429
    %2228 = vmatmul.mubr.bf16.gmra.mrb[0].mxu0 %v427
    %v2229 = vpop.f32.mrb[0].mxu0
    %v2230 = vadd.f32 %v2190, %v2229
    %v2231 = vpop.f32.mrb[0].mxu0
    %v2232 = vpop.f32.mrb[0].mxu0
    %v2233 = vpop.f32.mrb[0].mxu0
    %2234 = vdwg.mxu0
    %2235 = vmatprep.subr.bf16.mxu0 0
    %2236 = vmatpush1.bf16.msra.mxu0 %v1502
    %2237 = vmatprep.subr.bf16.mxu0 0
    %2238 = vmatpush1.bf16.msra.mxu0 %v1505
    %2239 = vmatprep.subr.bf16.mxu0 0
    %2240 = vmatpush1.bf16.msra.mxu0 %v1508
    %2241 = vmatprep.subr.bf16.mxu0 0
    %2242 = vmatpush1.bf16.msra.mxu0 %v1511
    %2243 = vmatprep.subr.bf16.mxu0 0
    %2244 = vmatpush1.bf16.msra.mxu0 %v1514
    %2245 = vmatprep.subr.bf16.mxu0 0
    %2246 = vmatpush1.bf16.msra.mxu0 %v1517
    %2247 = vmatprep.subr.bf16.mxu0 0
    %2248 = vmatpush1.bf16.msra.mxu0 %v1520
    %2249 = vmatprep.subr.bf16.mxu0 0
    %2250 = vmatpush1.bf16.msra.mxu0 %v1523
    %2251 = vmatprep.subr.bf16.mxu0 0
    %2252 = vmatpush1.bf16.msra.mxu0 %v1526
    %2253 = vmatprep.subr.bf16.mxu0 0
    %2254 = vmatpush1.bf16.msra.mxu0 %v1529
    %2255 = vmatprep.subr.bf16.mxu0 0
    %2256 = vmatpush1.bf16.msra.mxu0 %v1532
    %2257 = vmatprep.subr.bf16.mxu0 0
    %2258 = vmatpush1.bf16.msra.mxu0 %v1535
    %2259 = vmatprep.subr.bf16.mxu0 0
    %2260 = vmatpush1.bf16.msra.mxu0 %v1538
    %2261 = vmatprep.subr.bf16.mxu0 0
    %2262 = vmatpush1.bf16.msra.mxu0 %v1541
    %2263 = vmatprep.subr.bf16.mxu0 0
    %2264 = vmatpush1.bf16.msra.mxu0 %v1544
    %2265 = vmatprep.subr.bf16.mxu0 0
    %2266 = vmatpush1.bf16.msra.mxu0 %v1547
    %2267 = vmatprep.mubr.bf16.mxu0 %v451
    %2268 = vmatmul.mubr.bf16.gmra.mrb[0].mxu0 %v444
    %v2269 = vpop.f32.mrb[0].mxu0
    %v2270 = vadd.f32 %v2230, %v2269
    %v2271 = vpop.f32.mrb[0].mxu0
    %v2272 = vpop.f32.mrb[0].mxu0
    %v2273 = vpop.f32.mrb[0].mxu0
    %2274 = vdwg.mxu0
    %2275 = vmatprep.subr.bf16.mxu0 0
    %2276 = vmatpush1.bf16.msra.mxu0 %v1550
    %2277 = vmatprep.subr.bf16.mxu0 0
    %2278 = vmatpush1.bf16.msra.mxu0 %v1553
    %2279 = vmatprep.subr.bf16.mxu0 0
    %2280 = vmatpush1.bf16.msra.mxu0 %v1556
    %2281 = vmatprep.subr.bf16.mxu0 0
    %2282 = vmatpush1.bf16.msra.mxu0 %v1559
    %2283 = vmatprep.subr.bf16.mxu0 0
    %2284 = vmatpush1.bf16.msra.mxu0 %v1827
    %2285 = vmatprep.subr.bf16.mxu0 0
    %2286 = vmatpush1.bf16.msra.mxu0 0
    %2287 = vmatprep.subr.bf16.mxu0 0
    %2288 = vmatpush1.bf16.msra.mxu0 0
    %2289 = vmatprep.subr.bf16.mxu0 0
    %2290 = vmatpush1.bf16.msra.mxu0 0
    %2291 = vmatprep.subr.bf16.mxu0 0
    %2292 = vmatpush1.bf16.msra.mxu0 0
    %2293 = vmatprep.subr.bf16.mxu0 0
    %2294 = vmatpush1.bf16.msra.mxu0 0
    %2295 = vmatprep.subr.bf16.mxu0 0
    %2296 = vmatpush1.bf16.msra.mxu0 0
    %2297 = vmatprep.subr.bf16.mxu0 0
    %2298 = vmatpush1.bf16.msra.mxu0 0
    %2299 = vmatprep.subr.bf16.mxu0 0
    %2300 = vmatpush1.bf16.msra.mxu0 0
    %2301 = vmatprep.subr.bf16.mxu0 0
    %2302 = vmatpush1.bf16.msra.mxu0 0
    %2303 = vmatprep.subr.bf16.mxu0 0
    %2304 = vmatpush1.bf16.msra.mxu0 0
    %2305 = vmatprep.subr.bf16.mxu0 0
    %2306 = vmatpush1.bf16.msra.mxu0 0
    %2307 = vmatprep.mubr.bf16.mxu0 0
    %2308 = vmatmul.mubr.bf16.gmra.mrb[0].mxu0 %v1817
    %v2309 = vpop.f32.mrb[0].mxu0
    %v2310 = vadd.f32 %v2270, %v2309
    %v2311 = vpop.f32.mrb[0].mxu0
    %v2312 = vpop.f32.mrb[0].mxu0
    %v2313 = vpop.f32.mrb[0].mxu0
    %2314 = vdwg.mxu0
    %v2315 = vmax.f32 %v2069, 0.0
    %v2316 = vmax.f32 %v2071, 0.0
    %v2317 = vmax.f32 %v2310, 0.0
    %v2318 = vpack.c.bf16 %v2315, %v2315
    %v2319 = vpack.c.bf16 %v2316, %v2316
    %v2320 = vpack.c.bf16 %v2317, %v2317
    %v2321 = vld [vmem:[%s3] sm:$0xf]
    %v2322 = vld [vmem:[%s3 + $0x4] sm:$0xf]
    %v2323 = vld [vmem:[%s3 + $0x8] sm:$0xf]
    %v2324 = vld [vmem:[%s3 + $0xc] sm:$0xf]
    %v2325 = vld [vmem:[%s3 + $0x10] sm:$0xf]
    %v2326 = vld [vmem:[%s3 + $0x14] sm:$0xf]
    %v2327 = vld [vmem:[%s3 + $0x18] sm:$0xf]
    %v2328 = vld [vmem:[%s3 + $0x1c] sm:$0xf]
    %v2329 = vld [vmem:[%s3 + $0x20] sm:$0xf]
    %v2330 = vld [vmem:[%s3 + $0x24] sm:$0xf]
    %v2331 = vld [vmem:[%s3 + $0x28] sm:$0xf]
    %v2332 = vld [vmem:[%s3 + $0x2c] sm:$0xf]
    %v2333 = vld [vmem:[%s3 + $0x30] sm:$0xf]
    %v2334 = vld [vmem:[%s3 + $0x34] sm:$0xf]
    %v2335 = vld [vmem:[%s3 + $0x38] sm:$0xf]
    %v2336 = vld [vmem:[%s3 + $0x3c] sm:$0xf]
    %v2337 = vld [vmem:[%s3 + $0x40] sm:$0xf]
    %v2338 = vld [vmem:[%s3 + $0x44] sm:$0xf]
    %v2339 = vld [vmem:[%s3 + $0x48] sm:$0xf]
    %v2340 = vld [vmem:[%s3 + $0x4c] sm:$0xf]
    %v2341 = vld [vmem:[%s3 + $0x50] sm:$0xf]
    %v2342 = vld [vmem:[%s3 + $0x54] sm:$0xf]
    %v2343 = vld [vmem:[%s3 + $0x58] sm:$0xf]
    %v2344 = vld [vmem:[%s3 + $0x5c] sm:$0xf]
    %v2345 = vld [vmem:[%s3 + $0x60] sm:$0xf]
    %v2346 = vld [vmem:[%s3 + $0x64] sm:$0xf]
    %v2347 = vld [vmem:[%s3 + $0x68] sm:$0xf]
    %v2348 = vld [vmem:[%s3 + $0x6c] sm:$0xf]
    %v2349 = vld [vmem:[%s3 + $0x70] sm:$0xf]
    %v2350 = vld [vmem:[%s3 + $0x74] sm:$0xf]
    %v2351 = vld [vmem:[%s3 + $0x78] sm:$0xf]
    %v2352 = vld [vmem:[%s3 + $0x7c] sm:$0xf]
    %v2353 = vld [vmem:[%s3 + $0x80] sm:$0xf]
    %v2354 = vld [vmem:[%s3 + $0x84] sm:$0xf]
    %v2355 = vld [vmem:[%s3 + $0x88] sm:$0xf]
    %v2356 = vld [vmem:[%s3 + $0x8c] sm:$0xf]
    %v2357 = vld [vmem:[%s3 + $0x90] sm:$0xf]
    %v2358 = vld [vmem:[%s3 + $0x94] sm:$0xf]
    %v2359 = vld [vmem:[%s3 + $0x98] sm:$0xf]
    %v2360 = vld [vmem:[%s3 + $0x9c] sm:$0xf]
    %v2361 = vld [vmem:[%s4] sm:$0x1]
    %v2363 = vlaneseq
    %v2364 = vshrl.u32 %v2363, 7
    %v2365 = vsub.s32 0, %v2364
    %v2366 = vrot.slane %v2361, %v2365
    %v2408 = vunpack.c.l.b16 %v2321
    %v2409 = vunpack.c.l.b16 %v2322
    %v2410 = vunpack.c.l.b16 %v2323
    %v2411 = vunpack.c.l.b16 %v2324
    %v2412 = vunpack.c.l.b16 %v2325
    %v2413 = vunpack.c.l.b16 %v2326
    %v2414 = vunpack.c.l.b16 %v2327
    %v2415 = vunpack.c.l.b16 %v2328
    %v2416 = vunpack.c.l.b16 %v2329
    %v2417 = vunpack.c.l.b16 %v2330
    %v2418 = vunpack.c.l.b16 %v2331
    %v2419 = vunpack.c.l.b16 %v2332
    %v2420 = vunpack.c.l.b16 %v2333
    %v2421 = vunpack.c.l.b16 %v2334
    %v2422 = vunpack.c.l.b16 %v2335
    %v2423 = vunpack.c.l.b16 %v2336
    %v2424 = vunpack.c.l.b16 %v2337
    %v2425 = vunpack.c.l.b16 %v2338
    %v2426 = vunpack.c.l.b16 %v2339
    %v2427 = vunpack.c.l.b16 %v2340
    %v2428 = vunpack.c.l.b16 %v2341
    %v2429 = vunpack.c.l.b16 %v2342
    %v2430 = vunpack.c.l.b16 %v2343
    %v2431 = vunpack.c.l.b16 %v2344
    %v2432 = vunpack.c.l.b16 %v2345
    %v2433 = vunpack.c.l.b16 %v2346
    %v2434 = vunpack.c.l.b16 %v2347
    %v2435 = vunpack.c.l.b16 %v2348
    %v2436 = vunpack.c.l.b16 %v2349
    %v2437 = vunpack.c.l.b16 %v2350
    %v2438 = vunpack.c.l.b16 %v2351
    %v2439 = vunpack.c.l.b16 %v2352
    %v2440 = vunpack.c.l.b16 %v2353
    %v2441 = vunpack.c.l.b16 %v2354
    %v2442 = vunpack.c.l.b16 %v2355
    %v2443 = vunpack.c.l.b16 %v2356
    %v2444 = vunpack.c.l.b16 %v2357
    %v2445 = vunpack.c.l.b16 %v2358
    %v2446 = vunpack.c.l.b16 %v2359
    %v2447 = vunpack.c.l.b16 %v2360
    %v2448 = vpack.c.b16 %v2409, %v2408
    %v2449 = vpack.c.b16 %v2411, %v2410
    %v2450 = vpack.c.b16 %v2413, %v2412
    %v2451 = vpack.c.b16 %v2415, %v2414
    %v2452 = vpack.c.b16 %v2417, %v2416
    %v2453 = vpack.c.b16 %v2419, %v2418
    %v2454 = vpack.c.b16 %v2421, %v2420
    %v2455 = vpack.c.b16 %v2423, %v2422
    %v2456 = vpack.c.b16 %v2425, %v2424
    %v2457 = vpack.c.b16 %v2427, %v2426
    %v2458 = vpack.c.b16 %v2429, %v2428
    %v2459 = vpack.c.b16 %v2431, %v2430
    %v2460 = vpack.c.b16 %v2433, %v2432
    %v2461 = vpack.c.b16 %v2435, %v2434
    %v2462 = vpack.c.b16 %v2437, %v2436
    %v2463 = vpack.c.b16 %v2439, %v2438
    %v2464 = vpack.c.b16 %v2441, %v2440
    %v2465 = vpack.c.b16 %v2443, %v2442
    %v2466 = vpack.c.b16 %v2445, %v2444
    %v2467 = vpack.c.b16 %v2447, %v2446
    %vm2488 = vcmask 523264
    %v2490 = vsel %vm2488, %v2320, 0
    %2492 = vmatprep.subr.bf16.mxu0 0
    %2493 = vmatpush1.bf16.msra.mxu0 %v2448
    %2494 = vmatprep.subr.bf16.mxu0 0
    %2495 = vmatpush1.bf16.msra.mxu0 %v2449
    %2496 = vmatprep.subr.bf16.mxu0 0
    %2497 = vmatpush1.bf16.msra.mxu0 %v2450
    %2498 = vmatprep.subr.bf16.mxu0 0
    %2499 = vmatpush1.bf16.msra.mxu0 %v2451
    %2500 = vmatprep.subr.bf16.mxu0 0
    %2501 = vmatpush1.bf16.msra.mxu0 %v2452
    %2502 = vmatprep.subr.bf16.mxu0 0
    %2503 = vmatpush1.bf16.msra.mxu0 %v2453
    %2504 = vmatprep.subr.bf16.mxu0 0
    %2505 = vmatpush1.bf16.msra.mxu0 %v2454
    %2506 = vmatprep.subr.bf16.mxu0 0
    %2507 = vmatpush1.bf16.msra.mxu0 %v2455
    %2508 = vmatprep.subr.bf16.mxu0 0
    %2509 = vmatpush1.bf16.msra.mxu0 %v2456
    %2510 = vmatprep.subr.bf16.mxu0 0
    %2511 = vmatpush1.bf16.msra.mxu0 %v2457
    %2512 = vmatprep.subr.bf16.mxu0 0
    %2513 = vmatpush1.bf16.msra.mxu0 %v2458
    %2514 = vmatprep.subr.bf16.mxu0 0
    %2515 = vmatpush1.bf16.msra.mxu0 %v2459
    %2516 = vmatprep.subr.bf16.mxu0 0
    %2517 = vmatpush1.bf16.msra.mxu0 %v2460
    %2518 = vmatprep.subr.bf16.mxu0 0
    %2519 = vmatpush1.bf16.msra.mxu0 %v2461
    %2520 = vmatprep.subr.bf16.mxu0 0
    %2521 = vmatpush1.bf16.msra.mxu0 %v2462
    %2522 = vmatprep.subr.bf16.mxu0 0
    %2523 = vmatpush1.bf16.msra.mxu0 %v2463
    %2524 = vmatprep.mubr.bf16.mxu0 %v2319
    %2525 = vmatmul.mubr.bf16.gmra.mrb[0].mxu0 %v2318
    %v2526 = vpop.f32.mrb[0].mxu0
    %v2527 = vadd.f32 %v2366, %v2526
    %v2528 = vpop.f32.mrb[0].mxu0
    %v2529 = vpop.f32.mrb[0].mxu0
    %v2530 = vpop.f32.mrb[0].mxu0
    %2531 = vdwg.mxu0
    %2532 = vmatprep.subr.bf16.mxu0 0
    %2533 = vmatpush1.bf16.msra.mxu0 %v2464
    %2534 = vmatprep.subr.bf16.mxu0 0
    %2535 = vmatpush1.bf16.msra.mxu0 %v2465
    %2536 = vmatprep.subr.bf16.mxu0 0
    %2537 = vmatpush1.bf16.msra.mxu0 %v2466
    %2538 = vmatprep.subr.bf16.mxu0 0
    %2539 = vmatpush1.bf16.msra.mxu0 %v2467
    %2540 = vmatprep.subr.bf16.mxu0 0
    %2541 = vmatpush1.bf16.msra.mxu0 0
    %2542 = vmatprep.subr.bf16.mxu0 0
    %2543 = vmatpush1.bf16.msra.mxu0 0
    %2544 = vmatprep.subr.bf16.mxu0 0
    %2545 = vmatpush1.bf16.msra.mxu0 0
    %2546 = vmatprep.subr.bf16.mxu0 0
    %2547 = vmatpush1.bf16.msra.mxu0 0
    %2548 = vmatprep.subr.bf16.mxu0 0
    %2549 = vmatpush1.bf16.msra.mxu0 0
    %2550 = vmatprep.subr.bf16.mxu0 0
    %2551 = vmatpush1.bf16.msra.mxu0 0
    %2552 = vmatprep.subr.bf16.mxu0 0
    %2553 = vmatpush1.bf16.msra.mxu0 0
    %2554 = vmatprep.subr.bf16.mxu0 0
    %2555 = vmatpush1.bf16.msra.mxu0 0
    %2556 = vmatprep.subr.bf16.mxu0 0
    %2557 = vmatpush1.bf16.msra.mxu0 0
    %2558 = vmatprep.subr.bf16.mxu0 0
    %2559 = vmatpush1.bf16.msra.mxu0 0
    %2560 = vmatprep.subr.bf16.mxu0 0
    %2561 = vmatpush1.bf16.msra.mxu0 0
    %2562 = vmatprep.subr.bf16.mxu0 0
    %2563 = vmatpush1.bf16.msra.mxu0 0
    %2564 = vmatprep.mubr.bf16.mxu0 0
    %2565 = vmatmul.mubr.bf16.gmra.mrb[0].mxu0 %v2490
    %v2566 = vpop.f32.mrb[0].mxu0
    %v2567 = vadd.f32 %v2527, %v2566
    %v2568 = vpop.f32.mrb[0].mxu0
    %v2569 = vpop.f32.mrb[0].mxu0
    %v2570 = vpop.f32.mrb[0].mxu0
    %2571 = vdwg.mxu0
    %v2572 = vmax.f32 %v2567, 0.0
    %vm2573 = vcmask 74752
    %2574 = vst.msk [vmem:[#allocation2] sm:$0x3] %vm2573, %v2572
    // Predicated region
    $region22: #{sample_net_b_forward.3} parent=1 // pred_check
      _
    $region23: #{sample_net_b_forward.3} parent=1 // pred_check_branch
      %2576 = sbr.rel (0) target = $region25
    $region24: #{sample_net_b_forward.3} parent=1 // pred_region
      %s2578 = ssub.s32 32, 32
      %2579 = vsyncadd [#allocation3], %s2578
      %s2581 = sshll.u32 [#allocation2], 4
      %s2582 = int_to_ptr.vmem [resolvable:$true] %s2581
      %2584 = dma.vmem_to_hbm [thread:$0]  %s2582, 32, %s5, [#allocation3]
    $region25: #{sample_net_b_forward.3} parent=1 // pred_fallthru
      _
    // Predicated region
    $region26: #{sample_net_b_forward.3} parent=1 // pred_check
      _
    $region27: #{sample_net_b_forward.3} parent=1 // pred_check_branch
      %2586 = sbr.rel (0) target = $region29
    $region28: #{sample_net_b_forward.3} parent=1 // pred_region
      %2587 = dma.done [#allocation3], 32
    $region29: #{sample_net_b_forward.3} parent=1 // pred_fallthru
      _
    %2588 = vsyncpa [#allocation3], 1

</llo_original>
